<compile_context>
chip_gen: v7x
topology: tpu7x:2x2x1
jax: 0.10.0
libtpu: 0.0.40
codegen_flags: <defaults>
</compile_context>

<pallas_src>
import functools

import numpy as np
import jax
import jax.numpy as jnp
from jax.experimental import pallas as pl
from jax.experimental.pallas import tpu as pltpu


# ---------------------------------------------------------------------------
# Fused kernel: whole multi-stage TCN on one (C, bg*T) tile
# ---------------------------------------------------------------------------

def mstcn_kernel(x_ref, wd_ref, bd_ref, w1_ref, b1_ref, wo_ref, bo_ref, out_ref,
                 *, num_stages, num_layers, T, causal, mxu_dtype):
    f = x_ref[...].astype(jnp.float32)                    # (C, BTb), VMEM-resident
    C, BTb = f.shape

    # ---- hoisted time index + per-shift keep-masks (built once, reused) ----
    t_mod = jax.lax.broadcasted_iota(jnp.int32, (1, BTb), 1) % T
    shifts_needed = set()
    for i in range(num_layers):
        d = 2 ** i
        shifts_needed.update((2 * d, d) if causal else (d, -d))
    keep = {}
    for sh in sorted(shifts_needed):
        if 0 < sh < T:
            keep[sh] = t_mod >= sh                        # past tap validity
        elif -T < sh < 0:
            keep[sh] = t_mod < (T + sh)                   # future tap validity

    def shifted(g_blk, sh):
        # shift(W @ f) == W @ shift(f): roll the post-matmul block along time
        # (lanes) and zero positions that wrapped / crossed a batch boundary.
        if sh == 0:
            return g_blk
        if abs(sh) >= T:
            return None                                   # tap fully out of range
        rolled = pltpu.roll(g_blk, sh % BTb, axis=1)      # XLU lane rotate
        return jnp.where(keep[sh], rolled, 0.0)

    for s in range(num_stages):
        if s > 0:
            # F.softmax over channels (sublanes); exact divide for parity.
            m = jnp.max(f, axis=0, keepdims=True)
            e = jnp.exp(f - m)
            f = e / jnp.sum(e, axis=0, keepdims=True)
        for i in range(num_layers):
            d = 2 ** i
            shifts = (2 * d, d, 0) if causal else (d, 0, -d)
            j = s * num_layers + i                        # static index (unrolled)
            # one (3C, C) @ (C, BTb) MXU matmul per layer, bf16 in / f32 acc
            g = jnp.dot(wd_ref[j], f.astype(mxu_dtype),
                        preferred_element_type=jnp.float32)        # (3C, BTb)
            y = bd_ref[:, j:j + 1]                                  # (C, 1) f32
            for k, sh in enumerate(shifts):
                tap = shifted(g[k * C:(k + 1) * C, :], sh)
                if tap is not None:
                    y = y + tap
            y = jnp.maximum(y, 0.0)                                 # relu (f32)
            f = f + (jnp.dot(w1_ref[j], y.astype(mxu_dtype),
                             preferred_element_type=jnp.float32)
                     + b1_ref[:, j:j + 1])

    # Only the LAST stage's conv_out_classes is returned by the PyTorch forward.
    out_ref[...] = (jnp.dot(wo_ref[...], f.astype(mxu_dtype),
                            preferred_element_type=jnp.float32) + bo_ref[...])


# ---------------------------------------------------------------------------
# Wrapper
# ---------------------------------------------------------------------------

def _choose_batch_group(B, T, target_lanes=512):
    """Batches per grid step: lane extent must be a multiple of 128 (lane-dense
    stores); prefer >=512 lanes/step, keep >1 step when possible (v7x megacore)."""
    divs = [d for d in range(1, B + 1) if B % d == 0 and (d * T) % 128 == 0]
    if not divs:
        return B                                # single step, full-extent block
    multi = [d for d in divs if B // d >= 2]
    pool = multi if multi else divs
    for d in pool:
        if d * T >= target_lanes:
            return d
    return pool[-1]


def mstcn_forward(params, x, cfg):
    B, C, T = x.shape
    ncls = params['wo'].shape[0]
    SL, threeC, _ = params['wd'].shape
    # Fold batch into the lane axis: x_flat[c, b*T + t] = x[b, c, t]
    x_flat = jnp.transpose(x, (1, 0, 2)).reshape(C, B * T)

    bg = _choose_batch_group(B, T)
    G = B // bg
    BTb = bg * T

    kern = functools.partial(
        mstcn_kernel,
        num_stages=cfg['num_stages'], num_layers=cfg['num_layers'],
        T=T, causal=cfg['causal_conv'], mxu_dtype=params['wd'].dtype)

    grid_spec = pltpu.PrefetchScalarGridSpec(
        num_scalar_prefetch=0,
        grid=(G,),
        in_specs=[
            pl.BlockSpec((C, BTb), lambda g: (0, g)),               # activations
            # weights/biases: constant index maps -> stay resident across steps
            pl.BlockSpec((SL, threeC, C), lambda g: (0, 0, 0)),     # wd
            pl.BlockSpec((C, SL), lambda g: (0, 0)),                # bd
            pl.BlockSpec((SL, C, C), lambda g: (0, 0, 0)),          # w1
            pl.BlockSpec((C, SL), lambda g: (0, 0)),                # b1
            pl.BlockSpec((ncls, C), lambda g: (0, 0)),              # wo
            pl.BlockSpec((ncls, 1), lambda g: (0, 0)),              # bo
        ],
        out_specs=pl.BlockSpec((ncls, BTb), lambda g: (0, g)),
    )

    out_flat = pl.pallas_call(
        kern,
        grid_spec=grid_spec,
        out_shape=jax.ShapeDtypeStruct((ncls, B * T), jnp.float32),
        compiler_params=pltpu.CompilerParams(
            dimension_semantics=("parallel",)),
    )(x_flat, params['wd'], params['bd'], params['w1'], params['b1'],
      params['wo'], params['bo'])
    return jnp.transpose(out_flat.reshape(ncls, B, T), (1, 0, 2))   # (B, ncls, T)


# ---------------------------------------------------------------------------
# Parameters (PyTorch Conv1d default init), packed for the kernel:
#   wd : (S*L, 3C, C)  bf16   tap blocks stacked along output rows
#   w1 : (S*L,  C, C)  bf16
#   bd,b1 : (C, S*L)   f32    lane-dense bias columns
#   wo : (ncls, C) bf16, bo : (ncls, 1) f32     (last stage's head only)
# ---------------------------------------------------------------------------

def _conv1d_init(key, cout, cin, ksize):
    kw, kb = jax.random.split(key)
    bound = 1.0 / np.sqrt(cin * ksize)
    w = jax.random.uniform(kw, (cout, cin, ksize), jnp.float32, -bound, bound)
    b = jax.random.uniform(kb, (cout,), jnp.float32, -bound, bound)
    return w, b


def init_params(key, cfg, mxu_dtype=jnp.bfloat16):
    S, L = cfg['num_stages'], cfg['num_layers']
    C, ncls = cfg['num_f_maps'], cfg['num_classes']
    keys = iter(jax.random.split(key, S * (2 * L + 1)))
    wd, bd, w1, b1 = [], [], [], []
    for _s in range(S):
        for _i in range(L):
            w, b = _conv1d_init(next(keys), C, C, 3)
            # taps stacked along OUTPUT rows: rows [k*C:(k+1)*C] == W[:, :, k]
            wd.append(jnp.concatenate([w[:, :, k] for k in range(3)], axis=0))
            bd.append(b)
            w_, b_ = _conv1d_init(next(keys), C, C, 1)
            w1.append(w_[:, :, 0])
            b1.append(b_)
        # Every stage owns a conv_out_classes head; only the last stage's head is
        # returned by MultiStageModel1.forward, the earlier ones are dead code.
        wo, bo = _conv1d_init(next(keys), ncls, C, 1)
    return dict(
        wd=jnp.stack(wd).astype(mxu_dtype),             # (S*L, 3C, C)
        bd=jnp.stack(bd, axis=1).astype(jnp.float32),   # (C, S*L) lane-dense
        w1=jnp.stack(w1).astype(mxu_dtype),             # (S*L, C, C)
        b1=jnp.stack(b1, axis=1).astype(jnp.float32),   # (C, S*L)
        wo=wo[:, :, 0].astype(mxu_dtype),               # (ncls, C)
        bo=bo.reshape(ncls, 1).astype(jnp.float32),     # (ncls, 1)
    )


# ---------------------------------------------------------------------------
# Pure-JAX reference (NCT layout, direct per-tap shifted-input convolution).
# Uses the same bf16 matmul inputs / f32 accumulation as the kernel so the
# comparison isolates kernel mechanics (shift commute, roll+mask, packing).
# ---------------------------------------------------------------------------

def mstcn_reference(params, x, cfg, mxu_dtype=jnp.bfloat16):
    S, L = cfg['num_stages'], cfg['num_layers']
    C = cfg['num_f_maps']
    causal = cfg['causal_conv']
    f = x.astype(jnp.float32)
    for s in range(S):
        if s > 0:
            f = jax.nn.softmax(f, axis=1)
        for i in range(L):
            d = 2 ** i
            shifts = (2 * d, d, 0) if causal else (d, 0, -d)
            j = s * L + i
            y = params['bd'][:, j][None, :, None]           # (1, C, 1)
            for k, sh in enumerate(shifts):
                if sh > 0:
                    tap = jnp.pad(f, ((0, 0), (0, 0), (sh, 0)))[:, :, :f.shape[2]]
                elif sh < 0:
                    tap = jnp.pad(f, ((0, 0), (0, 0), (0, -sh)))[:, :, -sh:]
                else:
                    tap = f
                wk = params['wd'][j][k * C:(k + 1) * C, :]
                y = y + jnp.einsum('oc,bct->bot', wk, tap.astype(mxu_dtype),
                                   preferred_element_type=jnp.float32)
            y = jax.nn.relu(y)
            f = f + (jnp.einsum('oc,bct->bot', params['w1'][j], y.astype(mxu_dtype),
                                preferred_element_type=jnp.float32)
                     + params['b1'][:, j][None, :, None])
    return (jnp.einsum('oc,bct->bot', params['wo'], f.astype(mxu_dtype),
                       preferred_element_type=jnp.float32)
            + params['bo'][None])


# ---------------------------------------------------------------------------

if __name__ == "__main__":
    cfg = dict(
        num_stages=4,        # mstcn_stages (>=2: forward returns last extra stage's head)
        num_layers=3,        # mstcn_layers -> dilations 1, 2, 4
        num_f_maps=32,       # mstcn_f_maps
        num_f_dim=32,        # mstcn_f_dim (use_output=False => must equal num_f_maps)
        num_classes=8,       # out_features
        causal_conv=True,    # mstcn_causal_conv
    )
    B, T = 2, 64             # folded lane extent B*T = 128 -> lane-dense tiles

    key = jax.random.PRNGKey(0)
    params = init_params(key, cfg)
    x = jax.random.normal(jax.random.fold_in(key, 1),
                          (B, cfg['num_f_maps'], T), jnp.float32)

    fwd = jax.jit(lambda p, xx: mstcn_forward(p, xx, cfg))
    out = jax.block_until_ready(fwd(params, x))
    assert out.shape == (B, cfg['num_classes'], T)

    ref = jax.block_until_ready(mstcn_reference(params, x, cfg))
    np.testing.assert_allclose(np.asarray(out), np.asarray(ref), rtol=1e-2, atol=1e-2)
    print("KERNEL_OK")
</pallas_src>

<mosaic_0001>
module attributes {stable_mosaic.version = 11 : i64} {
  func.func @mstcn_kernel(%arg0: i32, %arg1: memref<32x128xf32, #tpu.memory_space<vmem>>, %arg2: memref<12x96x32xbf16, #tpu.memory_space<vmem>>, %arg3: memref<32x12xf32, #tpu.memory_space<vmem>>, %arg4: memref<12x32x32xbf16, #tpu.memory_space<vmem>>, %arg5: memref<32x12xf32, #tpu.memory_space<vmem>>, %arg6: memref<8x32xbf16, #tpu.memory_space<vmem>>, %arg7: memref<8x1xf32, #tpu.memory_space<vmem>>, %arg8: memref<8x128xf32, #tpu.memory_space<vmem>>) attributes {dimension_semantics = [#tpu.dimension_semantics<parallel>], iteration_bounds = array<i64: 1>, scalar_prefetch = 0 : i64, scratch_operands = 0 : i64, tpu.core_type = #tpu.core_type<tc>, window_params = [{transform_indices = @transform_0, window_bounds = array<i64: 32, 128>}, {pipeline_mode = #tpu.pipeline_mode<synchronous>, transform_indices = @transform_1, window_bounds = array<i64: 12, 96, 32>}, {pipeline_mode = #tpu.pipeline_mode<synchronous>, transform_indices = @transform_2, window_bounds = array<i64: 32, 12>}, {pipeline_mode = #tpu.pipeline_mode<synchronous>, transform_indices = @transform_3, window_bounds = array<i64: 12, 32, 32>}, {pipeline_mode = #tpu.pipeline_mode<synchronous>, transform_indices = @transform_4, window_bounds = array<i64: 32, 12>}, {pipeline_mode = #tpu.pipeline_mode<synchronous>, transform_indices = @transform_5, window_bounds = array<i64: 8, 32>}, {pipeline_mode = #tpu.pipeline_mode<synchronous>, transform_indices = @transform_6, window_bounds = array<i64: 8, 1>}, {transform_indices = @transform_7, window_bounds = array<i64: 8, 128>}]} {
    %c0 = arith.constant 0 : index
    %c0_0 = arith.constant 0 : index
    %0 = vector.load %arg1[%c0, %c0_0] : memref<32x128xf32, #tpu.memory_space<vmem>>, vector<32x128xf32>
    %1 = tpu.iota {dimensions = array<i32: 1>} : vector<1x128xi32>
    %c64_i32 = arith.constant 64 : i32
    %c0_i32 = arith.constant 0 : i32
    %2 = arith.cmpi eq, %c64_i32, %c0_i32 : i32
    %c1_i32 = arith.constant 1 : i32
    %3 = arith.select %2, %c1_i32, %c64_i32 : i32
    %4 = vector.broadcast %3 : i32 to vector<1x128xi32>
    %5 = arith.remsi %1, %4 : vector<1x128xi32>
    %c0_i32_1 = arith.constant 0 : i32
    %6 = vector.broadcast %c0_i32_1 : i32 to vector<1x128xi32>
    %7 = arith.cmpi ne, %5, %6 : vector<1x128xi32>
    %c0_i32_2 = arith.constant 0 : i32
    %8 = vector.broadcast %c0_i32_2 : i32 to vector<1x128xi32>
    %9 = arith.cmpi slt, %5, %8 : vector<1x128xi32>
    %c0_i32_3 = arith.constant 0 : i32
    %10 = arith.cmpi slt, %3, %c0_i32_3 : i32
    %11 = vector.broadcast %10 : i1 to vector<1x128xi1>
    %12 = vector.broadcast %11 : vector<1x128xi1> to vector<1x128xi1>
    %13 = arith.xori %9, %12 : vector<1x128xi1>
    %14 = arith.andi %13, %7 : vector<1x128xi1>
    %15 = vector.broadcast %3 : i32 to vector<1x128xi32>
    %16 = arith.addi %5, %15 : vector<1x128xi32>
    %17 = arith.select %14, %16, %5 : vector<1x128xi1>, vector<1x128xi32>
    %c1_i32_4 = arith.constant 1 : i32
    %18 = vector.broadcast %c1_i32_4 : i32 to vector<1x128xi32>
    %19 = arith.cmpi sge, %17, %18 : vector<1x128xi32>
    %c2_i32 = arith.constant 2 : i32
    %20 = vector.broadcast %c2_i32 : i32 to vector<1x128xi32>
    %21 = arith.cmpi sge, %17, %20 : vector<1x128xi32>
    %c4_i32 = arith.constant 4 : i32
    %22 = vector.broadcast %c4_i32 : i32 to vector<1x128xi32>
    %23 = arith.cmpi sge, %17, %22 : vector<1x128xi32>
    %c8_i32 = arith.constant 8 : i32
    %24 = vector.broadcast %c8_i32 : i32 to vector<1x128xi32>
    %25 = arith.cmpi sge, %17, %24 : vector<1x128xi32>
    %c0_5 = arith.constant 0 : index
    %c0_6 = arith.constant 0 : index
    %c0_7 = arith.constant 0 : index
    %26 = vector.load %arg2[%c0_5, %c0_6, %c0_7] : memref<12x96x32xbf16, #tpu.memory_space<vmem>>, vector<1x96x32xbf16>
    %27 = vector.shape_cast %26 : vector<1x96x32xbf16> to vector<96x32xbf16>
    %28 = arith.truncf %0 : vector<32x128xf32> to vector<32x128xbf16>
    %cst = arith.constant dense<0.000000e+00> : vector<96x128xf32>
    %29 = tpu.matmul %27, %28, %cst {dimension_numbers = #tpu.dot_dimension_numbers<[1], [0], [0], [1], [0, 0, 1, 1], [], []>} : vector<96x32xbf16>, vector<32x128xbf16>, vector<96x128xf32> -> vector<96x128xf32>
    %c0_8 = arith.constant 0 : index
    %c0_9 = arith.constant 0 : index
    %30 = vector.load %arg3[%c0_8, %c0_9] : memref<32x12xf32, #tpu.memory_space<vmem>>, vector<32x1xf32>
    %31 = vector.extract_strided_slice %29 {offsets = [0, 0], sizes = [32, 128], strides = [1, 1]} : vector<96x128xf32> to vector<32x128xf32>
    %c2_i32_10 = arith.constant 2 : i32
    %32 = tpu.dynamic_rotate %31 by %c2_i32_10 dim 1 : vector<32x128xf32>, i32 -> vector<32x128xf32>
    %cst_11 = arith.constant 0.000000e+00 : f32
    %33 = vector.shape_cast %21 : vector<1x128xi1> to vector<1x128xi1>
    %34 = vector.broadcast %33 : vector<1x128xi1> to vector<32x128xi1>
    %35 = vector.broadcast %cst_11 : f32 to vector<32x128xf32>
    %36 = arith.select %34, %32, %35 : vector<32x128xi1>, vector<32x128xf32>
    %37 = vector.broadcast %30 : vector<32x1xf32> to vector<32x128xf32>
    %38 = arith.addf %37, %36 : vector<32x128xf32>
    %39 = vector.extract_strided_slice %29 {offsets = [32, 0], sizes = [32, 128], strides = [1, 1]} : vector<96x128xf32> to vector<32x128xf32>
    %c1_i32_12 = arith.constant 1 : i32
    %40 = tpu.dynamic_rotate %39 by %c1_i32_12 dim 1 : vector<32x128xf32>, i32 -> vector<32x128xf32>
    %cst_13 = arith.constant 0.000000e+00 : f32
    %41 = vector.shape_cast %19 : vector<1x128xi1> to vector<1x128xi1>
    %42 = vector.broadcast %41 : vector<1x128xi1> to vector<32x128xi1>
    %43 = vector.broadcast %cst_13 : f32 to vector<32x128xf32>
    %44 = arith.select %42, %40, %43 : vector<32x128xi1>, vector<32x128xf32>
    %45 = arith.addf %38, %44 : vector<32x128xf32>
    %46 = vector.extract_strided_slice %29 {offsets = [64, 0], sizes = [32, 128], strides = [1, 1]} : vector<96x128xf32> to vector<32x128xf32>
    %47 = arith.addf %45, %46 : vector<32x128xf32>
    %cst_14 = arith.constant 0.000000e+00 : f32
    %48 = vector.broadcast %cst_14 : f32 to vector<32x128xf32>
    %49 = arith.maximumf %47, %48 : vector<32x128xf32>
    %c0_15 = arith.constant 0 : index
    %c0_16 = arith.constant 0 : index
    %c0_17 = arith.constant 0 : index
    %50 = vector.load %arg4[%c0_15, %c0_16, %c0_17] : memref<12x32x32xbf16, #tpu.memory_space<vmem>>, vector<1x32x32xbf16>
    %51 = vector.shape_cast %50 : vector<1x32x32xbf16> to vector<32x32xbf16>
    %52 = arith.truncf %49 : vector<32x128xf32> to vector<32x128xbf16>
    %cst_18 = arith.constant dense<0.000000e+00> : vector<32x128xf32>
    %53 = tpu.matmul %51, %52, %cst_18 {dimension_numbers = #tpu.dot_dimension_numbers<[1], [0], [0], [1], [0, 0, 1, 1], [], []>} : vector<32x32xbf16>, vector<32x128xbf16>, vector<32x128xf32> -> vector<32x128xf32>
    %c0_19 = arith.constant 0 : index
    %c0_20 = arith.constant 0 : index
    %54 = vector.load %arg5[%c0_19, %c0_20] : memref<32x12xf32, #tpu.memory_space<vmem>>, vector<32x1xf32>
    %55 = vector.broadcast %54 : vector<32x1xf32> to vector<32x128xf32>
    %56 = arith.addf %53, %55 : vector<32x128xf32>
    %57 = arith.addf %0, %56 : vector<32x128xf32>
    %c1 = arith.constant 1 : index
    %c0_21 = arith.constant 0 : index
    %c0_22 = arith.constant 0 : index
    %58 = vector.load %arg2[%c1, %c0_21, %c0_22] : memref<12x96x32xbf16, #tpu.memory_space<vmem>>, vector<1x96x32xbf16>
    %59 = vector.shape_cast %58 : vector<1x96x32xbf16> to vector<96x32xbf16>
    %60 = arith.truncf %57 : vector<32x128xf32> to vector<32x128xbf16>
    %cst_23 = arith.constant dense<0.000000e+00> : vector<96x128xf32>
    %61 = tpu.matmul %59, %60, %cst_23 {dimension_numbers = #tpu.dot_dimension_numbers<[1], [0], [0], [1], [0, 0, 1, 1], [], []>} : vector<96x32xbf16>, vector<32x128xbf16>, vector<96x128xf32> -> vector<96x128xf32>
    %c0_24 = arith.constant 0 : index
    %c1_25 = arith.constant 1 : index
    %62 = vector.load %arg3[%c0_24, %c1_25] : memref<32x12xf32, #tpu.memory_space<vmem>>, vector<32x1xf32>
    %63 = vector.extract_strided_slice %61 {offsets = [0, 0], sizes = [32, 128], strides = [1, 1]} : vector<96x128xf32> to vector<32x128xf32>
    %c4_i32_26 = arith.constant 4 : i32
    %64 = tpu.dynamic_rotate %63 by %c4_i32_26 dim 1 : vector<32x128xf32>, i32 -> vector<32x128xf32>
    %cst_27 = arith.constant 0.000000e+00 : f32
    %65 = vector.shape_cast %23 : vector<1x128xi1> to vector<1x128xi1>
    %66 = vector.broadcast %65 : vector<1x128xi1> to vector<32x128xi1>
    %67 = vector.broadcast %cst_27 : f32 to vector<32x128xf32>
    %68 = arith.select %66, %64, %67 : vector<32x128xi1>, vector<32x128xf32>
    %69 = vector.broadcast %62 : vector<32x1xf32> to vector<32x128xf32>
    %70 = arith.addf %69, %68 : vector<32x128xf32>
    %71 = vector.extract_strided_slice %61 {offsets = [32, 0], sizes = [32, 128], strides = [1, 1]} : vector<96x128xf32> to vector<32x128xf32>
    %c2_i32_28 = arith.constant 2 : i32
    %72 = tpu.dynamic_rotate %71 by %c2_i32_28 dim 1 : vector<32x128xf32>, i32 -> vector<32x128xf32>
    %cst_29 = arith.constant 0.000000e+00 : f32
    %73 = vector.shape_cast %21 : vector<1x128xi1> to vector<1x128xi1>
    %74 = vector.broadcast %73 : vector<1x128xi1> to vector<32x128xi1>
    %75 = vector.broadcast %cst_29 : f32 to vector<32x128xf32>
    %76 = arith.select %74, %72, %75 : vector<32x128xi1>, vector<32x128xf32>
    %77 = arith.addf %70, %76 : vector<32x128xf32>
    %78 = vector.extract_strided_slice %61 {offsets = [64, 0], sizes = [32, 128], strides = [1, 1]} : vector<96x128xf32> to vector<32x128xf32>
    %79 = arith.addf %77, %78 : vector<32x128xf32>
    %cst_30 = arith.constant 0.000000e+00 : f32
    %80 = vector.broadcast %cst_30 : f32 to vector<32x128xf32>
    %81 = arith.maximumf %79, %80 : vector<32x128xf32>
    %c1_31 = arith.constant 1 : index
    %c0_32 = arith.constant 0 : index
    %c0_33 = arith.constant 0 : index
    %82 = vector.load %arg4[%c1_31, %c0_32, %c0_33] : memref<12x32x32xbf16, #tpu.memory_space<vmem>>, vector<1x32x32xbf16>
    %83 = vector.shape_cast %82 : vector<1x32x32xbf16> to vector<32x32xbf16>
    %84 = arith.truncf %81 : vector<32x128xf32> to vector<32x128xbf16>
    %cst_34 = arith.constant dense<0.000000e+00> : vector<32x128xf32>
    %85 = tpu.matmul %83, %84, %cst_34 {dimension_numbers = #tpu.dot_dimension_numbers<[1], [0], [0], [1], [0, 0, 1, 1], [], []>} : vector<32x32xbf16>, vector<32x128xbf16>, vector<32x128xf32> -> vector<32x128xf32>
    %c0_35 = arith.constant 0 : index
    %c1_36 = arith.constant 1 : index
    %86 = vector.load %arg5[%c0_35, %c1_36] : memref<32x12xf32, #tpu.memory_space<vmem>>, vector<32x1xf32>
    %87 = vector.broadcast %86 : vector<32x1xf32> to vector<32x128xf32>
    %88 = arith.addf %85, %87 : vector<32x128xf32>
    %89 = arith.addf %57, %88 : vector<32x128xf32>
    %c2 = arith.constant 2 : index
    %c0_37 = arith.constant 0 : index
    %c0_38 = arith.constant 0 : index
    %90 = vector.load %arg2[%c2, %c0_37, %c0_38] : memref<12x96x32xbf16, #tpu.memory_space<vmem>>, vector<1x96x32xbf16>
    %91 = vector.shape_cast %90 : vector<1x96x32xbf16> to vector<96x32xbf16>
    %92 = arith.truncf %89 : vector<32x128xf32> to vector<32x128xbf16>
    %cst_39 = arith.constant dense<0.000000e+00> : vector<96x128xf32>
    %93 = tpu.matmul %91, %92, %cst_39 {dimension_numbers = #tpu.dot_dimension_numbers<[1], [0], [0], [1], [0, 0, 1, 1], [], []>} : vector<96x32xbf16>, vector<32x128xbf16>, vector<96x128xf32> -> vector<96x128xf32>
    %c0_40 = arith.constant 0 : index
    %c2_41 = arith.constant 2 : index
    %94 = vector.load %arg3[%c0_40, %c2_41] : memref<32x12xf32, #tpu.memory_space<vmem>>, vector<32x1xf32>
    %95 = vector.extract_strided_slice %93 {offsets = [0, 0], sizes = [32, 128], strides = [1, 1]} : vector<96x128xf32> to vector<32x128xf32>
    %c8_i32_42 = arith.constant 8 : i32
    %96 = tpu.dynamic_rotate %95 by %c8_i32_42 dim 1 : vector<32x128xf32>, i32 -> vector<32x128xf32>
    %cst_43 = arith.constant 0.000000e+00 : f32
    %97 = vector.shape_cast %25 : vector<1x128xi1> to vector<1x128xi1>
    %98 = vector.broadcast %97 : vector<1x128xi1> to vector<32x128xi1>
    %99 = vector.broadcast %cst_43 : f32 to vector<32x128xf32>
    %100 = arith.select %98, %96, %99 : vector<32x128xi1>, vector<32x128xf32>
    %101 = vector.broadcast %94 : vector<32x1xf32> to vector<32x128xf32>
    %102 = arith.addf %101, %100 : vector<32x128xf32>
    %103 = vector.extract_strided_slice %93 {offsets = [32, 0], sizes = [32, 128], strides = [1, 1]} : vector<96x128xf32> to vector<32x128xf32>
    %c4_i32_44 = arith.constant 4 : i32
    %104 = tpu.dynamic_rotate %103 by %c4_i32_44 dim 1 : vector<32x128xf32>, i32 -> vector<32x128xf32>
    %cst_45 = arith.constant 0.000000e+00 : f32
    %105 = vector.shape_cast %23 : vector<1x128xi1> to vector<1x128xi1>
    %106 = vector.broadcast %105 : vector<1x128xi1> to vector<32x128xi1>
    %107 = vector.broadcast %cst_45 : f32 to vector<32x128xf32>
    %108 = arith.select %106, %104, %107 : vector<32x128xi1>, vector<32x128xf32>
    %109 = arith.addf %102, %108 : vector<32x128xf32>
    %110 = vector.extract_strided_slice %93 {offsets = [64, 0], sizes = [32, 128], strides = [1, 1]} : vector<96x128xf32> to vector<32x128xf32>
    %111 = arith.addf %109, %110 : vector<32x128xf32>
    %cst_46 = arith.constant 0.000000e+00 : f32
    %112 = vector.broadcast %cst_46 : f32 to vector<32x128xf32>
    %113 = arith.maximumf %111, %112 : vector<32x128xf32>
    %c2_47 = arith.constant 2 : index
    %c0_48 = arith.constant 0 : index
    %c0_49 = arith.constant 0 : index
    %114 = vector.load %arg4[%c2_47, %c0_48, %c0_49] : memref<12x32x32xbf16, #tpu.memory_space<vmem>>, vector<1x32x32xbf16>
    %115 = vector.shape_cast %114 : vector<1x32x32xbf16> to vector<32x32xbf16>
    %116 = arith.truncf %113 : vector<32x128xf32> to vector<32x128xbf16>
    %cst_50 = arith.constant dense<0.000000e+00> : vector<32x128xf32>
    %117 = tpu.matmul %115, %116, %cst_50 {dimension_numbers = #tpu.dot_dimension_numbers<[1], [0], [0], [1], [0, 0, 1, 1], [], []>} : vector<32x32xbf16>, vector<32x128xbf16>, vector<32x128xf32> -> vector<32x128xf32>
    %c0_51 = arith.constant 0 : index
    %c2_52 = arith.constant 2 : index
    %118 = vector.load %arg5[%c0_51, %c2_52] : memref<32x12xf32, #tpu.memory_space<vmem>>, vector<32x1xf32>
    %119 = vector.broadcast %118 : vector<32x1xf32> to vector<32x128xf32>
    %120 = arith.addf %117, %119 : vector<32x128xf32>
    %121 = arith.addf %89, %120 : vector<32x128xf32>
    %cst_53 = arith.constant dense<0xFF800000> : vector<128xf32>
    %122 = vector.multi_reduction <maximumf>, %121, %cst_53 [0] : vector<32x128xf32> to vector<128xf32>
    %123 = vector.shape_cast %122 : vector<128xf32> to vector<1x128xf32>
    %124 = vector.broadcast %123 : vector<1x128xf32> to vector<32x128xf32>
    %125 = arith.subf %121, %124 : vector<32x128xf32>
    %126 = math.exp %125 : vector<32x128xf32>
    %cst_54 = arith.constant dense<0.000000e+00> : vector<128xf32>
    %127 = vector.multi_reduction <add>, %126, %cst_54 [0] : vector<32x128xf32> to vector<128xf32>
    %128 = vector.shape_cast %127 : vector<128xf32> to vector<1x128xf32>
    %129 = vector.broadcast %128 : vector<1x128xf32> to vector<32x128xf32>
    %130 = arith.divf %126, %129 : vector<32x128xf32>
    %c3 = arith.constant 3 : index
    %c0_55 = arith.constant 0 : index
    %c0_56 = arith.constant 0 : index
    %131 = vector.load %arg2[%c3, %c0_55, %c0_56] : memref<12x96x32xbf16, #tpu.memory_space<vmem>>, vector<1x96x32xbf16>
    %132 = vector.shape_cast %131 : vector<1x96x32xbf16> to vector<96x32xbf16>
    %133 = arith.truncf %130 : vector<32x128xf32> to vector<32x128xbf16>
    %cst_57 = arith.constant dense<0.000000e+00> : vector<96x128xf32>
    %134 = tpu.matmul %132, %133, %cst_57 {dimension_numbers = #tpu.dot_dimension_numbers<[1], [0], [0], [1], [0, 0, 1, 1], [], []>} : vector<96x32xbf16>, vector<32x128xbf16>, vector<96x128xf32> -> vector<96x128xf32>
    %c0_58 = arith.constant 0 : index
    %c3_59 = arith.constant 3 : index
    %135 = vector.load %arg3[%c0_58, %c3_59] : memref<32x12xf32, #tpu.memory_space<vmem>>, vector<32x1xf32>
    %136 = vector.extract_strided_slice %134 {offsets = [0, 0], sizes = [32, 128], strides = [1, 1]} : vector<96x128xf32> to vector<32x128xf32>
    %c2_i32_60 = arith.constant 2 : i32
    %137 = tpu.dynamic_rotate %136 by %c2_i32_60 dim 1 : vector<32x128xf32>, i32 -> vector<32x128xf32>
    %cst_61 = arith.constant 0.000000e+00 : f32
    %138 = vector.shape_cast %21 : vector<1x128xi1> to vector<1x128xi1>
    %139 = vector.broadcast %138 : vector<1x128xi1> to vector<32x128xi1>
    %140 = vector.broadcast %cst_61 : f32 to vector<32x128xf32>
    %141 = arith.select %139, %137, %140 : vector<32x128xi1>, vector<32x128xf32>
    %142 = vector.broadcast %135 : vector<32x1xf32> to vector<32x128xf32>
    %143 = arith.addf %142, %141 : vector<32x128xf32>
    %144 = vector.extract_strided_slice %134 {offsets = [32, 0], sizes = [32, 128], strides = [1, 1]} : vector<96x128xf32> to vector<32x128xf32>
    %c1_i32_62 = arith.constant 1 : i32
    %145 = tpu.dynamic_rotate %144 by %c1_i32_62 dim 1 : vector<32x128xf32>, i32 -> vector<32x128xf32>
    %cst_63 = arith.constant 0.000000e+00 : f32
    %146 = vector.shape_cast %19 : vector<1x128xi1> to vector<1x128xi1>
    %147 = vector.broadcast %146 : vector<1x128xi1> to vector<32x128xi1>
    %148 = vector.broadcast %cst_63 : f32 to vector<32x128xf32>
    %149 = arith.select %147, %145, %148 : vector<32x128xi1>, vector<32x128xf32>
    %150 = arith.addf %143, %149 : vector<32x128xf32>
    %151 = vector.extract_strided_slice %134 {offsets = [64, 0], sizes = [32, 128], strides = [1, 1]} : vector<96x128xf32> to vector<32x128xf32>
    %152 = arith.addf %150, %151 : vector<32x128xf32>
    %cst_64 = arith.constant 0.000000e+00 : f32
    %153 = vector.broadcast %cst_64 : f32 to vector<32x128xf32>
    %154 = arith.maximumf %152, %153 : vector<32x128xf32>
    %c3_65 = arith.constant 3 : index
    %c0_66 = arith.constant 0 : index
    %c0_67 = arith.constant 0 : index
    %155 = vector.load %arg4[%c3_65, %c0_66, %c0_67] : memref<12x32x32xbf16, #tpu.memory_space<vmem>>, vector<1x32x32xbf16>
    %156 = vector.shape_cast %155 : vector<1x32x32xbf16> to vector<32x32xbf16>
    %157 = arith.truncf %154 : vector<32x128xf32> to vector<32x128xbf16>
    %cst_68 = arith.constant dense<0.000000e+00> : vector<32x128xf32>
    %158 = tpu.matmul %156, %157, %cst_68 {dimension_numbers = #tpu.dot_dimension_numbers<[1], [0], [0], [1], [0, 0, 1, 1], [], []>} : vector<32x32xbf16>, vector<32x128xbf16>, vector<32x128xf32> -> vector<32x128xf32>
    %c0_69 = arith.constant 0 : index
    %c3_70 = arith.constant 3 : index
    %159 = vector.load %arg5[%c0_69, %c3_70] : memref<32x12xf32, #tpu.memory_space<vmem>>, vector<32x1xf32>
    %160 = vector.broadcast %159 : vector<32x1xf32> to vector<32x128xf32>
    %161 = arith.addf %158, %160 : vector<32x128xf32>
    %162 = arith.addf %130, %161 : vector<32x128xf32>
    %c4 = arith.constant 4 : index
    %c0_71 = arith.constant 0 : index
    %c0_72 = arith.constant 0 : index
    %163 = vector.load %arg2[%c4, %c0_71, %c0_72] : memref<12x96x32xbf16, #tpu.memory_space<vmem>>, vector<1x96x32xbf16>
    %164 = vector.shape_cast %163 : vector<1x96x32xbf16> to vector<96x32xbf16>
    %165 = arith.truncf %162 : vector<32x128xf32> to vector<32x128xbf16>
    %cst_73 = arith.constant dense<0.000000e+00> : vector<96x128xf32>
    %166 = tpu.matmul %164, %165, %cst_73 {dimension_numbers = #tpu.dot_dimension_numbers<[1], [0], [0], [1], [0, 0, 1, 1], [], []>} : vector<96x32xbf16>, vector<32x128xbf16>, vector<96x128xf32> -> vector<96x128xf32>
    %c0_74 = arith.constant 0 : index
    %c4_75 = arith.constant 4 : index
    %167 = vector.load %arg3[%c0_74, %c4_75] : memref<32x12xf32, #tpu.memory_space<vmem>>, vector<32x1xf32>
    %168 = vector.extract_strided_slice %166 {offsets = [0, 0], sizes = [32, 128], strides = [1, 1]} : vector<96x128xf32> to vector<32x128xf32>
    %c4_i32_76 = arith.constant 4 : i32
    %169 = tpu.dynamic_rotate %168 by %c4_i32_76 dim 1 : vector<32x128xf32>, i32 -> vector<32x128xf32>
    %cst_77 = arith.constant 0.000000e+00 : f32
    %170 = vector.shape_cast %23 : vector<1x128xi1> to vector<1x128xi1>
    %171 = vector.broadcast %170 : vector<1x128xi1> to vector<32x128xi1>
    %172 = vector.broadcast %cst_77 : f32 to vector<32x128xf32>
    %173 = arith.select %171, %169, %172 : vector<32x128xi1>, vector<32x128xf32>
    %174 = vector.broadcast %167 : vector<32x1xf32> to vector<32x128xf32>
    %175 = arith.addf %174, %173 : vector<32x128xf32>
    %176 = vector.extract_strided_slice %166 {offsets = [32, 0], sizes = [32, 128], strides = [1, 1]} : vector<96x128xf32> to vector<32x128xf32>
    %c2_i32_78 = arith.constant 2 : i32
    %177 = tpu.dynamic_rotate %176 by %c2_i32_78 dim 1 : vector<32x128xf32>, i32 -> vector<32x128xf32>
    %cst_79 = arith.constant 0.000000e+00 : f32
    %178 = vector.shape_cast %21 : vector<1x128xi1> to vector<1x128xi1>
    %179 = vector.broadcast %178 : vector<1x128xi1> to vector<32x128xi1>
    %180 = vector.broadcast %cst_79 : f32 to vector<32x128xf32>
    %181 = arith.select %179, %177, %180 : vector<32x128xi1>, vector<32x128xf32>
    %182 = arith.addf %175, %181 : vector<32x128xf32>
    %183 = vector.extract_strided_slice %166 {offsets = [64, 0], sizes = [32, 128], strides = [1, 1]} : vector<96x128xf32> to vector<32x128xf32>
    %184 = arith.addf %182, %183 : vector<32x128xf32>
    %cst_80 = arith.constant 0.000000e+00 : f32
    %185 = vector.broadcast %cst_80 : f32 to vector<32x128xf32>
    %186 = arith.maximumf %184, %185 : vector<32x128xf32>
    %c4_81 = arith.constant 4 : index
    %c0_82 = arith.constant 0 : index
    %c0_83 = arith.constant 0 : index
    %187 = vector.load %arg4[%c4_81, %c0_82, %c0_83] : memref<12x32x32xbf16, #tpu.memory_space<vmem>>, vector<1x32x32xbf16>
    %188 = vector.shape_cast %187 : vector<1x32x32xbf16> to vector<32x32xbf16>
    %189 = arith.truncf %186 : vector<32x128xf32> to vector<32x128xbf16>
    %cst_84 = arith.constant dense<0.000000e+00> : vector<32x128xf32>
    %190 = tpu.matmul %188, %189, %cst_84 {dimension_numbers = #tpu.dot_dimension_numbers<[1], [0], [0], [1], [0, 0, 1, 1], [], []>} : vector<32x32xbf16>, vector<32x128xbf16>, vector<32x128xf32> -> vector<32x128xf32>
    %c0_85 = arith.constant 0 : index
    %c4_86 = arith.constant 4 : index
    %191 = vector.load %arg5[%c0_85, %c4_86] : memref<32x12xf32, #tpu.memory_space<vmem>>, vector<32x1xf32>
    %192 = vector.broadcast %191 : vector<32x1xf32> to vector<32x128xf32>
    %193 = arith.addf %190, %192 : vector<32x128xf32>
    %194 = arith.addf %162, %193 : vector<32x128xf32>
    %c5 = arith.constant 5 : index
    %c0_87 = arith.constant 0 : index
    %c0_88 = arith.constant 0 : index
    %195 = vector.load %arg2[%c5, %c0_87, %c0_88] : memref<12x96x32xbf16, #tpu.memory_space<vmem>>, vector<1x96x32xbf16>
    %196 = vector.shape_cast %195 : vector<1x96x32xbf16> to vector<96x32xbf16>
    %197 = arith.truncf %194 : vector<32x128xf32> to vector<32x128xbf16>
    %cst_89 = arith.constant dense<0.000000e+00> : vector<96x128xf32>
    %198 = tpu.matmul %196, %197, %cst_89 {dimension_numbers = #tpu.dot_dimension_numbers<[1], [0], [0], [1], [0, 0, 1, 1], [], []>} : vector<96x32xbf16>, vector<32x128xbf16>, vector<96x128xf32> -> vector<96x128xf32>
    %c0_90 = arith.constant 0 : index
    %c5_91 = arith.constant 5 : index
    %199 = vector.load %arg3[%c0_90, %c5_91] : memref<32x12xf32, #tpu.memory_space<vmem>>, vector<32x1xf32>
    %200 = vector.extract_strided_slice %198 {offsets = [0, 0], sizes = [32, 128], strides = [1, 1]} : vector<96x128xf32> to vector<32x128xf32>
    %c8_i32_92 = arith.constant 8 : i32
    %201 = tpu.dynamic_rotate %200 by %c8_i32_92 dim 1 : vector<32x128xf32>, i32 -> vector<32x128xf32>
    %cst_93 = arith.constant 0.000000e+00 : f32
    %202 = vector.shape_cast %25 : vector<1x128xi1> to vector<1x128xi1>
    %203 = vector.broadcast %202 : vector<1x128xi1> to vector<32x128xi1>
    %204 = vector.broadcast %cst_93 : f32 to vector<32x128xf32>
    %205 = arith.select %203, %201, %204 : vector<32x128xi1>, vector<32x128xf32>
    %206 = vector.broadcast %199 : vector<32x1xf32> to vector<32x128xf32>
    %207 = arith.addf %206, %205 : vector<32x128xf32>
    %208 = vector.extract_strided_slice %198 {offsets = [32, 0], sizes = [32, 128], strides = [1, 1]} : vector<96x128xf32> to vector<32x128xf32>
    %c4_i32_94 = arith.constant 4 : i32
    %209 = tpu.dynamic_rotate %208 by %c4_i32_94 dim 1 : vector<32x128xf32>, i32 -> vector<32x128xf32>
    %cst_95 = arith.constant 0.000000e+00 : f32
    %210 = vector.shape_cast %23 : vector<1x128xi1> to vector<1x128xi1>
    %211 = vector.broadcast %210 : vector<1x128xi1> to vector<32x128xi1>
    %212 = vector.broadcast %cst_95 : f32 to vector<32x128xf32>
    %213 = arith.select %211, %209, %212 : vector<32x128xi1>, vector<32x128xf32>
    %214 = arith.addf %207, %213 : vector<32x128xf32>
    %215 = vector.extract_strided_slice %198 {offsets = [64, 0], sizes = [32, 128], strides = [1, 1]} : vector<96x128xf32> to vector<32x128xf32>
    %216 = arith.addf %214, %215 : vector<32x128xf32>
    %cst_96 = arith.constant 0.000000e+00 : f32
    %217 = vector.broadcast %cst_96 : f32 to vector<32x128xf32>
    %218 = arith.maximumf %216, %217 : vector<32x128xf32>
    %c5_97 = arith.constant 5 : index
    %c0_98 = arith.constant 0 : index
    %c0_99 = arith.constant 0 : index
    %219 = vector.load %arg4[%c5_97, %c0_98, %c0_99] : memref<12x32x32xbf16, #tpu.memory_space<vmem>>, vector<1x32x32xbf16>
    %220 = vector.shape_cast %219 : vector<1x32x32xbf16> to vector<32x32xbf16>
    %221 = arith.truncf %218 : vector<32x128xf32> to vector<32x128xbf16>
    %cst_100 = arith.constant dense<0.000000e+00> : vector<32x128xf32>
    %222 = tpu.matmul %220, %221, %cst_100 {dimension_numbers = #tpu.dot_dimension_numbers<[1], [0], [0], [1], [0, 0, 1, 1], [], []>} : vector<32x32xbf16>, vector<32x128xbf16>, vector<32x128xf32> -> vector<32x128xf32>
    %c0_101 = arith.constant 0 : index
    %c5_102 = arith.constant 5 : index
    %223 = vector.load %arg5[%c0_101, %c5_102] : memref<32x12xf32, #tpu.memory_space<vmem>>, vector<32x1xf32>
    %224 = vector.broadcast %223 : vector<32x1xf32> to vector<32x128xf32>
    %225 = arith.addf %222, %224 : vector<32x128xf32>
    %226 = arith.addf %194, %225 : vector<32x128xf32>
    %cst_103 = arith.constant dense<0xFF800000> : vector<128xf32>
    %227 = vector.multi_reduction <maximumf>, %226, %cst_103 [0] : vector<32x128xf32> to vector<128xf32>
    %228 = vector.shape_cast %227 : vector<128xf32> to vector<1x128xf32>
    %229 = vector.broadcast %228 : vector<1x128xf32> to vector<32x128xf32>
    %230 = arith.subf %226, %229 : vector<32x128xf32>
    %231 = math.exp %230 : vector<32x128xf32>
    %cst_104 = arith.constant dense<0.000000e+00> : vector<128xf32>
    %232 = vector.multi_reduction <add>, %231, %cst_104 [0] : vector<32x128xf32> to vector<128xf32>
    %233 = vector.shape_cast %232 : vector<128xf32> to vector<1x128xf32>
    %234 = vector.broadcast %233 : vector<1x128xf32> to vector<32x128xf32>
    %235 = arith.divf %231, %234 : vector<32x128xf32>
    %c6 = arith.constant 6 : index
    %c0_105 = arith.constant 0 : index
    %c0_106 = arith.constant 0 : index
    %236 = vector.load %arg2[%c6, %c0_105, %c0_106] : memref<12x96x32xbf16, #tpu.memory_space<vmem>>, vector<1x96x32xbf16>
    %237 = vector.shape_cast %236 : vector<1x96x32xbf16> to vector<96x32xbf16>
    %238 = arith.truncf %235 : vector<32x128xf32> to vector<32x128xbf16>
    %cst_107 = arith.constant dense<0.000000e+00> : vector<96x128xf32>
    %239 = tpu.matmul %237, %238, %cst_107 {dimension_numbers = #tpu.dot_dimension_numbers<[1], [0], [0], [1], [0, 0, 1, 1], [], []>} : vector<96x32xbf16>, vector<32x128xbf16>, vector<96x128xf32> -> vector<96x128xf32>
    %c0_108 = arith.constant 0 : index
    %c6_109 = arith.constant 6 : index
    %240 = vector.load %arg3[%c0_108, %c6_109] : memref<32x12xf32, #tpu.memory_space<vmem>>, vector<32x1xf32>
    %241 = vector.extract_strided_slice %239 {offsets = [0, 0], sizes = [32, 128], strides = [1, 1]} : vector<96x128xf32> to vector<32x128xf32>
    %c2_i32_110 = arith.constant 2 : i32
    %242 = tpu.dynamic_rotate %241 by %c2_i32_110 dim 1 : vector<32x128xf32>, i32 -> vector<32x128xf32>
    %cst_111 = arith.constant 0.000000e+00 : f32
    %243 = vector.shape_cast %21 : vector<1x128xi1> to vector<1x128xi1>
    %244 = vector.broadcast %243 : vector<1x128xi1> to vector<32x128xi1>
    %245 = vector.broadcast %cst_111 : f32 to vector<32x128xf32>
    %246 = arith.select %244, %242, %245 : vector<32x128xi1>, vector<32x128xf32>
    %247 = vector.broadcast %240 : vector<32x1xf32> to vector<32x128xf32>
    %248 = arith.addf %247, %246 : vector<32x128xf32>
    %249 = vector.extract_strided_slice %239 {offsets = [32, 0], sizes = [32, 128], strides = [1, 1]} : vector<96x128xf32> to vector<32x128xf32>
    %c1_i32_112 = arith.constant 1 : i32
    %250 = tpu.dynamic_rotate %249 by %c1_i32_112 dim 1 : vector<32x128xf32>, i32 -> vector<32x128xf32>
    %cst_113 = arith.constant 0.000000e+00 : f32
    %251 = vector.shape_cast %19 : vector<1x128xi1> to vector<1x128xi1>
    %252 = vector.broadcast %251 : vector<1x128xi1> to vector<32x128xi1>
    %253 = vector.broadcast %cst_113 : f32 to vector<32x128xf32>
    %254 = arith.select %252, %250, %253 : vector<32x128xi1>, vector<32x128xf32>
    %255 = arith.addf %248, %254 : vector<32x128xf32>
    %256 = vector.extract_strided_slice %239 {offsets = [64, 0], sizes = [32, 128], strides = [1, 1]} : vector<96x128xf32> to vector<32x128xf32>
    %257 = arith.addf %255, %256 : vector<32x128xf32>
    %cst_114 = arith.constant 0.000000e+00 : f32
    %258 = vector.broadcast %cst_114 : f32 to vector<32x128xf32>
    %259 = arith.maximumf %257, %258 : vector<32x128xf32>
    %c6_115 = arith.constant 6 : index
    %c0_116 = arith.constant 0 : index
    %c0_117 = arith.constant 0 : index
    %260 = vector.load %arg4[%c6_115, %c0_116, %c0_117] : memref<12x32x32xbf16, #tpu.memory_space<vmem>>, vector<1x32x32xbf16>
    %261 = vector.shape_cast %260 : vector<1x32x32xbf16> to vector<32x32xbf16>
    %262 = arith.truncf %259 : vector<32x128xf32> to vector<32x128xbf16>
    %cst_118 = arith.constant dense<0.000000e+00> : vector<32x128xf32>
    %263 = tpu.matmul %261, %262, %cst_118 {dimension_numbers = #tpu.dot_dimension_numbers<[1], [0], [0], [1], [0, 0, 1, 1], [], []>} : vector<32x32xbf16>, vector<32x128xbf16>, vector<32x128xf32> -> vector<32x128xf32>
    %c0_119 = arith.constant 0 : index
    %c6_120 = arith.constant 6 : index
    %264 = vector.load %arg5[%c0_119, %c6_120] : memref<32x12xf32, #tpu.memory_space<vmem>>, vector<32x1xf32>
    %265 = vector.broadcast %264 : vector<32x1xf32> to vector<32x128xf32>
    %266 = arith.addf %263, %265 : vector<32x128xf32>
    %267 = arith.addf %235, %266 : vector<32x128xf32>
    %c7 = arith.constant 7 : index
    %c0_121 = arith.constant 0 : index
    %c0_122 = arith.constant 0 : index
    %268 = vector.load %arg2[%c7, %c0_121, %c0_122] : memref<12x96x32xbf16, #tpu.memory_space<vmem>>, vector<1x96x32xbf16>
    %269 = vector.shape_cast %268 : vector<1x96x32xbf16> to vector<96x32xbf16>
    %270 = arith.truncf %267 : vector<32x128xf32> to vector<32x128xbf16>
    %cst_123 = arith.constant dense<0.000000e+00> : vector<96x128xf32>
    %271 = tpu.matmul %269, %270, %cst_123 {dimension_numbers = #tpu.dot_dimension_numbers<[1], [0], [0], [1], [0, 0, 1, 1], [], []>} : vector<96x32xbf16>, vector<32x128xbf16>, vector<96x128xf32> -> vector<96x128xf32>
    %c0_124 = arith.constant 0 : index
    %c7_125 = arith.constant 7 : index
    %272 = vector.load %arg3[%c0_124, %c7_125] : memref<32x12xf32, #tpu.memory_space<vmem>>, vector<32x1xf32>
    %273 = vector.extract_strided_slice %271 {offsets = [0, 0], sizes = [32, 128], strides = [1, 1]} : vector<96x128xf32> to vector<32x128xf32>
    %c4_i32_126 = arith.constant 4 : i32
    %274 = tpu.dynamic_rotate %273 by %c4_i32_126 dim 1 : vector<32x128xf32>, i32 -> vector<32x128xf32>
    %cst_127 = arith.constant 0.000000e+00 : f32
    %275 = vector.shape_cast %23 : vector<1x128xi1> to vector<1x128xi1>
    %276 = vector.broadcast %275 : vector<1x128xi1> to vector<32x128xi1>
    %277 = vector.broadcast %cst_127 : f32 to vector<32x128xf32>
    %278 = arith.select %276, %274, %277 : vector<32x128xi1>, vector<32x128xf32>
    %279 = vector.broadcast %272 : vector<32x1xf32> to vector<32x128xf32>
    %280 = arith.addf %279, %278 : vector<32x128xf32>
    %281 = vector.extract_strided_slice %271 {offsets = [32, 0], sizes = [32, 128], strides = [1, 1]} : vector<96x128xf32> to vector<32x128xf32>
    %c2_i32_128 = arith.constant 2 : i32
    %282 = tpu.dynamic_rotate %281 by %c2_i32_128 dim 1 : vector<32x128xf32>, i32 -> vector<32x128xf32>
    %cst_129 = arith.constant 0.000000e+00 : f32
    %283 = vector.shape_cast %21 : vector<1x128xi1> to vector<1x128xi1>
    %284 = vector.broadcast %283 : vector<1x128xi1> to vector<32x128xi1>
    %285 = vector.broadcast %cst_129 : f32 to vector<32x128xf32>
    %286 = arith.select %284, %282, %285 : vector<32x128xi1>, vector<32x128xf32>
    %287 = arith.addf %280, %286 : vector<32x128xf32>
    %288 = vector.extract_strided_slice %271 {offsets = [64, 0], sizes = [32, 128], strides = [1, 1]} : vector<96x128xf32> to vector<32x128xf32>
    %289 = arith.addf %287, %288 : vector<32x128xf32>
    %cst_130 = arith.constant 0.000000e+00 : f32
    %290 = vector.broadcast %cst_130 : f32 to vector<32x128xf32>
    %291 = arith.maximumf %289, %290 : vector<32x128xf32>
    %c7_131 = arith.constant 7 : index
    %c0_132 = arith.constant 0 : index
    %c0_133 = arith.constant 0 : index
    %292 = vector.load %arg4[%c7_131, %c0_132, %c0_133] : memref<12x32x32xbf16, #tpu.memory_space<vmem>>, vector<1x32x32xbf16>
    %293 = vector.shape_cast %292 : vector<1x32x32xbf16> to vector<32x32xbf16>
    %294 = arith.truncf %291 : vector<32x128xf32> to vector<32x128xbf16>
    %cst_134 = arith.constant dense<0.000000e+00> : vector<32x128xf32>
    %295 = tpu.matmul %293, %294, %cst_134 {dimension_numbers = #tpu.dot_dimension_numbers<[1], [0], [0], [1], [0, 0, 1, 1], [], []>} : vector<32x32xbf16>, vector<32x128xbf16>, vector<32x128xf32> -> vector<32x128xf32>
    %c0_135 = arith.constant 0 : index
    %c7_136 = arith.constant 7 : index
    %296 = vector.load %arg5[%c0_135, %c7_136] : memref<32x12xf32, #tpu.memory_space<vmem>>, vector<32x1xf32>
    %297 = vector.broadcast %296 : vector<32x1xf32> to vector<32x128xf32>
    %298 = arith.addf %295, %297 : vector<32x128xf32>
    %299 = arith.addf %267, %298 : vector<32x128xf32>
    %c8 = arith.constant 8 : index
    %c0_137 = arith.constant 0 : index
    %c0_138 = arith.constant 0 : index
    %300 = vector.load %arg2[%c8, %c0_137, %c0_138] : memref<12x96x32xbf16, #tpu.memory_space<vmem>>, vector<1x96x32xbf16>
    %301 = vector.shape_cast %300 : vector<1x96x32xbf16> to vector<96x32xbf16>
    %302 = arith.truncf %299 : vector<32x128xf32> to vector<32x128xbf16>
    %cst_139 = arith.constant dense<0.000000e+00> : vector<96x128xf32>
    %303 = tpu.matmul %301, %302, %cst_139 {dimension_numbers = #tpu.dot_dimension_numbers<[1], [0], [0], [1], [0, 0, 1, 1], [], []>} : vector<96x32xbf16>, vector<32x128xbf16>, vector<96x128xf32> -> vector<96x128xf32>
    %c0_140 = arith.constant 0 : index
    %c8_141 = arith.constant 8 : index
    %304 = vector.load %arg3[%c0_140, %c8_141] : memref<32x12xf32, #tpu.memory_space<vmem>>, vector<32x1xf32>
    %305 = vector.extract_strided_slice %303 {offsets = [0, 0], sizes = [32, 128], strides = [1, 1]} : vector<96x128xf32> to vector<32x128xf32>
    %c8_i32_142 = arith.constant 8 : i32
    %306 = tpu.dynamic_rotate %305 by %c8_i32_142 dim 1 : vector<32x128xf32>, i32 -> vector<32x128xf32>
    %cst_143 = arith.constant 0.000000e+00 : f32
    %307 = vector.shape_cast %25 : vector<1x128xi1> to vector<1x128xi1>
    %308 = vector.broadcast %307 : vector<1x128xi1> to vector<32x128xi1>
    %309 = vector.broadcast %cst_143 : f32 to vector<32x128xf32>
    %310 = arith.select %308, %306, %309 : vector<32x128xi1>, vector<32x128xf32>
    %311 = vector.broadcast %304 : vector<32x1xf32> to vector<32x128xf32>
    %312 = arith.addf %311, %310 : vector<32x128xf32>
    %313 = vector.extract_strided_slice %303 {offsets = [32, 0], sizes = [32, 128], strides = [1, 1]} : vector<96x128xf32> to vector<32x128xf32>
    %c4_i32_144 = arith.constant 4 : i32
    %314 = tpu.dynamic_rotate %313 by %c4_i32_144 dim 1 : vector<32x128xf32>, i32 -> vector<32x128xf32>
    %cst_145 = arith.constant 0.000000e+00 : f32
    %315 = vector.shape_cast %23 : vector<1x128xi1> to vector<1x128xi1>
    %316 = vector.broadcast %315 : vector<1x128xi1> to vector<32x128xi1>
    %317 = vector.broadcast %cst_145 : f32 to vector<32x128xf32>
    %318 = arith.select %316, %314, %317 : vector<32x128xi1>, vector<32x128xf32>
    %319 = arith.addf %312, %318 : vector<32x128xf32>
    %320 = vector.extract_strided_slice %303 {offsets = [64, 0], sizes = [32, 128], strides = [1, 1]} : vector<96x128xf32> to vector<32x128xf32>
    %321 = arith.addf %319, %320 : vector<32x128xf32>
    %cst_146 = arith.constant 0.000000e+00 : f32
    %322 = vector.broadcast %cst_146 : f32 to vector<32x128xf32>
    %323 = arith.maximumf %321, %322 : vector<32x128xf32>
    %c8_147 = arith.constant 8 : index
    %c0_148 = arith.constant 0 : index
    %c0_149 = arith.constant 0 : index
    %324 = vector.load %arg4[%c8_147, %c0_148, %c0_149] : memref<12x32x32xbf16, #tpu.memory_space<vmem>>, vector<1x32x32xbf16>
    %325 = vector.shape_cast %324 : vector<1x32x32xbf16> to vector<32x32xbf16>
    %326 = arith.truncf %323 : vector<32x128xf32> to vector<32x128xbf16>
    %cst_150 = arith.constant dense<0.000000e+00> : vector<32x128xf32>
    %327 = tpu.matmul %325, %326, %cst_150 {dimension_numbers = #tpu.dot_dimension_numbers<[1], [0], [0], [1], [0, 0, 1, 1], [], []>} : vector<32x32xbf16>, vector<32x128xbf16>, vector<32x128xf32> -> vector<32x128xf32>
    %c0_151 = arith.constant 0 : index
    %c8_152 = arith.constant 8 : index
    %328 = vector.load %arg5[%c0_151, %c8_152] : memref<32x12xf32, #tpu.memory_space<vmem>>, vector<32x1xf32>
    %329 = vector.broadcast %328 : vector<32x1xf32> to vector<32x128xf32>
    %330 = arith.addf %327, %329 : vector<32x128xf32>
    %331 = arith.addf %299, %330 : vector<32x128xf32>
    %cst_153 = arith.constant dense<0xFF800000> : vector<128xf32>
    %332 = vector.multi_reduction <maximumf>, %331, %cst_153 [0] : vector<32x128xf32> to vector<128xf32>
    %333 = vector.shape_cast %332 : vector<128xf32> to vector<1x128xf32>
    %334 = vector.broadcast %333 : vector<1x128xf32> to vector<32x128xf32>
    %335 = arith.subf %331, %334 : vector<32x128xf32>
    %336 = math.exp %335 : vector<32x128xf32>
    %cst_154 = arith.constant dense<0.000000e+00> : vector<128xf32>
    %337 = vector.multi_reduction <add>, %336, %cst_154 [0] : vector<32x128xf32> to vector<128xf32>
    %338 = vector.shape_cast %337 : vector<128xf32> to vector<1x128xf32>
    %339 = vector.broadcast %338 : vector<1x128xf32> to vector<32x128xf32>
    %340 = arith.divf %336, %339 : vector<32x128xf32>
    %c9 = arith.constant 9 : index
    %c0_155 = arith.constant 0 : index
    %c0_156 = arith.constant 0 : index
    %341 = vector.load %arg2[%c9, %c0_155, %c0_156] : memref<12x96x32xbf16, #tpu.memory_space<vmem>>, vector<1x96x32xbf16>
    %342 = vector.shape_cast %341 : vector<1x96x32xbf16> to vector<96x32xbf16>
    %343 = arith.truncf %340 : vector<32x128xf32> to vector<32x128xbf16>
    %cst_157 = arith.constant dense<0.000000e+00> : vector<96x128xf32>
    %344 = tpu.matmul %342, %343, %cst_157 {dimension_numbers = #tpu.dot_dimension_numbers<[1], [0], [0], [1], [0, 0, 1, 1], [], []>} : vector<96x32xbf16>, vector<32x128xbf16>, vector<96x128xf32> -> vector<96x128xf32>
    %c0_158 = arith.constant 0 : index
    %c9_159 = arith.constant 9 : index
    %345 = vector.load %arg3[%c0_158, %c9_159] : memref<32x12xf32, #tpu.memory_space<vmem>>, vector<32x1xf32>
    %346 = vector.extract_strided_slice %344 {offsets = [0, 0], sizes = [32, 128], strides = [1, 1]} : vector<96x128xf32> to vector<32x128xf32>
    %c2_i32_160 = arith.constant 2 : i32
    %347 = tpu.dynamic_rotate %346 by %c2_i32_160 dim 1 : vector<32x128xf32>, i32 -> vector<32x128xf32>
    %cst_161 = arith.constant 0.000000e+00 : f32
    %348 = vector.shape_cast %21 : vector<1x128xi1> to vector<1x128xi1>
    %349 = vector.broadcast %348 : vector<1x128xi1> to vector<32x128xi1>
    %350 = vector.broadcast %cst_161 : f32 to vector<32x128xf32>
    %351 = arith.select %349, %347, %350 : vector<32x128xi1>, vector<32x128xf32>
    %352 = vector.broadcast %345 : vector<32x1xf32> to vector<32x128xf32>
    %353 = arith.addf %352, %351 : vector<32x128xf32>
    %354 = vector.extract_strided_slice %344 {offsets = [32, 0], sizes = [32, 128], strides = [1, 1]} : vector<96x128xf32> to vector<32x128xf32>
    %c1_i32_162 = arith.constant 1 : i32
    %355 = tpu.dynamic_rotate %354 by %c1_i32_162 dim 1 : vector<32x128xf32>, i32 -> vector<32x128xf32>
    %cst_163 = arith.constant 0.000000e+00 : f32
    %356 = vector.shape_cast %19 : vector<1x128xi1> to vector<1x128xi1>
    %357 = vector.broadcast %356 : vector<1x128xi1> to vector<32x128xi1>
    %358 = vector.broadcast %cst_163 : f32 to vector<32x128xf32>
    %359 = arith.select %357, %355, %358 : vector<32x128xi1>, vector<32x128xf32>
    %360 = arith.addf %353, %359 : vector<32x128xf32>
    %361 = vector.extract_strided_slice %344 {offsets = [64, 0], sizes = [32, 128], strides = [1, 1]} : vector<96x128xf32> to vector<32x128xf32>
    %362 = arith.addf %360, %361 : vector<32x128xf32>
    %cst_164 = arith.constant 0.000000e+00 : f32
    %363 = vector.broadcast %cst_164 : f32 to vector<32x128xf32>
    %364 = arith.maximumf %362, %363 : vector<32x128xf32>
    %c9_165 = arith.constant 9 : index
    %c0_166 = arith.constant 0 : index
    %c0_167 = arith.constant 0 : index
    %365 = vector.load %arg4[%c9_165, %c0_166, %c0_167] : memref<12x32x32xbf16, #tpu.memory_space<vmem>>, vector<1x32x32xbf16>
    %366 = vector.shape_cast %365 : vector<1x32x32xbf16> to vector<32x32xbf16>
    %367 = arith.truncf %364 : vector<32x128xf32> to vector<32x128xbf16>
    %cst_168 = arith.constant dense<0.000000e+00> : vector<32x128xf32>
    %368 = tpu.matmul %366, %367, %cst_168 {dimension_numbers = #tpu.dot_dimension_numbers<[1], [0], [0], [1], [0, 0, 1, 1], [], []>} : vector<32x32xbf16>, vector<32x128xbf16>, vector<32x128xf32> -> vector<32x128xf32>
    %c0_169 = arith.constant 0 : index
    %c9_170 = arith.constant 9 : index
    %369 = vector.load %arg5[%c0_169, %c9_170] : memref<32x12xf32, #tpu.memory_space<vmem>>, vector<32x1xf32>
    %370 = vector.broadcast %369 : vector<32x1xf32> to vector<32x128xf32>
    %371 = arith.addf %368, %370 : vector<32x128xf32>
    %372 = arith.addf %340, %371 : vector<32x128xf32>
    %c10 = arith.constant 10 : index
    %c0_171 = arith.constant 0 : index
    %c0_172 = arith.constant 0 : index
    %373 = vector.load %arg2[%c10, %c0_171, %c0_172] : memref<12x96x32xbf16, #tpu.memory_space<vmem>>, vector<1x96x32xbf16>
    %374 = vector.shape_cast %373 : vector<1x96x32xbf16> to vector<96x32xbf16>
    %375 = arith.truncf %372 : vector<32x128xf32> to vector<32x128xbf16>
    %cst_173 = arith.constant dense<0.000000e+00> : vector<96x128xf32>
    %376 = tpu.matmul %374, %375, %cst_173 {dimension_numbers = #tpu.dot_dimension_numbers<[1], [0], [0], [1], [0, 0, 1, 1], [], []>} : vector<96x32xbf16>, vector<32x128xbf16>, vector<96x128xf32> -> vector<96x128xf32>
    %c0_174 = arith.constant 0 : index
    %c10_175 = arith.constant 10 : index
    %377 = vector.load %arg3[%c0_174, %c10_175] : memref<32x12xf32, #tpu.memory_space<vmem>>, vector<32x1xf32>
    %378 = vector.extract_strided_slice %376 {offsets = [0, 0], sizes = [32, 128], strides = [1, 1]} : vector<96x128xf32> to vector<32x128xf32>
    %c4_i32_176 = arith.constant 4 : i32
    %379 = tpu.dynamic_rotate %378 by %c4_i32_176 dim 1 : vector<32x128xf32>, i32 -> vector<32x128xf32>
    %cst_177 = arith.constant 0.000000e+00 : f32
    %380 = vector.shape_cast %23 : vector<1x128xi1> to vector<1x128xi1>
    %381 = vector.broadcast %380 : vector<1x128xi1> to vector<32x128xi1>
    %382 = vector.broadcast %cst_177 : f32 to vector<32x128xf32>
    %383 = arith.select %381, %379, %382 : vector<32x128xi1>, vector<32x128xf32>
    %384 = vector.broadcast %377 : vector<32x1xf32> to vector<32x128xf32>
    %385 = arith.addf %384, %383 : vector<32x128xf32>
    %386 = vector.extract_strided_slice %376 {offsets = [32, 0], sizes = [32, 128], strides = [1, 1]} : vector<96x128xf32> to vector<32x128xf32>
    %c2_i32_178 = arith.constant 2 : i32
    %387 = tpu.dynamic_rotate %386 by %c2_i32_178 dim 1 : vector<32x128xf32>, i32 -> vector<32x128xf32>
    %cst_179 = arith.constant 0.000000e+00 : f32
    %388 = vector.shape_cast %21 : vector<1x128xi1> to vector<1x128xi1>
    %389 = vector.broadcast %388 : vector<1x128xi1> to vector<32x128xi1>
    %390 = vector.broadcast %cst_179 : f32 to vector<32x128xf32>
    %391 = arith.select %389, %387, %390 : vector<32x128xi1>, vector<32x128xf32>
    %392 = arith.addf %385, %391 : vector<32x128xf32>
    %393 = vector.extract_strided_slice %376 {offsets = [64, 0], sizes = [32, 128], strides = [1, 1]} : vector<96x128xf32> to vector<32x128xf32>
    %394 = arith.addf %392, %393 : vector<32x128xf32>
    %cst_180 = arith.constant 0.000000e+00 : f32
    %395 = vector.broadcast %cst_180 : f32 to vector<32x128xf32>
    %396 = arith.maximumf %394, %395 : vector<32x128xf32>
    %c10_181 = arith.constant 10 : index
    %c0_182 = arith.constant 0 : index
    %c0_183 = arith.constant 0 : index
    %397 = vector.load %arg4[%c10_181, %c0_182, %c0_183] : memref<12x32x32xbf16, #tpu.memory_space<vmem>>, vector<1x32x32xbf16>
    %398 = vector.shape_cast %397 : vector<1x32x32xbf16> to vector<32x32xbf16>
    %399 = arith.truncf %396 : vector<32x128xf32> to vector<32x128xbf16>
    %cst_184 = arith.constant dense<0.000000e+00> : vector<32x128xf32>
    %400 = tpu.matmul %398, %399, %cst_184 {dimension_numbers = #tpu.dot_dimension_numbers<[1], [0], [0], [1], [0, 0, 1, 1], [], []>} : vector<32x32xbf16>, vector<32x128xbf16>, vector<32x128xf32> -> vector<32x128xf32>
    %c0_185 = arith.constant 0 : index
    %c10_186 = arith.constant 10 : index
    %401 = vector.load %arg5[%c0_185, %c10_186] : memref<32x12xf32, #tpu.memory_space<vmem>>, vector<32x1xf32>
    %402 = vector.broadcast %401 : vector<32x1xf32> to vector<32x128xf32>
    %403 = arith.addf %400, %402 : vector<32x128xf32>
    %404 = arith.addf %372, %403 : vector<32x128xf32>
    %c11 = arith.constant 11 : index
    %c0_187 = arith.constant 0 : index
    %c0_188 = arith.constant 0 : index
    %405 = vector.load %arg2[%c11, %c0_187, %c0_188] : memref<12x96x32xbf16, #tpu.memory_space<vmem>>, vector<1x96x32xbf16>
    %406 = vector.shape_cast %405 : vector<1x96x32xbf16> to vector<96x32xbf16>
    %407 = arith.truncf %404 : vector<32x128xf32> to vector<32x128xbf16>
    %cst_189 = arith.constant dense<0.000000e+00> : vector<96x128xf32>
    %408 = tpu.matmul %406, %407, %cst_189 {dimension_numbers = #tpu.dot_dimension_numbers<[1], [0], [0], [1], [0, 0, 1, 1], [], []>} : vector<96x32xbf16>, vector<32x128xbf16>, vector<96x128xf32> -> vector<96x128xf32>
    %c0_190 = arith.constant 0 : index
    %c11_191 = arith.constant 11 : index
    %409 = vector.load %arg3[%c0_190, %c11_191] : memref<32x12xf32, #tpu.memory_space<vmem>>, vector<32x1xf32>
    %410 = vector.extract_strided_slice %408 {offsets = [0, 0], sizes = [32, 128], strides = [1, 1]} : vector<96x128xf32> to vector<32x128xf32>
    %c8_i32_192 = arith.constant 8 : i32
    %411 = tpu.dynamic_rotate %410 by %c8_i32_192 dim 1 : vector<32x128xf32>, i32 -> vector<32x128xf32>
    %cst_193 = arith.constant 0.000000e+00 : f32
    %412 = vector.shape_cast %25 : vector<1x128xi1> to vector<1x128xi1>
    %413 = vector.broadcast %412 : vector<1x128xi1> to vector<32x128xi1>
    %414 = vector.broadcast %cst_193 : f32 to vector<32x128xf32>
    %415 = arith.select %413, %411, %414 : vector<32x128xi1>, vector<32x128xf32>
    %416 = vector.broadcast %409 : vector<32x1xf32> to vector<32x128xf32>
    %417 = arith.addf %416, %415 : vector<32x128xf32>
    %418 = vector.extract_strided_slice %408 {offsets = [32, 0], sizes = [32, 128], strides = [1, 1]} : vector<96x128xf32> to vector<32x128xf32>
    %c4_i32_194 = arith.constant 4 : i32
    %419 = tpu.dynamic_rotate %418 by %c4_i32_194 dim 1 : vector<32x128xf32>, i32 -> vector<32x128xf32>
    %cst_195 = arith.constant 0.000000e+00 : f32
    %420 = vector.shape_cast %23 : vector<1x128xi1> to vector<1x128xi1>
    %421 = vector.broadcast %420 : vector<1x128xi1> to vector<32x128xi1>
    %422 = vector.broadcast %cst_195 : f32 to vector<32x128xf32>
    %423 = arith.select %421, %419, %422 : vector<32x128xi1>, vector<32x128xf32>
    %424 = arith.addf %417, %423 : vector<32x128xf32>
    %425 = vector.extract_strided_slice %408 {offsets = [64, 0], sizes = [32, 128], strides = [1, 1]} : vector<96x128xf32> to vector<32x128xf32>
    %426 = arith.addf %424, %425 : vector<32x128xf32>
    %cst_196 = arith.constant 0.000000e+00 : f32
    %427 = vector.broadcast %cst_196 : f32 to vector<32x128xf32>
    %428 = arith.maximumf %426, %427 : vector<32x128xf32>
    %c11_197 = arith.constant 11 : index
    %c0_198 = arith.constant 0 : index
    %c0_199 = arith.constant 0 : index
    %429 = vector.load %arg4[%c11_197, %c0_198, %c0_199] : memref<12x32x32xbf16, #tpu.memory_space<vmem>>, vector<1x32x32xbf16>
    %430 = vector.shape_cast %429 : vector<1x32x32xbf16> to vector<32x32xbf16>
    %431 = arith.truncf %428 : vector<32x128xf32> to vector<32x128xbf16>
    %cst_200 = arith.constant dense<0.000000e+00> : vector<32x128xf32>
    %432 = tpu.matmul %430, %431, %cst_200 {dimension_numbers = #tpu.dot_dimension_numbers<[1], [0], [0], [1], [0, 0, 1, 1], [], []>} : vector<32x32xbf16>, vector<32x128xbf16>, vector<32x128xf32> -> vector<32x128xf32>
    %c0_201 = arith.constant 0 : index
    %c11_202 = arith.constant 11 : index
    %433 = vector.load %arg5[%c0_201, %c11_202] : memref<32x12xf32, #tpu.memory_space<vmem>>, vector<32x1xf32>
    %434 = vector.broadcast %433 : vector<32x1xf32> to vector<32x128xf32>
    %435 = arith.addf %432, %434 : vector<32x128xf32>
    %436 = arith.addf %404, %435 : vector<32x128xf32>
    %c0_203 = arith.constant 0 : index
    %c0_204 = arith.constant 0 : index
    %437 = vector.load %arg6[%c0_203, %c0_204] : memref<8x32xbf16, #tpu.memory_space<vmem>>, vector<8x32xbf16>
    %438 = arith.truncf %436 : vector<32x128xf32> to vector<32x128xbf16>
    %cst_205 = arith.constant dense<0.000000e+00> : vector<8x128xf32>
    %439 = tpu.matmul %437, %438, %cst_205 {dimension_numbers = #tpu.dot_dimension_numbers<[1], [0], [0], [1], [0, 0, 1, 1], [], []>} : vector<8x32xbf16>, vector<32x128xbf16>, vector<8x128xf32> -> vector<8x128xf32>
    %c0_206 = arith.constant 0 : index
    %c0_207 = arith.constant 0 : index
    %440 = vector.load %arg7[%c0_206, %c0_207] : memref<8x1xf32, #tpu.memory_space<vmem>>, vector<8x1xf32>
    %441 = vector.broadcast %440 : vector<8x1xf32> to vector<8x128xf32>
    %442 = arith.addf %439, %441 : vector<8x128xf32>
    %c0_208 = arith.constant 0 : index
    %c0_209 = arith.constant 0 : index
    %443 = vector.load %arg8[%c0_208, %c0_209] : memref<8x128xf32, #tpu.memory_space<vmem>>, vector<8x128xf32>
    tpu.vector_store %arg8[%c0_208, %c0_209], %442 {strides = array<i32>} : memref<8x128xf32, #tpu.memory_space<vmem>>, vector<8x128xf32>,
    return
  }
  func.func @transform_0(%arg0: i32) -> (i32, i32) {
    %c0_i32 = arith.constant 0 : i32
    %c0_i32_0 = arith.constant 0 : i32
    return %c0_i32, %arg0 : i32, i32
  }
  func.func @transform_1(%arg0: i32) -> (i32, i32, i32) {
    %c0_i32 = arith.constant 0 : i32
    %c0_i32_0 = arith.constant 0 : i32
    %c0_i32_1 = arith.constant 0 : i32
    %c0_i32_2 = arith.constant 0 : i32
    return %c0_i32, %c0_i32_0, %c0_i32_1 : i32, i32, i32
  }
  func.func @transform_2(%arg0: i32) -> (i32, i32) {
    %c0_i32 = arith.constant 0 : i32
    %c0_i32_0 = arith.constant 0 : i32
    %c0_i32_1 = arith.constant 0 : i32
    return %c0_i32, %c0_i32_0 : i32, i32
  }
  func.func @transform_3(%arg0: i32) -> (i32, i32, i32) {
    %c0_i32 = arith.constant 0 : i32
    %c0_i32_0 = arith.constant 0 : i32
    %c0_i32_1 = arith.constant 0 : i32
    %c0_i32_2 = arith.constant 0 : i32
    return %c0_i32, %c0_i32_0, %c0_i32_1 : i32, i32, i32
  }
  func.func @transform_4(%arg0: i32) -> (i32, i32) {
    %c0_i32 = arith.constant 0 : i32
    %c0_i32_0 = arith.constant 0 : i32
    %c0_i32_1 = arith.constant 0 : i32
    return %c0_i32, %c0_i32_0 : i32, i32
  }
  func.func @transform_5(%arg0: i32) -> (i32, i32) {
    %c0_i32 = arith.constant 0 : i32
    %c0_i32_0 = arith.constant 0 : i32
    %c0_i32_1 = arith.constant 0 : i32
    return %c0_i32, %c0_i32_0 : i32, i32
  }
  func.func @transform_6(%arg0: i32) -> (i32, i32) {
    %c0_i32 = arith.constant 0 : i32
    %c0_i32_0 = arith.constant 0 : i32
    %c0_i32_1 = arith.constant 0 : i32
    return %c0_i32, %c0_i32_0 : i32, i32
  }
  func.func @transform_7(%arg0: i32) -> (i32, i32) {
    %c0_i32 = arith.constant 0 : i32
    %c0_i32_0 = arith.constant 0 : i32
    return %c0_i32, %arg0 : i32, i32
  }
}

</mosaic_0001>

<llo_original>
// kernel: _lambda_.1
$region0: #{_lambda_.1}
  #allocation0 [shape = 'u32[]', space=smem, size = 0x4, offset = 0x4, fixed_abs, tag = 'smem constant byte address 0x4 - core index']
  #allocation1 [shape = 'u32[144,128]{1,0:T(1,128)}', space=vmem, size = 0x12000, scoped, tag = 'internal scratch']
  %s0 = inlined_call_operand.vmem [shape: f32[32,128], index: 0, kind: input, shape index: {}]
  %s1 = inlined_call_operand.vmem [shape: bf16[12,96,32], index: 1, kind: input, shape index: {}]
  %s2 = inlined_call_operand.vmem [shape: f32[32,12], index: 2, kind: input, shape index: {}]
  %s3 = inlined_call_operand.vmem [shape: bf16[12,32,32], index: 3, kind: input, shape index: {}]
  %s4 = inlined_call_operand.vmem [shape: f32[32,12], index: 4, kind: input, shape index: {}]
  %s5 = inlined_call_operand.vmem [shape: bf16[8,32], index: 5, kind: input, shape index: {}]
  %s6 = inlined_call_operand.vmem [shape: f32[8,1], index: 6, kind: input, shape index: {}]
  %s7 = inlined_call_operand.vmem [shape: f32[8,128], index: 7, kind: output, shape index: {}]
  %s8 = sld [smem:[#allocation0]]
  $region38: #{_lambda_.1} parent=0
    _
  %s10 = ssub.s32 1, %s8
  %s11 = scalar_select 0, %s10, %s8
  // Predicated region
  $region2: #{_lambda_.1} parent=0 // pred_check
    _
  $region3: #{_lambda_.1} parent=0 // pred_check_branch
    %13 = sbr.rel (0) target = $region5
  $region4: #{_lambda_.1} parent=0 // pred_region
    _
  $region5: #{_lambda_.1} parent=0 // pred_fallthru
    _
  // Predicated region
  $region6: #{_lambda_.1} parent=0 // pred_check
    _
  $region7: #{_lambda_.1} parent=0 // pred_check_branch
    %15 = sbr.rel (0) target = $region9
  $region8: #{_lambda_.1} parent=0 // pred_region
    _
  $region9: #{_lambda_.1} parent=0 // pred_fallthru
    _
  // Predicated region
  $region10: #{_lambda_.1} parent=0 // pred_check
    _
  $region11: #{_lambda_.1} parent=0 // pred_check_branch
    %17 = sbr.rel (0) target = $region13
  $region12: #{_lambda_.1} parent=0 // pred_region
    _
  $region13: #{_lambda_.1} parent=0 // pred_fallthru
    _
  // Predicated region
  $region14: #{_lambda_.1} parent=0 // pred_check
    _
  $region15: #{_lambda_.1} parent=0 // pred_check_branch
    %19 = sbr.rel (0) target = $region17
  $region16: #{_lambda_.1} parent=0 // pred_region
    _
  $region17: #{_lambda_.1} parent=0 // pred_fallthru
    _
  // Predicated region
  $region18: #{_lambda_.1} parent=0 // pred_check
    _
  $region19: #{_lambda_.1} parent=0 // pred_check_branch
    %21 = sbr.rel (0) target = $region21
  $region20: #{_lambda_.1} parent=0 // pred_region
    _
  $region21: #{_lambda_.1} parent=0 // pred_fallthru
    _
  // Predicated region
  $region22: #{_lambda_.1} parent=0 // pred_check
    _
  $region23: #{_lambda_.1} parent=0 // pred_check_branch
    %23 = sbr.rel (0) target = $region25
  $region24: #{_lambda_.1} parent=0 // pred_region
    _
  $region25: #{_lambda_.1} parent=0 // pred_fallthru
    _
  // Predicated region
  $region26: #{_lambda_.1} parent=0 // pred_check
    _
  $region27: #{_lambda_.1} parent=0 // pred_check_branch
    %25 = sbr.rel (0) target = $region29
  $region28: #{_lambda_.1} parent=0 // pred_region
    _
  $region29: #{_lambda_.1} parent=0 // pred_fallthru
    _
  %v27 = vld [vmem:[%s0] sm:$0xff]
  %v28 = vld [vmem:[%s0 + $0x8] sm:$0xff]
  %v29 = vld [vmem:[%s0 + $0x10] sm:$0xff]
  %v30 = vld [vmem:[%s0 + $0x18] sm:$0xff]
  %v31 = vlaneseq
  %v32 = vand.u32 %v31, 127
  %vm33 = vcmp.lt.s32.totalorder %v32, 0
  %v34 = vsub.s32 0, %v32
  %v35 = vsel %vm33, %v34, %v32
  %v36 = vshrl.u32 %v35, 6
  %v37 = vand.u32 %v35, 63
  %v38 = vsub.s32 0, %v37
  %v39 = vsel %vm33, %v38, %v37
  %vm40 = vcmp.ne.s32.totalorder %v39, 0
  %vm41 = vcmp.lt.s32.totalorder %v39, 0
  %vm42 = vmand %vm41, %vm40
  %v43 = vadd.s32 %v39, 64
  %v44 = vsel %vm42, %v43, %v39
  %vm45 = vcmp.ge.s32.totalorder %v44, 1
  %vm46 = vcmp.ge.s32.totalorder %v44, 2
  %vm47 = vcmp.ge.s32.totalorder %v44, 4
  %vm48 = vcmp.ge.s32.totalorder %v44, 8
  %v49 = vld [vmem:[%s1] sm:$0xf]
  %v50 = vld [vmem:[%s1 + $0x4] sm:$0xf]
  %v51 = vld [vmem:[%s1 + $0x8] sm:$0xf]
  %v52 = vld [vmem:[%s1 + $0xc] sm:$0xf]
  %v53 = vld [vmem:[%s1 + $0x10] sm:$0xf]
  %v54 = vld [vmem:[%s1 + $0x14] sm:$0xf]
  %v55 = vld [vmem:[%s1 + $0x18] sm:$0xf]
  %v56 = vld [vmem:[%s1 + $0x1c] sm:$0xf]
  %v57 = vld [vmem:[%s1 + $0x20] sm:$0xf]
  %v58 = vld [vmem:[%s1 + $0x24] sm:$0xf]
  %v59 = vld [vmem:[%s1 + $0x28] sm:$0xf]
  %v60 = vld [vmem:[%s1 + $0x2c] sm:$0xf]
  %v61 = vpack.c.bf16 %v28, %v27
  %v62 = vpack.c.bf16 %v30, %v29
  %v75 = vunpack.c.l.b16 %v49
  %v76 = vunpack.c.l.b16 %v50
  %v77 = vunpack.c.l.b16 %v51
  %v78 = vunpack.c.l.b16 %v52
  %v79 = vunpack.c.l.b16 %v53
  %v80 = vunpack.c.l.b16 %v54
  %v81 = vunpack.c.l.b16 %v55
  %v82 = vunpack.c.l.b16 %v56
  %v83 = vunpack.c.l.b16 %v57
  %v84 = vunpack.c.l.b16 %v58
  %v85 = vunpack.c.l.b16 %v59
  %v86 = vunpack.c.l.b16 %v60
  %v87 = vpack.c.b16 %v76, %v75
  %v88 = vpack.c.b16 %v78, %v77
  %v89 = vpack.c.b16 %v80, %v79
  %v90 = vpack.c.b16 %v82, %v81
  %v91 = vpack.c.b16 %v84, %v83
  %v92 = vpack.c.b16 %v86, %v85
  %vm93 = vcmask 261120
  %v95 = vsel %vm93, %v87, 0
  %v98 = vsel %vm93, %v88, 0
  %v101 = vsel %vm93, %v89, 0
  %v104 = vsel %vm93, %v90, 0
  %v107 = vsel %vm93, %v91, 0
  %v110 = vsel %vm93, %v92, 0
  %112 = vmatprep.subr.bf16.mxu0 0
  %113 = vmatpush1.bf16.msra.mxu0 %v61
  %114 = vmatprep.subr.bf16.mxu0 0
  %115 = vmatpush1.bf16.msra.mxu0 %v62
  %116 = vmatprep.subr.bf16.mxu0 0
  %117 = vmatpush1.bf16.msra.mxu0 0
  %118 = vmatprep.subr.bf16.mxu0 0
  %119 = vmatpush1.bf16.msra.mxu0 0
  %120 = vmatprep.subr.bf16.mxu0 0
  %121 = vmatpush1.bf16.msra.mxu0 0
  %122 = vmatprep.subr.bf16.mxu0 0
  %123 = vmatpush1.bf16.msra.mxu0 0
  %124 = vmatprep.subr.bf16.mxu0 0
  %125 = vmatpush1.bf16.msra.mxu0 0
  %126 = vmatprep.subr.bf16.mxu0 0
  %127 = vmatpush1.bf16.msra.mxu0 0
  %128 = vmatprep.subr.bf16.mxu0 0
  %129 = vmatpush1.bf16.msra.mxu0 0
  %130 = vmatprep.subr.bf16.mxu0 0
  %131 = vmatpush1.bf16.msra.mxu0 0
  %132 = vmatprep.subr.bf16.mxu0 0
  %133 = vmatpush1.bf16.msra.mxu0 0
  %134 = vmatprep.subr.bf16.mxu0 0
  %135 = vmatpush1.bf16.msra.mxu0 0
  %136 = vmatprep.subr.bf16.mxu0 0
  %137 = vmatpush1.bf16.msra.mxu0 0
  %138 = vmatprep.subr.bf16.mxu0 0
  %139 = vmatpush1.bf16.msra.mxu0 0
  %140 = vmatprep.subr.bf16.mxu0 0
  %141 = vmatpush1.bf16.msra.mxu0 0
  %142 = vmatprep.subr.bf16.mxu0 0
  %143 = vmatpush1.bf16.msra.mxu0 0
  %144 = vmatprep.mubr.bf16.mxu0 0
  %145 = vmatmul.mubr.bf16.gmra.mrb[0].mxu0 %v95
  %v146 = vpop.f32.mrb[0].mxu0
  %v147 = vadd.f32 0.0, %v146
  %v148 = vpop.f32.mrb[0].mxu0
  %v149 = vpop.f32.mrb[0].mxu0
  %v150 = vadd.f32 0.0, %v149
  %v151 = vpop.f32.mrb[0].mxu0
  %152 = vmatprep.mubr.bf16.mxu0 0
  %153 = vmatmul.mubr.bf16.gmra.mrb[0].mxu0 %v98
  %v154 = vpop.f32.mrb[0].mxu0
  %v155 = vadd.f32 0.0, %v154
  %v156 = vpop.f32.mrb[0].mxu0
  %v157 = vpop.f32.mrb[0].mxu0
  %v158 = vadd.f32 0.0, %v157
  %v159 = vpop.f32.mrb[0].mxu0
  %160 = vmatprep.mubr.bf16.mxu0 0
  %161 = vmatmul.mubr.bf16.gmra.mrb[0].mxu0 %v101
  %v162 = vpop.f32.mrb[0].mxu0
  %v163 = vadd.f32 0.0, %v162
  %v164 = vpop.f32.mrb[0].mxu0
  %v165 = vpop.f32.mrb[0].mxu0
  %v166 = vadd.f32 0.0, %v165
  %v167 = vpop.f32.mrb[0].mxu0
  %168 = vmatprep.mubr.bf16.mxu0 0
  %169 = vmatmul.mubr.bf16.gmra.mrb[0].mxu0 %v104
  %v170 = vpop.f32.mrb[0].mxu0
  %v171 = vadd.f32 0.0, %v170
  %v172 = vpop.f32.mrb[0].mxu0
  %v173 = vpop.f32.mrb[0].mxu0
  %v174 = vadd.f32 0.0, %v173
  %v175 = vpop.f32.mrb[0].mxu0
  %176 = vmatprep.mubr.bf16.mxu0 0
  %177 = vmatmul.mubr.bf16.gmra.mrb[0].mxu0 %v107
  %v178 = vpop.f32.mrb[0].mxu0
  %v179 = vadd.f32 0.0, %v178
  %v180 = vpop.f32.mrb[0].mxu0
  %v181 = vpop.f32.mrb[0].mxu0
  %v182 = vadd.f32 0.0, %v181
  %v183 = vpop.f32.mrb[0].mxu0
  %184 = vmatprep.mubr.bf16.mxu0 0
  %185 = vmatmul.mubr.bf16.gmra.mrb[0].mxu0 %v110
  %v186 = vpop.f32.mrb[0].mxu0
  %v187 = vadd.f32 0.0, %v186
  %v188 = vpop.f32.mrb[0].mxu0
  %v189 = vpop.f32.mrb[0].mxu0
  %v190 = vadd.f32 0.0, %v189
  %v191 = vpop.f32.mrb[0].mxu0
  %192 = vdwg.mxu0
  %v193 = vld [vmem:[%s2] sm:$0xff]
  %v194 = vld [vmem:[%s2 + $0x8] sm:$0xff]
  %v195 = vld [vmem:[%s2 + $0x10] sm:$0xff]
  %v196 = vld [vmem:[%s2 + $0x18] sm:$0xff]
  %197 = vrot.lane.b32.xlu0 %v147, 2
  %v198 = vpop.permute.xlu0 %197
  %199 = vrot.lane.b32.xlu0 %v150, 2
  %v200 = vpop.permute.xlu0 %199
  %201 = vrot.lane.b32.xlu0 %v155, 2
  %v202 = vpop.permute.xlu0 %201
  %203 = vrot.lane.b32.xlu0 %v158, 2
  %v204 = vpop.permute.xlu0 %203
  %v205 = vsel %vm46, 1, 0
  %vm206 = vcmp.eq.s32.totalorder %v205, 1
  %v207 = vsel %vm206, %v198, 0.0
  %v208 = vsel %vm206, %v200, 0.0
  %v209 = vsel %vm206, %v202, 0.0
  %v210 = vsel %vm206, %v204, 0.0
  %212 = vset.pattern.permute.xlu0 0
  %213 = vperm.xlu0 %212, %v193
  %v214 = vpop.permute.xlu0 %213
  %217 = vset.pattern.permute.xlu0 0
  %218 = vperm.xlu0 %217, %v194
  %v219 = vpop.permute.xlu0 %218
  %222 = vset.pattern.permute.xlu0 0
  %223 = vperm.xlu0 %222, %v195
  %v224 = vpop.permute.xlu0 %223
  %227 = vset.pattern.permute.xlu0 0
  %228 = vperm.xlu0 %227, %v196
  %v229 = vpop.permute.xlu0 %228
  %v231 = vadd.f32 %v214, %v207
  %v232 = vadd.f32 %v219, %v208
  %v233 = vadd.f32 %v224, %v209
  %v234 = vadd.f32 %v229, %v210
  %235 = vrot.lane.b32.xlu0 %v163, 1
  %v236 = vpop.permute.xlu0 %235
  %237 = vrot.lane.b32.xlu0 %v166, 1
  %v238 = vpop.permute.xlu0 %237
  %239 = vrot.lane.b32.xlu0 %v171, 1
  %v240 = vpop.permute.xlu0 %239
  %241 = vrot.lane.b32.xlu0 %v174, 1
  %v242 = vpop.permute.xlu0 %241
  %v243 = vsel %vm45, 1, 0
  %vm244 = vcmp.eq.s32.totalorder %v243, 1
  %v245 = vsel %vm244, %v236, 0.0
  %v246 = vsel %vm244, %v238, 0.0
  %v247 = vsel %vm244, %v240, 0.0
  %v248 = vsel %vm244, %v242, 0.0
  %v249 = vadd.f32 %v231, %v245
  %v250 = vadd.f32 %v232, %v246
  %v251 = vadd.f32 %v233, %v247
  %v252 = vadd.f32 %v234, %v248
  %v253 = vadd.f32 %v249, %v179
  %v254 = vadd.f32 %v250, %v182
  %v255 = vadd.f32 %v251, %v187
  %v256 = vadd.f32 %v252, %v190
  %v257 = vmax.f32 %v253, 0.0
  %v258 = vmax.f32 %v254, 0.0
  %v259 = vmax.f32 %v255, 0.0
  %v260 = vmax.f32 %v256, 0.0
  %v261 = vld [vmem:[%s3] sm:$0xf]
  %v262 = vld [vmem:[%s3 + $0x4] sm:$0xf]
  %v263 = vld [vmem:[%s3 + $0x8] sm:$0xf]
  %v264 = vld [vmem:[%s3 + $0xc] sm:$0xf]
  %v265 = vpack.c.bf16 %v258, %v257
  %v266 = vpack.c.bf16 %v260, %v259
  %v267 = vld [vmem:[%s4] sm:$0xff]
  %v268 = vld [vmem:[%s4 + $0x8] sm:$0xff]
  %v269 = vld [vmem:[%s4 + $0x10] sm:$0xff]
  %v270 = vld [vmem:[%s4 + $0x18] sm:$0xff]
  %272 = vset.pattern.permute.xlu0 0
  %273 = vperm.xlu0 %272, %v267
  %v274 = vpop.permute.xlu0 %273
  %277 = vset.pattern.permute.xlu0 0
  %278 = vperm.xlu0 %277, %v268
  %v279 = vpop.permute.xlu0 %278
  %282 = vset.pattern.permute.xlu0 0
  %283 = vperm.xlu0 %282, %v269
  %v284 = vpop.permute.xlu0 %283
  %287 = vset.pattern.permute.xlu0 0
  %288 = vperm.xlu0 %287, %v270
  %v289 = vpop.permute.xlu0 %288
  %v295 = vunpack.c.l.b16 %v261
  %v296 = vunpack.c.l.b16 %v262
  %v297 = vunpack.c.l.b16 %v263
  %v298 = vunpack.c.l.b16 %v264
  %v299 = vpack.c.b16 %v296, %v295
  %v300 = vpack.c.b16 %v298, %v297
  %v302 = vsel %vm93, %v299, 0
  %v305 = vsel %vm93, %v300, 0
  %307 = vmatprep.subr.bf16.mxu0 0
  %308 = vmatpush1.bf16.msra.mxu0 %v265
  %309 = vmatprep.subr.bf16.mxu0 0
  %310 = vmatpush1.bf16.msra.mxu0 %v266
  %311 = vmatprep.subr.bf16.mxu0 0
  %312 = vmatpush1.bf16.msra.mxu0 0
  %313 = vmatprep.subr.bf16.mxu0 0
  %314 = vmatpush1.bf16.msra.mxu0 0
  %315 = vmatprep.subr.bf16.mxu0 0
  %316 = vmatpush1.bf16.msra.mxu0 0
  %317 = vmatprep.subr.bf16.mxu0 0
  %318 = vmatpush1.bf16.msra.mxu0 0
  %319 = vmatprep.subr.bf16.mxu0 0
  %320 = vmatpush1.bf16.msra.mxu0 0
  %321 = vmatprep.subr.bf16.mxu0 0
  %322 = vmatpush1.bf16.msra.mxu0 0
  %323 = vmatprep.subr.bf16.mxu0 0
  %324 = vmatpush1.bf16.msra.mxu0 0
  %325 = vmatprep.subr.bf16.mxu0 0
  %326 = vmatpush1.bf16.msra.mxu0 0
  %327 = vmatprep.subr.bf16.mxu0 0
  %328 = vmatpush1.bf16.msra.mxu0 0
  %329 = vmatprep.subr.bf16.mxu0 0
  %330 = vmatpush1.bf16.msra.mxu0 0
  %331 = vmatprep.subr.bf16.mxu0 0
  %332 = vmatpush1.bf16.msra.mxu0 0
  %333 = vmatprep.subr.bf16.mxu0 0
  %334 = vmatpush1.bf16.msra.mxu0 0
  %335 = vmatprep.subr.bf16.mxu0 0
  %336 = vmatpush1.bf16.msra.mxu0 0
  %337 = vmatprep.subr.bf16.mxu0 0
  %338 = vmatpush1.bf16.msra.mxu0 0
  %339 = vmatprep.mubr.bf16.mxu0 0
  %340 = vmatmul.mubr.bf16.gmra.mrb[0].mxu0 %v302
  %v341 = vpop.f32.mrb[0].mxu0
  %v342 = vadd.f32 %v274, %v341
  %v343 = vpop.f32.mrb[0].mxu0
  %v344 = vpop.f32.mrb[0].mxu0
  %v345 = vadd.f32 %v279, %v344
  %v346 = vpop.f32.mrb[0].mxu0
  %347 = vmatprep.mubr.bf16.mxu0 0
  %348 = vmatmul.mubr.bf16.gmra.mrb[0].mxu0 %v305
  %v349 = vpop.f32.mrb[0].mxu0
  %v350 = vadd.f32 %v284, %v349
  %v351 = vpop.f32.mrb[0].mxu0
  %v352 = vpop.f32.mrb[0].mxu0
  %v353 = vadd.f32 %v289, %v352
  %v354 = vpop.f32.mrb[0].mxu0
  %355 = vdwg.mxu0
  %v356 = vadd.f32 %v27, %v342
  %v357 = vadd.f32 %v28, %v345
  %v358 = vadd.f32 %v29, %v350
  %v359 = vadd.f32 %v30, %v353
  %s360 = scalar_lea.vmem %s1, 48
  %v361 = vld [vmem:[%s360] sm:$0xf]
  %v362 = vld [vmem:[%s360 + $0x4] sm:$0xf]
  %v363 = vld [vmem:[%s360 + $0x8] sm:$0xf]
  %v364 = vld [vmem:[%s360 + $0xc] sm:$0xf]
  %v365 = vld [vmem:[%s360 + $0x10] sm:$0xf]
  %v366 = vld [vmem:[%s360 + $0x14] sm:$0xf]
  %v367 = vld [vmem:[%s360 + $0x18] sm:$0xf]
  %v368 = vld [vmem:[%s360 + $0x1c] sm:$0xf]
  %v369 = vld [vmem:[%s360 + $0x20] sm:$0xf]
  %v370 = vld [vmem:[%s360 + $0x24] sm:$0xf]
  %v371 = vld [vmem:[%s360 + $0x28] sm:$0xf]
  %v372 = vld [vmem:[%s360 + $0x2c] sm:$0xf]
  %v373 = vpack.c.bf16 %v357, %v356
  %v374 = vpack.c.bf16 %v359, %v358
  %v387 = vunpack.c.l.b16 %v361
  %v388 = vunpack.c.l.b16 %v362
  %v389 = vunpack.c.l.b16 %v363
  %v390 = vunpack.c.l.b16 %v364
  %v391 = vunpack.c.l.b16 %v365
  %v392 = vunpack.c.l.b16 %v366
  %v393 = vunpack.c.l.b16 %v367
  %v394 = vunpack.c.l.b16 %v368
  %v395 = vunpack.c.l.b16 %v369
  %v396 = vunpack.c.l.b16 %v370
  %v397 = vunpack.c.l.b16 %v371
  %v398 = vunpack.c.l.b16 %v372
  %v399 = vpack.c.b16 %v388, %v387
  %v400 = vpack.c.b16 %v390, %v389
  %v401 = vpack.c.b16 %v392, %v391
  %v402 = vpack.c.b16 %v394, %v393
  %v403 = vpack.c.b16 %v396, %v395
  %v404 = vpack.c.b16 %v398, %v397
  %v406 = vsel %vm93, %v399, 0
  %v409 = vsel %vm93, %v400, 0
  %v412 = vsel %vm93, %v401, 0
  %v415 = vsel %vm93, %v402, 0
  %v418 = vsel %vm93, %v403, 0
  %v421 = vsel %vm93, %v404, 0
  %423 = vmatprep.subr.bf16.mxu0 0
  %424 = vmatpush1.bf16.msra.mxu0 %v373
  %425 = vmatprep.subr.bf16.mxu0 0
  %426 = vmatpush1.bf16.msra.mxu0 %v374
  %427 = vmatprep.subr.bf16.mxu0 0
  %428 = vmatpush1.bf16.msra.mxu0 0
  %429 = vmatprep.subr.bf16.mxu0 0
  %430 = vmatpush1.bf16.msra.mxu0 0
  %431 = vmatprep.subr.bf16.mxu0 0
  %432 = vmatpush1.bf16.msra.mxu0 0
  %433 = vmatprep.subr.bf16.mxu0 0
  %434 = vmatpush1.bf16.msra.mxu0 0
  %435 = vmatprep.subr.bf16.mxu0 0
  %436 = vmatpush1.bf16.msra.mxu0 0
  %437 = vmatprep.subr.bf16.mxu0 0
  %438 = vmatpush1.bf16.msra.mxu0 0
  %439 = vmatprep.subr.bf16.mxu0 0
  %440 = vmatpush1.bf16.msra.mxu0 0
  %441 = vmatprep.subr.bf16.mxu0 0
  %442 = vmatpush1.bf16.msra.mxu0 0
  %443 = vmatprep.subr.bf16.mxu0 0
  %444 = vmatpush1.bf16.msra.mxu0 0
  %445 = vmatprep.subr.bf16.mxu0 0
  %446 = vmatpush1.bf16.msra.mxu0 0
  %447 = vmatprep.subr.bf16.mxu0 0
  %448 = vmatpush1.bf16.msra.mxu0 0
  %449 = vmatprep.subr.bf16.mxu0 0
  %450 = vmatpush1.bf16.msra.mxu0 0
  %451 = vmatprep.subr.bf16.mxu0 0
  %452 = vmatpush1.bf16.msra.mxu0 0
  %453 = vmatprep.subr.bf16.mxu0 0
  %454 = vmatpush1.bf16.msra.mxu0 0
  %455 = vmatprep.mubr.bf16.mxu0 0
  %456 = vmatmul.mubr.bf16.gmra.mrb[0].mxu0 %v406
  %v457 = vpop.f32.mrb[0].mxu0
  %v458 = vadd.f32 0.0, %v457
  %v459 = vpop.f32.mrb[0].mxu0
  %v460 = vpop.f32.mrb[0].mxu0
  %v461 = vadd.f32 0.0, %v460
  %v462 = vpop.f32.mrb[0].mxu0
  %463 = vmatprep.mubr.bf16.mxu0 0
  %464 = vmatmul.mubr.bf16.gmra.mrb[0].mxu0 %v409
  %v465 = vpop.f32.mrb[0].mxu0
  %v466 = vadd.f32 0.0, %v465
  %v467 = vpop.f32.mrb[0].mxu0
  %v468 = vpop.f32.mrb[0].mxu0
  %v469 = vadd.f32 0.0, %v468
  %v470 = vpop.f32.mrb[0].mxu0
  %471 = vmatprep.mubr.bf16.mxu0 0
  %472 = vmatmul.mubr.bf16.gmra.mrb[0].mxu0 %v412
  %v473 = vpop.f32.mrb[0].mxu0
  %v474 = vadd.f32 0.0, %v473
  %v475 = vpop.f32.mrb[0].mxu0
  %v476 = vpop.f32.mrb[0].mxu0
  %v477 = vadd.f32 0.0, %v476
  %v478 = vpop.f32.mrb[0].mxu0
  %479 = vmatprep.mubr.bf16.mxu0 0
  %480 = vmatmul.mubr.bf16.gmra.mrb[0].mxu0 %v415
  %v481 = vpop.f32.mrb[0].mxu0
  %v482 = vadd.f32 0.0, %v481
  %v483 = vpop.f32.mrb[0].mxu0
  %v484 = vpop.f32.mrb[0].mxu0
  %v485 = vadd.f32 0.0, %v484
  %v486 = vpop.f32.mrb[0].mxu0
  %487 = vmatprep.mubr.bf16.mxu0 0
  %488 = vmatmul.mubr.bf16.gmra.mrb[0].mxu0 %v418
  %v489 = vpop.f32.mrb[0].mxu0
  %v490 = vadd.f32 0.0, %v489
  %v491 = vpop.f32.mrb[0].mxu0
  %v492 = vpop.f32.mrb[0].mxu0
  %v493 = vadd.f32 0.0, %v492
  %v494 = vpop.f32.mrb[0].mxu0
  %495 = vmatprep.mubr.bf16.mxu0 0
  %496 = vmatmul.mubr.bf16.gmra.mrb[0].mxu0 %v421
  %v497 = vpop.f32.mrb[0].mxu0
  %v498 = vadd.f32 0.0, %v497
  %v499 = vpop.f32.mrb[0].mxu0
  %v500 = vpop.f32.mrb[0].mxu0
  %v501 = vadd.f32 0.0, %v500
  %v502 = vpop.f32.mrb[0].mxu0
  %503 = vdwg.mxu0
  %504 = vrot.lane.b32.xlu0 %v458, 4
  %v505 = vpop.permute.xlu0 %504
  %506 = vrot.lane.b32.xlu0 %v461, 4
  %v507 = vpop.permute.xlu0 %506
  %508 = vrot.lane.b32.xlu0 %v466, 4
  %v509 = vpop.permute.xlu0 %508
  %510 = vrot.lane.b32.xlu0 %v469, 4
  %v511 = vpop.permute.xlu0 %510
  %v512 = vsel %vm47, 1, 0
  %vm513 = vcmp.eq.s32.totalorder %v512, 1
  %v514 = vsel %vm513, %v505, 0.0
  %v515 = vsel %vm513, %v507, 0.0
  %v516 = vsel %vm513, %v509, 0.0
  %v517 = vsel %vm513, %v511, 0.0
  %518 = vset.pattern.permute.xlu0 1
  %519 = vperm.xlu0 %518, %v193
  %v520 = vpop.permute.xlu0 %519
  %522 = vset.pattern.permute.xlu0 1
  %523 = vperm.xlu0 %522, %v194
  %v524 = vpop.permute.xlu0 %523
  %526 = vset.pattern.permute.xlu0 1
  %527 = vperm.xlu0 %526, %v195
  %v528 = vpop.permute.xlu0 %527
  %530 = vset.pattern.permute.xlu0 1
  %531 = vperm.xlu0 %530, %v196
  %v532 = vpop.permute.xlu0 %531
  %v534 = vadd.f32 %v520, %v514
  %v535 = vadd.f32 %v524, %v515
  %v536 = vadd.f32 %v528, %v516
  %v537 = vadd.f32 %v532, %v517
  %538 = vrot.lane.b32.xlu0 %v474, 2
  %v539 = vpop.permute.xlu0 %538
  %540 = vrot.lane.b32.xlu0 %v477, 2
  %v541 = vpop.permute.xlu0 %540
  %542 = vrot.lane.b32.xlu0 %v482, 2
  %v543 = vpop.permute.xlu0 %542
  %544 = vrot.lane.b32.xlu0 %v485, 2
  %v545 = vpop.permute.xlu0 %544
  %v546 = vsel %vm206, %v539, 0.0
  %v547 = vsel %vm206, %v541, 0.0
  %v548 = vsel %vm206, %v543, 0.0
  %v549 = vsel %vm206, %v545, 0.0
  %v550 = vadd.f32 %v534, %v546
  %v551 = vadd.f32 %v535, %v547
  %v552 = vadd.f32 %v536, %v548
  %v553 = vadd.f32 %v537, %v549
  %v554 = vadd.f32 %v550, %v490
  %v555 = vadd.f32 %v551, %v493
  %v556 = vadd.f32 %v552, %v498
  %v557 = vadd.f32 %v553, %v501
  %v558 = vmax.f32 %v554, 0.0
  %v559 = vmax.f32 %v555, 0.0
  %v560 = vmax.f32 %v556, 0.0
  %v561 = vmax.f32 %v557, 0.0
  %s562 = scalar_lea.vmem %s3, 16
  %v563 = vld [vmem:[%s562] sm:$0xf]
  %v564 = vld [vmem:[%s562 + $0x4] sm:$0xf]
  %v565 = vld [vmem:[%s562 + $0x8] sm:$0xf]
  %v566 = vld [vmem:[%s562 + $0xc] sm:$0xf]
  %v567 = vpack.c.bf16 %v559, %v558
  %v568 = vpack.c.bf16 %v561, %v560
  %569 = vset.pattern.permute.xlu0 1
  %570 = vperm.xlu0 %569, %v267
  %v571 = vpop.permute.xlu0 %570
  %573 = vset.pattern.permute.xlu0 1
  %574 = vperm.xlu0 %573, %v268
  %v575 = vpop.permute.xlu0 %574
  %577 = vset.pattern.permute.xlu0 1
  %578 = vperm.xlu0 %577, %v269
  %v579 = vpop.permute.xlu0 %578
  %581 = vset.pattern.permute.xlu0 1
  %582 = vperm.xlu0 %581, %v270
  %v583 = vpop.permute.xlu0 %582
  %v589 = vunpack.c.l.b16 %v563
  %v590 = vunpack.c.l.b16 %v564
  %v591 = vunpack.c.l.b16 %v565
  %v592 = vunpack.c.l.b16 %v566
  %v593 = vpack.c.b16 %v590, %v589
  %v594 = vpack.c.b16 %v592, %v591
  %v596 = vsel %vm93, %v593, 0
  %v599 = vsel %vm93, %v594, 0
  %601 = vmatprep.subr.bf16.mxu0 0
  %602 = vmatpush1.bf16.msra.mxu0 %v567
  %603 = vmatprep.subr.bf16.mxu0 0
  %604 = vmatpush1.bf16.msra.mxu0 %v568
  %605 = vmatprep.subr.bf16.mxu0 0
  %606 = vmatpush1.bf16.msra.mxu0 0
  %607 = vmatprep.subr.bf16.mxu0 0
  %608 = vmatpush1.bf16.msra.mxu0 0
  %609 = vmatprep.subr.bf16.mxu0 0
  %610 = vmatpush1.bf16.msra.mxu0 0
  %611 = vmatprep.subr.bf16.mxu0 0
  %612 = vmatpush1.bf16.msra.mxu0 0
  %613 = vmatprep.subr.bf16.mxu0 0
  %614 = vmatpush1.bf16.msra.mxu0 0
  %615 = vmatprep.subr.bf16.mxu0 0
  %616 = vmatpush1.bf16.msra.mxu0 0
  %617 = vmatprep.subr.bf16.mxu0 0
  %618 = vmatpush1.bf16.msra.mxu0 0
  %619 = vmatprep.subr.bf16.mxu0 0
  %620 = vmatpush1.bf16.msra.mxu0 0
  %621 = vmatprep.subr.bf16.mxu0 0
  %622 = vmatpush1.bf16.msra.mxu0 0
  %623 = vmatprep.subr.bf16.mxu0 0
  %624 = vmatpush1.bf16.msra.mxu0 0
  %625 = vmatprep.subr.bf16.mxu0 0
  %626 = vmatpush1.bf16.msra.mxu0 0
  %627 = vmatprep.subr.bf16.mxu0 0
  %628 = vmatpush1.bf16.msra.mxu0 0
  %629 = vmatprep.subr.bf16.mxu0 0
  %630 = vmatpush1.bf16.msra.mxu0 0
  %631 = vmatprep.subr.bf16.mxu0 0
  %632 = vmatpush1.bf16.msra.mxu0 0
  %633 = vmatprep.mubr.bf16.mxu0 0
  %634 = vmatmul.mubr.bf16.gmra.mrb[0].mxu0 %v596
  %v635 = vpop.f32.mrb[0].mxu0
  %v636 = vadd.f32 %v571, %v635
  %v637 = vpop.f32.mrb[0].mxu0
  %v638 = vpop.f32.mrb[0].mxu0
  %v639 = vadd.f32 %v575, %v638
  %v640 = vpop.f32.mrb[0].mxu0
  %641 = vmatprep.mubr.bf16.mxu0 0
  %642 = vmatmul.mubr.bf16.gmra.mrb[0].mxu0 %v599
  %v643 = vpop.f32.mrb[0].mxu0
  %v644 = vadd.f32 %v579, %v643
  %v645 = vpop.f32.mrb[0].mxu0
  %v646 = vpop.f32.mrb[0].mxu0
  %v647 = vadd.f32 %v583, %v646
  %v648 = vpop.f32.mrb[0].mxu0
  %649 = vdwg.mxu0
  %v650 = vadd.f32 %v356, %v636
  %v651 = vadd.f32 %v357, %v639
  %v652 = vadd.f32 %v358, %v644
  %v653 = vadd.f32 %v359, %v647
  %s654 = scalar_lea.vmem %s1, 96
  %v655 = vld [vmem:[%s654] sm:$0xf]
  %v656 = vld [vmem:[%s654 + $0x4] sm:$0xf]
  %v657 = vld [vmem:[%s654 + $0x8] sm:$0xf]
  %v658 = vld [vmem:[%s654 + $0xc] sm:$0xf]
  %v659 = vld [vmem:[%s654 + $0x10] sm:$0xf]
  %v660 = vld [vmem:[%s654 + $0x14] sm:$0xf]
  %v661 = vld [vmem:[%s654 + $0x18] sm:$0xf]
  %v662 = vld [vmem:[%s654 + $0x1c] sm:$0xf]
  %v663 = vld [vmem:[%s654 + $0x20] sm:$0xf]
  %v664 = vld [vmem:[%s654 + $0x24] sm:$0xf]
  %v665 = vld [vmem:[%s654 + $0x28] sm:$0xf]
  %v666 = vld [vmem:[%s654 + $0x2c] sm:$0xf]
  %v667 = vpack.c.bf16 %v651, %v650
  %v668 = vpack.c.bf16 %v653, %v652
  %v681 = vunpack.c.l.b16 %v655
  %v682 = vunpack.c.l.b16 %v656
  %v683 = vunpack.c.l.b16 %v657
  %v684 = vunpack.c.l.b16 %v658
  %v685 = vunpack.c.l.b16 %v659
  %v686 = vunpack.c.l.b16 %v660
  %v687 = vunpack.c.l.b16 %v661
  %v688 = vunpack.c.l.b16 %v662
  %v689 = vunpack.c.l.b16 %v663
  %v690 = vunpack.c.l.b16 %v664
  %v691 = vunpack.c.l.b16 %v665
  %v692 = vunpack.c.l.b16 %v666
  %v693 = vpack.c.b16 %v682, %v681
  %v694 = vpack.c.b16 %v684, %v683
  %v695 = vpack.c.b16 %v686, %v685
  %v696 = vpack.c.b16 %v688, %v687
  %v697 = vpack.c.b16 %v690, %v689
  %v698 = vpack.c.b16 %v692, %v691
  %v700 = vsel %vm93, %v693, 0
  %v703 = vsel %vm93, %v694, 0
  %v706 = vsel %vm93, %v695, 0
  %v709 = vsel %vm93, %v696, 0
  %v712 = vsel %vm93, %v697, 0
  %v715 = vsel %vm93, %v698, 0
  %717 = vmatprep.subr.bf16.mxu0 0
  %718 = vmatpush1.bf16.msra.mxu0 %v667
  %719 = vmatprep.subr.bf16.mxu0 0
  %720 = vmatpush1.bf16.msra.mxu0 %v668
  %721 = vmatprep.subr.bf16.mxu0 0
  %722 = vmatpush1.bf16.msra.mxu0 0
  %723 = vmatprep.subr.bf16.mxu0 0
  %724 = vmatpush1.bf16.msra.mxu0 0
  %725 = vmatprep.subr.bf16.mxu0 0
  %726 = vmatpush1.bf16.msra.mxu0 0
  %727 = vmatprep.subr.bf16.mxu0 0
  %728 = vmatpush1.bf16.msra.mxu0 0
  %729 = vmatprep.subr.bf16.mxu0 0
  %730 = vmatpush1.bf16.msra.mxu0 0
  %731 = vmatprep.subr.bf16.mxu0 0
  %732 = vmatpush1.bf16.msra.mxu0 0
  %733 = vmatprep.subr.bf16.mxu0 0
  %734 = vmatpush1.bf16.msra.mxu0 0
  %735 = vmatprep.subr.bf16.mxu0 0
  %736 = vmatpush1.bf16.msra.mxu0 0
  %737 = vmatprep.subr.bf16.mxu0 0
  %738 = vmatpush1.bf16.msra.mxu0 0
  %739 = vmatprep.subr.bf16.mxu0 0
  %740 = vmatpush1.bf16.msra.mxu0 0
  %741 = vmatprep.subr.bf16.mxu0 0
  %742 = vmatpush1.bf16.msra.mxu0 0
  %743 = vmatprep.subr.bf16.mxu0 0
  %744 = vmatpush1.bf16.msra.mxu0 0
  %745 = vmatprep.subr.bf16.mxu0 0
  %746 = vmatpush1.bf16.msra.mxu0 0
  %747 = vmatprep.subr.bf16.mxu0 0
  %748 = vmatpush1.bf16.msra.mxu0 0
  %749 = vmatprep.mubr.bf16.mxu0 0
  %750 = vmatmul.mubr.bf16.gmra.mrb[0].mxu0 %v700
  %v751 = vpop.f32.mrb[0].mxu0
  %v752 = vadd.f32 0.0, %v751
  %v753 = vpop.f32.mrb[0].mxu0
  %v754 = vpop.f32.mrb[0].mxu0
  %v755 = vadd.f32 0.0, %v754
  %v756 = vpop.f32.mrb[0].mxu0
  %757 = vmatprep.mubr.bf16.mxu0 0
  %758 = vmatmul.mubr.bf16.gmra.mrb[0].mxu0 %v703
  %v759 = vpop.f32.mrb[0].mxu0
  %v760 = vadd.f32 0.0, %v759
  %v761 = vpop.f32.mrb[0].mxu0
  %v762 = vpop.f32.mrb[0].mxu0
  %v763 = vadd.f32 0.0, %v762
  %v764 = vpop.f32.mrb[0].mxu0
  %765 = vmatprep.mubr.bf16.mxu0 0
  %766 = vmatmul.mubr.bf16.gmra.mrb[0].mxu0 %v706
  %v767 = vpop.f32.mrb[0].mxu0
  %v768 = vadd.f32 0.0, %v767
  %v769 = vpop.f32.mrb[0].mxu0
  %v770 = vpop.f32.mrb[0].mxu0
  %v771 = vadd.f32 0.0, %v770
  %v772 = vpop.f32.mrb[0].mxu0
  %773 = vmatprep.mubr.bf16.mxu0 0
  %774 = vmatmul.mubr.bf16.gmra.mrb[0].mxu0 %v709
  %v775 = vpop.f32.mrb[0].mxu0
  %v776 = vadd.f32 0.0, %v775
  %v777 = vpop.f32.mrb[0].mxu0
  %v778 = vpop.f32.mrb[0].mxu0
  %v779 = vadd.f32 0.0, %v778
  %v780 = vpop.f32.mrb[0].mxu0
  %781 = vmatprep.mubr.bf16.mxu0 0
  %782 = vmatmul.mubr.bf16.gmra.mrb[0].mxu0 %v712
  %v783 = vpop.f32.mrb[0].mxu0
  %v784 = vadd.f32 0.0, %v783
  %v785 = vpop.f32.mrb[0].mxu0
  %v786 = vpop.f32.mrb[0].mxu0
  %v787 = vadd.f32 0.0, %v786
  %v788 = vpop.f32.mrb[0].mxu0
  %789 = vmatprep.mubr.bf16.mxu0 0
  %790 = vmatmul.mubr.bf16.gmra.mrb[0].mxu0 %v715
  %v791 = vpop.f32.mrb[0].mxu0
  %v792 = vadd.f32 0.0, %v791
  %v793 = vpop.f32.mrb[0].mxu0
  %v794 = vpop.f32.mrb[0].mxu0
  %v795 = vadd.f32 0.0, %v794
  %v796 = vpop.f32.mrb[0].mxu0
  %797 = vdwg.mxu0
  %798 = vrot.lane.b32.xlu0 %v752, 8
  %v799 = vpop.permute.xlu0 %798
  %800 = vrot.lane.b32.xlu0 %v755, 8
  %v801 = vpop.permute.xlu0 %800
  %802 = vrot.lane.b32.xlu0 %v760, 8
  %v803 = vpop.permute.xlu0 %802
  %804 = vrot.lane.b32.xlu0 %v763, 8
  %v805 = vpop.permute.xlu0 %804
  %v806 = vsel %vm48, 1, 0
  %vm807 = vcmp.eq.s32.totalorder %v806, 1
  %v808 = vsel %vm807, %v799, 0.0
  %v809 = vsel %vm807, %v801, 0.0
  %v810 = vsel %vm807, %v803, 0.0
  %v811 = vsel %vm807, %v805, 0.0
  %812 = vset.pattern.permute.xlu0 2
  %813 = vperm.xlu0 %812, %v193
  %v814 = vpop.permute.xlu0 %813
  %816 = vset.pattern.permute.xlu0 2
  %817 = vperm.xlu0 %816, %v194
  %v818 = vpop.permute.xlu0 %817
  %820 = vset.pattern.permute.xlu0 2
  %821 = vperm.xlu0 %820, %v195
  %v822 = vpop.permute.xlu0 %821
  %824 = vset.pattern.permute.xlu0 2
  %825 = vperm.xlu0 %824, %v196
  %v826 = vpop.permute.xlu0 %825
  %v828 = vadd.f32 %v814, %v808
  %v829 = vadd.f32 %v818, %v809
  %v830 = vadd.f32 %v822, %v810
  %v831 = vadd.f32 %v826, %v811
  %832 = vrot.lane.b32.xlu0 %v768, 4
  %v833 = vpop.permute.xlu0 %832
  %834 = vrot.lane.b32.xlu0 %v771, 4
  %v835 = vpop.permute.xlu0 %834
  %836 = vrot.lane.b32.xlu0 %v776, 4
  %v837 = vpop.permute.xlu0 %836
  %838 = vrot.lane.b32.xlu0 %v779, 4
  %v839 = vpop.permute.xlu0 %838
  %v840 = vsel %vm513, %v833, 0.0
  %v841 = vsel %vm513, %v835, 0.0
  %v842 = vsel %vm513, %v837, 0.0
  %v843 = vsel %vm513, %v839, 0.0
  %v844 = vadd.f32 %v828, %v840
  %v845 = vadd.f32 %v829, %v841
  %v846 = vadd.f32 %v830, %v842
  %v847 = vadd.f32 %v831, %v843
  %v848 = vadd.f32 %v844, %v784
  %v849 = vadd.f32 %v845, %v787
  %v850 = vadd.f32 %v846, %v792
  %v851 = vadd.f32 %v847, %v795
  %v852 = vmax.f32 %v848, 0.0
  %v853 = vmax.f32 %v849, 0.0
  %v854 = vmax.f32 %v850, 0.0
  %v855 = vmax.f32 %v851, 0.0
  %s856 = scalar_lea.vmem %s3, 32
  %v857 = vld [vmem:[%s856] sm:$0xf]
  %v858 = vld [vmem:[%s856 + $0x4] sm:$0xf]
  %v859 = vld [vmem:[%s856 + $0x8] sm:$0xf]
  %v860 = vld [vmem:[%s856 + $0xc] sm:$0xf]
  %v861 = vpack.c.bf16 %v853, %v852
  %v862 = vpack.c.bf16 %v855, %v854
  %863 = vset.pattern.permute.xlu0 2
  %864 = vperm.xlu0 %863, %v267
  %v865 = vpop.permute.xlu0 %864
  %867 = vset.pattern.permute.xlu0 2
  %868 = vperm.xlu0 %867, %v268
  %v869 = vpop.permute.xlu0 %868
  %871 = vset.pattern.permute.xlu0 2
  %872 = vperm.xlu0 %871, %v269
  %v873 = vpop.permute.xlu0 %872
  %875 = vset.pattern.permute.xlu0 2
  %876 = vperm.xlu0 %875, %v270
  %v877 = vpop.permute.xlu0 %876
  %v883 = vunpack.c.l.b16 %v857
  %v884 = vunpack.c.l.b16 %v858
  %v885 = vunpack.c.l.b16 %v859
  %v886 = vunpack.c.l.b16 %v860
  %v887 = vpack.c.b16 %v884, %v883
  %v888 = vpack.c.b16 %v886, %v885
  %v890 = vsel %vm93, %v887, 0
  %v893 = vsel %vm93, %v888, 0
  %895 = vmatprep.subr.bf16.mxu0 0
  %896 = vmatpush1.bf16.msra.mxu0 %v861
  %897 = vmatprep.subr.bf16.mxu0 0
  %898 = vmatpush1.bf16.msra.mxu0 %v862
  %899 = vmatprep.subr.bf16.mxu0 0
  %900 = vmatpush1.bf16.msra.mxu0 0
  %901 = vmatprep.subr.bf16.mxu0 0
  %902 = vmatpush1.bf16.msra.mxu0 0
  %903 = vmatprep.subr.bf16.mxu0 0
  %904 = vmatpush1.bf16.msra.mxu0 0
  %905 = vmatprep.subr.bf16.mxu0 0
  %906 = vmatpush1.bf16.msra.mxu0 0
  %907 = vmatprep.subr.bf16.mxu0 0
  %908 = vmatpush1.bf16.msra.mxu0 0
  %909 = vmatprep.subr.bf16.mxu0 0
  %910 = vmatpush1.bf16.msra.mxu0 0
  %911 = vmatprep.subr.bf16.mxu0 0
  %912 = vmatpush1.bf16.msra.mxu0 0
  %913 = vmatprep.subr.bf16.mxu0 0
  %914 = vmatpush1.bf16.msra.mxu0 0
  %915 = vmatprep.subr.bf16.mxu0 0
  %916 = vmatpush1.bf16.msra.mxu0 0
  %917 = vmatprep.subr.bf16.mxu0 0
  %918 = vmatpush1.bf16.msra.mxu0 0
  %919 = vmatprep.subr.bf16.mxu0 0
  %920 = vmatpush1.bf16.msra.mxu0 0
  %921 = vmatprep.subr.bf16.mxu0 0
  %922 = vmatpush1.bf16.msra.mxu0 0
  %923 = vmatprep.subr.bf16.mxu0 0
  %924 = vmatpush1.bf16.msra.mxu0 0
  %925 = vmatprep.subr.bf16.mxu0 0
  %926 = vmatpush1.bf16.msra.mxu0 0
  %927 = vmatprep.mubr.bf16.mxu0 0
  %928 = vmatmul.mubr.bf16.gmra.mrb[0].mxu0 %v890
  %v929 = vpop.f32.mrb[0].mxu0
  %v930 = vadd.f32 %v865, %v929
  %v931 = vpop.f32.mrb[0].mxu0
  %v932 = vpop.f32.mrb[0].mxu0
  %v933 = vadd.f32 %v869, %v932
  %v934 = vpop.f32.mrb[0].mxu0
  %935 = vmatprep.mubr.bf16.mxu0 0
  %936 = vmatmul.mubr.bf16.gmra.mrb[0].mxu0 %v893
  %v937 = vpop.f32.mrb[0].mxu0
  %v938 = vadd.f32 %v873, %v937
  %v939 = vpop.f32.mrb[0].mxu0
  %v940 = vpop.f32.mrb[0].mxu0
  %v941 = vadd.f32 %v877, %v940
  %v942 = vpop.f32.mrb[0].mxu0
  %943 = vdwg.mxu0
  %v944 = vadd.f32 %v650, %v930
  %v945 = vadd.f32 %v651, %v933
  %v946 = vadd.f32 %v652, %v938
  %v947 = vadd.f32 %v653, %v941
  %v948 = vmax.f32 %v944, %v945
  %v949 = vmax.f32 %v946, %v947
  %v950 = vmax.f32 %v948, %v949
  %v951 = vrot.slane %v950, 4
  %v952 = vmax.f32 %v950, %v951
  %v953 = vrot.slane %v952, 2
  %v954 = vmax.f32 %v952, %v953
  %v955 = vrot.slane %v954, 1
  %v956 = vmax.f32 %v954, %v955
  %v957 = vsub.f32 %v944, %v956
  %v958 = vsub.f32 %v945, %v956
  %v959 = vsub.f32 %v946, %v956
  %v960 = vsub.f32 %v947, %v956
  %v961 = vmul.f32 %v957, 1.442695
  %v962 = vpow.pop %v961
  %v963 = vmul.f32 %v958, 1.442695
  %v964 = vpow.pop %v963
  %v965 = vmul.f32 %v959, 1.442695
  %v966 = vpow.pop %v965
  %v967 = vmul.f32 %v960, 1.442695
  %v968 = vpow.pop %v967
  %v969 = vadd.f32 %v962, %v964
  %v970 = vadd.f32 %v969, %v966
  %v971 = vadd.f32 %v970, %v968
  %v972 = vrot.slane %v971, 4
  %v973 = vadd.f32 %v971, %v972
  %v974 = vrot.slane %v973, 2
  %v975 = vadd.f32 %v973, %v974
  %v976 = vrot.slane %v975, 1
  %v977 = vadd.f32 %v975, %v976
  %v978 = vrcp.pop %v977
  %v979 = vmul.f32 %v962, %v978
  %v980 = vmul.f32 %v964, %v978
  %v981 = vmul.f32 %v966, %v978
  %v982 = vmul.f32 %v968, %v978
  %s983 = scalar_lea.vmem %s1, 144
  %v984 = vld [vmem:[%s983] sm:$0xf]
  %v985 = vld [vmem:[%s983 + $0x4] sm:$0xf]
  %v986 = vld [vmem:[%s983 + $0x8] sm:$0xf]
  %v987 = vld [vmem:[%s983 + $0xc] sm:$0xf]
  %v988 = vld [vmem:[%s983 + $0x10] sm:$0xf]
  %v989 = vld [vmem:[%s983 + $0x14] sm:$0xf]
  %v990 = vld [vmem:[%s983 + $0x18] sm:$0xf]
  %v991 = vld [vmem:[%s983 + $0x1c] sm:$0xf]
  %v992 = vld [vmem:[%s983 + $0x20] sm:$0xf]
  %v993 = vld [vmem:[%s983 + $0x24] sm:$0xf]
  %v994 = vld [vmem:[%s983 + $0x28] sm:$0xf]
  %v995 = vld [vmem:[%s983 + $0x2c] sm:$0xf]
  %v996 = vpack.c.bf16 %v980, %v979
  %v997 = vpack.c.bf16 %v982, %v981
  %v1010 = vunpack.c.l.b16 %v984
  %v1011 = vunpack.c.l.b16 %v985
  %v1012 = vunpack.c.l.b16 %v986
  %v1013 = vunpack.c.l.b16 %v987
  %v1014 = vunpack.c.l.b16 %v988
  %v1015 = vunpack.c.l.b16 %v989
  %v1016 = vunpack.c.l.b16 %v990
  %v1017 = vunpack.c.l.b16 %v991
  %v1018 = vunpack.c.l.b16 %v992
  %v1019 = vunpack.c.l.b16 %v993
  %v1020 = vunpack.c.l.b16 %v994
  %v1021 = vunpack.c.l.b16 %v995
  %v1022 = vpack.c.b16 %v1011, %v1010
  %v1023 = vpack.c.b16 %v1013, %v1012
  %v1024 = vpack.c.b16 %v1015, %v1014
  %v1025 = vpack.c.b16 %v1017, %v1016
  %v1026 = vpack.c.b16 %v1019, %v1018
  %v1027 = vpack.c.b16 %v1021, %v1020
  %v1029 = vsel %vm93, %v1022, 0
  %v1032 = vsel %vm93, %v1023, 0
  %v1035 = vsel %vm93, %v1024, 0
  %v1038 = vsel %vm93, %v1025, 0
  %v1041 = vsel %vm93, %v1026, 0
  %v1044 = vsel %vm93, %v1027, 0
  %1046 = vmatprep.subr.bf16.mxu0 0
  %1047 = vmatpush1.bf16.msra.mxu0 %v996
  %1048 = vmatprep.subr.bf16.mxu0 0
  %1049 = vmatpush1.bf16.msra.mxu0 %v997
  %1050 = vmatprep.subr.bf16.mxu0 0
  %1051 = vmatpush1.bf16.msra.mxu0 0
  %1052 = vmatprep.subr.bf16.mxu0 0
  %1053 = vmatpush1.bf16.msra.mxu0 0
  %1054 = vmatprep.subr.bf16.mxu0 0
  %1055 = vmatpush1.bf16.msra.mxu0 0
  %1056 = vmatprep.subr.bf16.mxu0 0
  %1057 = vmatpush1.bf16.msra.mxu0 0
  %1058 = vmatprep.subr.bf16.mxu0 0
  %1059 = vmatpush1.bf16.msra.mxu0 0
  %1060 = vmatprep.subr.bf16.mxu0 0
  %1061 = vmatpush1.bf16.msra.mxu0 0
  %1062 = vmatprep.subr.bf16.mxu0 0
  %1063 = vmatpush1.bf16.msra.mxu0 0
  %1064 = vmatprep.subr.bf16.mxu0 0
  %1065 = vmatpush1.bf16.msra.mxu0 0
  %1066 = vmatprep.subr.bf16.mxu0 0
  %1067 = vmatpush1.bf16.msra.mxu0 0
  %1068 = vmatprep.subr.bf16.mxu0 0
  %1069 = vmatpush1.bf16.msra.mxu0 0
  %1070 = vmatprep.subr.bf16.mxu0 0
  %1071 = vmatpush1.bf16.msra.mxu0 0
  %1072 = vmatprep.subr.bf16.mxu0 0
  %1073 = vmatpush1.bf16.msra.mxu0 0
  %1074 = vmatprep.subr.bf16.mxu0 0
  %1075 = vmatpush1.bf16.msra.mxu0 0
  %1076 = vmatprep.subr.bf16.mxu0 0
  %1077 = vmatpush1.bf16.msra.mxu0 0
  %1078 = vmatprep.mubr.bf16.mxu0 0
  %1079 = vmatmul.mubr.bf16.gmra.mrb[0].mxu0 %v1029
  %v1080 = vpop.f32.mrb[0].mxu0
  %v1081 = vadd.f32 0.0, %v1080
  %v1082 = vpop.f32.mrb[0].mxu0
  %v1083 = vpop.f32.mrb[0].mxu0
  %v1084 = vadd.f32 0.0, %v1083
  %v1085 = vpop.f32.mrb[0].mxu0
  %1086 = vmatprep.mubr.bf16.mxu0 0
  %1087 = vmatmul.mubr.bf16.gmra.mrb[0].mxu0 %v1032
  %v1088 = vpop.f32.mrb[0].mxu0
  %v1089 = vadd.f32 0.0, %v1088
  %v1090 = vpop.f32.mrb[0].mxu0
  %v1091 = vpop.f32.mrb[0].mxu0
  %v1092 = vadd.f32 0.0, %v1091
  %v1093 = vpop.f32.mrb[0].mxu0
  %1094 = vmatprep.mubr.bf16.mxu0 0
  %1095 = vmatmul.mubr.bf16.gmra.mrb[0].mxu0 %v1035
  %v1096 = vpop.f32.mrb[0].mxu0
  %v1097 = vadd.f32 0.0, %v1096
  %v1098 = vpop.f32.mrb[0].mxu0
  %v1099 = vpop.f32.mrb[0].mxu0
  %v1100 = vadd.f32 0.0, %v1099
  %v1101 = vpop.f32.mrb[0].mxu0
  %1102 = vmatprep.mubr.bf16.mxu0 0
  %1103 = vmatmul.mubr.bf16.gmra.mrb[0].mxu0 %v1038
  %v1104 = vpop.f32.mrb[0].mxu0
  %v1105 = vadd.f32 0.0, %v1104
  %v1106 = vpop.f32.mrb[0].mxu0
  %v1107 = vpop.f32.mrb[0].mxu0
  %v1108 = vadd.f32 0.0, %v1107
  %v1109 = vpop.f32.mrb[0].mxu0
  %1110 = vmatprep.mubr.bf16.mxu0 0
  %1111 = vmatmul.mubr.bf16.gmra.mrb[0].mxu0 %v1041
  %v1112 = vpop.f32.mrb[0].mxu0
  %v1113 = vadd.f32 0.0, %v1112
  %v1114 = vpop.f32.mrb[0].mxu0
  %v1115 = vpop.f32.mrb[0].mxu0
  %v1116 = vadd.f32 0.0, %v1115
  %v1117 = vpop.f32.mrb[0].mxu0
  %1118 = vmatprep.mubr.bf16.mxu0 0
  %1119 = vmatmul.mubr.bf16.gmra.mrb[0].mxu0 %v1044
  %v1120 = vpop.f32.mrb[0].mxu0
  %v1121 = vadd.f32 0.0, %v1120
  %v1122 = vpop.f32.mrb[0].mxu0
  %v1123 = vpop.f32.mrb[0].mxu0
  %v1124 = vadd.f32 0.0, %v1123
  %v1125 = vpop.f32.mrb[0].mxu0
  %1126 = vdwg.mxu0
  %1127 = vrot.lane.b32.xlu0 %v1081, 2
  %v1128 = vpop.permute.xlu0 %1127
  %1129 = vrot.lane.b32.xlu0 %v1084, 2
  %v1130 = vpop.permute.xlu0 %1129
  %1131 = vrot.lane.b32.xlu0 %v1089, 2
  %v1132 = vpop.permute.xlu0 %1131
  %1133 = vrot.lane.b32.xlu0 %v1092, 2
  %v1134 = vpop.permute.xlu0 %1133
  %v1135 = vsel %vm206, %v1128, 0.0
  %v1136 = vsel %vm206, %v1130, 0.0
  %v1137 = vsel %vm206, %v1132, 0.0
  %v1138 = vsel %vm206, %v1134, 0.0
  %1139 = vset.pattern.permute.xlu0 3
  %1140 = vperm.xlu0 %1139, %v193
  %v1141 = vpop.permute.xlu0 %1140
  %1143 = vset.pattern.permute.xlu0 3
  %1144 = vperm.xlu0 %1143, %v194
  %v1145 = vpop.permute.xlu0 %1144
  %1147 = vset.pattern.permute.xlu0 3
  %1148 = vperm.xlu0 %1147, %v195
  %v1149 = vpop.permute.xlu0 %1148
  %1151 = vset.pattern.permute.xlu0 3
  %1152 = vperm.xlu0 %1151, %v196
  %v1153 = vpop.permute.xlu0 %1152
  %v1155 = vadd.f32 %v1141, %v1135
  %v1156 = vadd.f32 %v1145, %v1136
  %v1157 = vadd.f32 %v1149, %v1137
  %v1158 = vadd.f32 %v1153, %v1138
  %1159 = vrot.lane.b32.xlu0 %v1097, 1
  %v1160 = vpop.permute.xlu0 %1159
  %1161 = vrot.lane.b32.xlu0 %v1100, 1
  %v1162 = vpop.permute.xlu0 %1161
  %1163 = vrot.lane.b32.xlu0 %v1105, 1
  %v1164 = vpop.permute.xlu0 %1163
  %1165 = vrot.lane.b32.xlu0 %v1108, 1
  %v1166 = vpop.permute.xlu0 %1165
  %v1167 = vsel %vm244, %v1160, 0.0
  %v1168 = vsel %vm244, %v1162, 0.0
  %v1169 = vsel %vm244, %v1164, 0.0
  %v1170 = vsel %vm244, %v1166, 0.0
  %v1171 = vadd.f32 %v1155, %v1167
  %v1172 = vadd.f32 %v1156, %v1168
  %v1173 = vadd.f32 %v1157, %v1169
  %v1174 = vadd.f32 %v1158, %v1170
  %v1175 = vadd.f32 %v1171, %v1113
  %v1176 = vadd.f32 %v1172, %v1116
  %v1177 = vadd.f32 %v1173, %v1121
  %v1178 = vadd.f32 %v1174, %v1124
  %v1179 = vmax.f32 %v1175, 0.0
  %v1180 = vmax.f32 %v1176, 0.0
  %v1181 = vmax.f32 %v1177, 0.0
  %v1182 = vmax.f32 %v1178, 0.0
  %s1183 = scalar_lea.vmem %s3, 48
  %v1184 = vld [vmem:[%s1183] sm:$0xf]
  %v1185 = vld [vmem:[%s1183 + $0x4] sm:$0xf]
  %v1186 = vld [vmem:[%s1183 + $0x8] sm:$0xf]
  %v1187 = vld [vmem:[%s1183 + $0xc] sm:$0xf]
  %v1188 = vpack.c.bf16 %v1180, %v1179
  %v1189 = vpack.c.bf16 %v1182, %v1181
  %1190 = vset.pattern.permute.xlu0 3
  %1191 = vperm.xlu0 %1190, %v267
  %v1192 = vpop.permute.xlu0 %1191
  %1194 = vset.pattern.permute.xlu0 3
  %1195 = vperm.xlu0 %1194, %v268
  %v1196 = vpop.permute.xlu0 %1195
  %1198 = vset.pattern.permute.xlu0 3
  %1199 = vperm.xlu0 %1198, %v269
  %v1200 = vpop.permute.xlu0 %1199
  %1202 = vset.pattern.permute.xlu0 3
  %1203 = vperm.xlu0 %1202, %v270
  %v1204 = vpop.permute.xlu0 %1203
  %v1210 = vunpack.c.l.b16 %v1184
  %v1211 = vunpack.c.l.b16 %v1185
  %v1212 = vunpack.c.l.b16 %v1186
  %v1213 = vunpack.c.l.b16 %v1187
  %v1214 = vpack.c.b16 %v1211, %v1210
  %v1215 = vpack.c.b16 %v1213, %v1212
  %v1217 = vsel %vm93, %v1214, 0
  %v1220 = vsel %vm93, %v1215, 0
  %1222 = vmatprep.subr.bf16.mxu0 0
  %1223 = vmatpush1.bf16.msra.mxu0 %v1188
  %1224 = vmatprep.subr.bf16.mxu0 0
  %1225 = vmatpush1.bf16.msra.mxu0 %v1189
  %1226 = vmatprep.subr.bf16.mxu0 0
  %1227 = vmatpush1.bf16.msra.mxu0 0
  %1228 = vmatprep.subr.bf16.mxu0 0
  %1229 = vmatpush1.bf16.msra.mxu0 0
  %1230 = vmatprep.subr.bf16.mxu0 0
  %1231 = vmatpush1.bf16.msra.mxu0 0
  %1232 = vmatprep.subr.bf16.mxu0 0
  %1233 = vmatpush1.bf16.msra.mxu0 0
  %1234 = vmatprep.subr.bf16.mxu0 0
  %1235 = vmatpush1.bf16.msra.mxu0 0
  %1236 = vmatprep.subr.bf16.mxu0 0
  %1237 = vmatpush1.bf16.msra.mxu0 0
  %1238 = vmatprep.subr.bf16.mxu0 0
  %1239 = vmatpush1.bf16.msra.mxu0 0
  %1240 = vmatprep.subr.bf16.mxu0 0
  %1241 = vmatpush1.bf16.msra.mxu0 0
  %1242 = vmatprep.subr.bf16.mxu0 0
  %1243 = vmatpush1.bf16.msra.mxu0 0
  %1244 = vmatprep.subr.bf16.mxu0 0
  %1245 = vmatpush1.bf16.msra.mxu0 0
  %1246 = vmatprep.subr.bf16.mxu0 0
  %1247 = vmatpush1.bf16.msra.mxu0 0
  %1248 = vmatprep.subr.bf16.mxu0 0
  %1249 = vmatpush1.bf16.msra.mxu0 0
  %1250 = vmatprep.subr.bf16.mxu0 0
  %1251 = vmatpush1.bf16.msra.mxu0 0
  %1252 = vmatprep.subr.bf16.mxu0 0
  %1253 = vmatpush1.bf16.msra.mxu0 0
  %1254 = vmatprep.mubr.bf16.mxu0 0
  %1255 = vmatmul.mubr.bf16.gmra.mrb[0].mxu0 %v1217
  %v1256 = vpop.f32.mrb[0].mxu0
  %v1257 = vadd.f32 %v1192, %v1256
  %v1258 = vpop.f32.mrb[0].mxu0
  %v1259 = vpop.f32.mrb[0].mxu0
  %v1260 = vadd.f32 %v1196, %v1259
  %v1261 = vpop.f32.mrb[0].mxu0
  %1262 = vmatprep.mubr.bf16.mxu0 0
  %1263 = vmatmul.mubr.bf16.gmra.mrb[0].mxu0 %v1220
  %v1264 = vpop.f32.mrb[0].mxu0
  %v1265 = vadd.f32 %v1200, %v1264
  %v1266 = vpop.f32.mrb[0].mxu0
  %v1267 = vpop.f32.mrb[0].mxu0
  %v1268 = vadd.f32 %v1204, %v1267
  %v1269 = vpop.f32.mrb[0].mxu0
  %1270 = vdwg.mxu0
  %v1271 = vadd.f32 %v979, %v1257
  %v1272 = vadd.f32 %v980, %v1260
  %v1273 = vadd.f32 %v981, %v1265
  %v1274 = vadd.f32 %v982, %v1268
  %s1275 = scalar_lea.vmem %s1, 192
  %v1276 = vld [vmem:[%s1275] sm:$0xf]
  %v1277 = vld [vmem:[%s1275 + $0x4] sm:$0xf]
  %v1278 = vld [vmem:[%s1275 + $0x8] sm:$0xf]
  %v1279 = vld [vmem:[%s1275 + $0xc] sm:$0xf]
  %v1280 = vld [vmem:[%s1275 + $0x10] sm:$0xf]
  %v1281 = vld [vmem:[%s1275 + $0x14] sm:$0xf]
  %v1282 = vld [vmem:[%s1275 + $0x18] sm:$0xf]
  %v1283 = vld [vmem:[%s1275 + $0x1c] sm:$0xf]
  %v1284 = vld [vmem:[%s1275 + $0x20] sm:$0xf]
  %v1285 = vld [vmem:[%s1275 + $0x24] sm:$0xf]
  %v1286 = vld [vmem:[%s1275 + $0x28] sm:$0xf]
  %v1287 = vld [vmem:[%s1275 + $0x2c] sm:$0xf]
  %v1288 = vpack.c.bf16 %v1272, %v1271
  %v1289 = vpack.c.bf16 %v1274, %v1273
  %v1302 = vunpack.c.l.b16 %v1276
  %v1303 = vunpack.c.l.b16 %v1277
  %v1304 = vunpack.c.l.b16 %v1278
  %v1305 = vunpack.c.l.b16 %v1279
  %v1306 = vunpack.c.l.b16 %v1280
  %v1307 = vunpack.c.l.b16 %v1281
  %v1308 = vunpack.c.l.b16 %v1282
  %v1309 = vunpack.c.l.b16 %v1283
  %v1310 = vunpack.c.l.b16 %v1284
  %v1311 = vunpack.c.l.b16 %v1285
  %v1312 = vunpack.c.l.b16 %v1286
  %v1313 = vunpack.c.l.b16 %v1287
  %v1314 = vpack.c.b16 %v1303, %v1302
  %v1315 = vpack.c.b16 %v1305, %v1304
  %v1316 = vpack.c.b16 %v1307, %v1306
  %v1317 = vpack.c.b16 %v1309, %v1308
  %v1318 = vpack.c.b16 %v1311, %v1310
  %v1319 = vpack.c.b16 %v1313, %v1312
  %v1321 = vsel %vm93, %v1314, 0
  %v1324 = vsel %vm93, %v1315, 0
  %v1327 = vsel %vm93, %v1316, 0
  %v1330 = vsel %vm93, %v1317, 0
  %v1333 = vsel %vm93, %v1318, 0
  %v1336 = vsel %vm93, %v1319, 0
  %1338 = vmatprep.subr.bf16.mxu0 0
  %1339 = vmatpush1.bf16.msra.mxu0 %v1288
  %1340 = vmatprep.subr.bf16.mxu0 0
  %1341 = vmatpush1.bf16.msra.mxu0 %v1289
  %1342 = vmatprep.subr.bf16.mxu0 0
  %1343 = vmatpush1.bf16.msra.mxu0 0
  %1344 = vmatprep.subr.bf16.mxu0 0
  %1345 = vmatpush1.bf16.msra.mxu0 0
  %1346 = vmatprep.subr.bf16.mxu0 0
  %1347 = vmatpush1.bf16.msra.mxu0 0
  %1348 = vmatprep.subr.bf16.mxu0 0
  %1349 = vmatpush1.bf16.msra.mxu0 0
  %1350 = vmatprep.subr.bf16.mxu0 0
  %1351 = vmatpush1.bf16.msra.mxu0 0
  %1352 = vmatprep.subr.bf16.mxu0 0
  %1353 = vmatpush1.bf16.msra.mxu0 0
  %1354 = vmatprep.subr.bf16.mxu0 0
  %1355 = vmatpush1.bf16.msra.mxu0 0
  %1356 = vmatprep.subr.bf16.mxu0 0
  %1357 = vmatpush1.bf16.msra.mxu0 0
  %1358 = vmatprep.subr.bf16.mxu0 0
  %1359 = vmatpush1.bf16.msra.mxu0 0
  %1360 = vmatprep.subr.bf16.mxu0 0
  %1361 = vmatpush1.bf16.msra.mxu0 0
  %1362 = vmatprep.subr.bf16.mxu0 0
  %1363 = vmatpush1.bf16.msra.mxu0 0
  %1364 = vmatprep.subr.bf16.mxu0 0
  %1365 = vmatpush1.bf16.msra.mxu0 0
  %1366 = vmatprep.subr.bf16.mxu0 0
  %1367 = vmatpush1.bf16.msra.mxu0 0
  %1368 = vmatprep.subr.bf16.mxu0 0
  %1369 = vmatpush1.bf16.msra.mxu0 0
  %1370 = vmatprep.mubr.bf16.mxu0 0
  %1371 = vmatmul.mubr.bf16.gmra.mrb[0].mxu0 %v1321
  %v1372 = vpop.f32.mrb[0].mxu0
  %v1373 = vadd.f32 0.0, %v1372
  %v1374 = vpop.f32.mrb[0].mxu0
  %v1375 = vpop.f32.mrb[0].mxu0
  %v1376 = vadd.f32 0.0, %v1375
  %v1377 = vpop.f32.mrb[0].mxu0
  %1378 = vmatprep.mubr.bf16.mxu0 0
  %1379 = vmatmul.mubr.bf16.gmra.mrb[0].mxu0 %v1324
  %v1380 = vpop.f32.mrb[0].mxu0
  %v1381 = vadd.f32 0.0, %v1380
  %v1382 = vpop.f32.mrb[0].mxu0
  %v1383 = vpop.f32.mrb[0].mxu0
  %v1384 = vadd.f32 0.0, %v1383
  %v1385 = vpop.f32.mrb[0].mxu0
  %1386 = vmatprep.mubr.bf16.mxu0 0
  %1387 = vmatmul.mubr.bf16.gmra.mrb[0].mxu0 %v1327
  %v1388 = vpop.f32.mrb[0].mxu0
  %v1389 = vadd.f32 0.0, %v1388
  %v1390 = vpop.f32.mrb[0].mxu0
  %v1391 = vpop.f32.mrb[0].mxu0
  %v1392 = vadd.f32 0.0, %v1391
  %v1393 = vpop.f32.mrb[0].mxu0
  %1394 = vmatprep.mubr.bf16.mxu0 0
  %1395 = vmatmul.mubr.bf16.gmra.mrb[0].mxu0 %v1330
  %v1396 = vpop.f32.mrb[0].mxu0
  %v1397 = vadd.f32 0.0, %v1396
  %v1398 = vpop.f32.mrb[0].mxu0
  %v1399 = vpop.f32.mrb[0].mxu0
  %v1400 = vadd.f32 0.0, %v1399
  %v1401 = vpop.f32.mrb[0].mxu0
  %1402 = vmatprep.mubr.bf16.mxu0 0
  %1403 = vmatmul.mubr.bf16.gmra.mrb[0].mxu0 %v1333
  %v1404 = vpop.f32.mrb[0].mxu0
  %v1405 = vadd.f32 0.0, %v1404
  %v1406 = vpop.f32.mrb[0].mxu0
  %v1407 = vpop.f32.mrb[0].mxu0
  %v1408 = vadd.f32 0.0, %v1407
  %v1409 = vpop.f32.mrb[0].mxu0
  %1410 = vmatprep.mubr.bf16.mxu0 0
  %1411 = vmatmul.mubr.bf16.gmra.mrb[0].mxu0 %v1336
  %v1412 = vpop.f32.mrb[0].mxu0
  %v1413 = vadd.f32 0.0, %v1412
  %v1414 = vpop.f32.mrb[0].mxu0
  %v1415 = vpop.f32.mrb[0].mxu0
  %v1416 = vadd.f32 0.0, %v1415
  %v1417 = vpop.f32.mrb[0].mxu0
  %1418 = vdwg.mxu0
  %1419 = vrot.lane.b32.xlu0 %v1373, 4
  %v1420 = vpop.permute.xlu0 %1419
  %1421 = vrot.lane.b32.xlu0 %v1376, 4
  %v1422 = vpop.permute.xlu0 %1421
  %1423 = vrot.lane.b32.xlu0 %v1381, 4
  %v1424 = vpop.permute.xlu0 %1423
  %1425 = vrot.lane.b32.xlu0 %v1384, 4
  %v1426 = vpop.permute.xlu0 %1425
  %v1427 = vsel %vm513, %v1420, 0.0
  %v1428 = vsel %vm513, %v1422, 0.0
  %v1429 = vsel %vm513, %v1424, 0.0
  %v1430 = vsel %vm513, %v1426, 0.0
  %1431 = vset.pattern.permute.xlu0 4
  %1432 = vperm.xlu0 %1431, %v193
  %v1433 = vpop.permute.xlu0 %1432
  %1435 = vset.pattern.permute.xlu0 4
  %1436 = vperm.xlu0 %1435, %v194
  %v1437 = vpop.permute.xlu0 %1436
  %1439 = vset.pattern.permute.xlu0 4
  %1440 = vperm.xlu0 %1439, %v195
  %v1441 = vpop.permute.xlu0 %1440
  %1443 = vset.pattern.permute.xlu0 4
  %1444 = vperm.xlu0 %1443, %v196
  %v1445 = vpop.permute.xlu0 %1444
  %v1447 = vadd.f32 %v1433, %v1427
  %v1448 = vadd.f32 %v1437, %v1428
  %v1449 = vadd.f32 %v1441, %v1429
  %v1450 = vadd.f32 %v1445, %v1430
  %1451 = vrot.lane.b32.xlu0 %v1389, 2
  %v1452 = vpop.permute.xlu0 %1451
  %1453 = vrot.lane.b32.xlu0 %v1392, 2
  %v1454 = vpop.permute.xlu0 %1453
  %1455 = vrot.lane.b32.xlu0 %v1397, 2
  %v1456 = vpop.permute.xlu0 %1455
  %1457 = vrot.lane.b32.xlu0 %v1400, 2
  %v1458 = vpop.permute.xlu0 %1457
  %v1459 = vsel %vm206, %v1452, 0.0
  %v1460 = vsel %vm206, %v1454, 0.0
  %v1461 = vsel %vm206, %v1456, 0.0
  %v1462 = vsel %vm206, %v1458, 0.0
  %v1463 = vadd.f32 %v1447, %v1459
  %v1464 = vadd.f32 %v1448, %v1460
  %v1465 = vadd.f32 %v1449, %v1461
  %v1466 = vadd.f32 %v1450, %v1462
  %v1467 = vadd.f32 %v1463, %v1405
  %v1468 = vadd.f32 %v1464, %v1408
  %v1469 = vadd.f32 %v1465, %v1413
  %v1470 = vadd.f32 %v1466, %v1416
  %v1471 = vmax.f32 %v1467, 0.0
  %v1472 = vmax.f32 %v1468, 0.0
  %v1473 = vmax.f32 %v1469, 0.0
  %v1474 = vmax.f32 %v1470, 0.0
  %s1475 = scalar_lea.vmem %s3, 64
  %v1476 = vld [vmem:[%s1475] sm:$0xf]
  %v1477 = vld [vmem:[%s1475 + $0x4] sm:$0xf]
  %v1478 = vld [vmem:[%s1475 + $0x8] sm:$0xf]
  %v1479 = vld [vmem:[%s1475 + $0xc] sm:$0xf]
  %v1480 = vpack.c.bf16 %v1472, %v1471
  %v1481 = vpack.c.bf16 %v1474, %v1473
  %1482 = vset.pattern.permute.xlu0 4
  %1483 = vperm.xlu0 %1482, %v267
  %v1484 = vpop.permute.xlu0 %1483
  %1486 = vset.pattern.permute.xlu0 4
  %1487 = vperm.xlu0 %1486, %v268
  %v1488 = vpop.permute.xlu0 %1487
  %1490 = vset.pattern.permute.xlu0 4
  %1491 = vperm.xlu0 %1490, %v269
  %v1492 = vpop.permute.xlu0 %1491
  %1494 = vset.pattern.permute.xlu0 4
  %1495 = vperm.xlu0 %1494, %v270
  %v1496 = vpop.permute.xlu0 %1495
  %v1502 = vunpack.c.l.b16 %v1476
  %v1503 = vunpack.c.l.b16 %v1477
  %v1504 = vunpack.c.l.b16 %v1478
  %v1505 = vunpack.c.l.b16 %v1479
  %v1506 = vpack.c.b16 %v1503, %v1502
  %v1507 = vpack.c.b16 %v1505, %v1504
  %v1509 = vsel %vm93, %v1506, 0
  %v1512 = vsel %vm93, %v1507, 0
  %1514 = vmatprep.subr.bf16.mxu0 0
  %1515 = vmatpush1.bf16.msra.mxu0 %v1480
  %1516 = vmatprep.subr.bf16.mxu0 0
  %1517 = vmatpush1.bf16.msra.mxu0 %v1481
  %1518 = vmatprep.subr.bf16.mxu0 0
  %1519 = vmatpush1.bf16.msra.mxu0 0
  %1520 = vmatprep.subr.bf16.mxu0 0
  %1521 = vmatpush1.bf16.msra.mxu0 0
  %1522 = vmatprep.subr.bf16.mxu0 0
  %1523 = vmatpush1.bf16.msra.mxu0 0
  %1524 = vmatprep.subr.bf16.mxu0 0
  %1525 = vmatpush1.bf16.msra.mxu0 0
  %1526 = vmatprep.subr.bf16.mxu0 0
  %1527 = vmatpush1.bf16.msra.mxu0 0
  %1528 = vmatprep.subr.bf16.mxu0 0
  %1529 = vmatpush1.bf16.msra.mxu0 0
  %1530 = vmatprep.subr.bf16.mxu0 0
  %1531 = vmatpush1.bf16.msra.mxu0 0
  %1532 = vmatprep.subr.bf16.mxu0 0
  %1533 = vmatpush1.bf16.msra.mxu0 0
  %1534 = vmatprep.subr.bf16.mxu0 0
  %1535 = vmatpush1.bf16.msra.mxu0 0
  %1536 = vmatprep.subr.bf16.mxu0 0
  %1537 = vmatpush1.bf16.msra.mxu0 0
  %1538 = vmatprep.subr.bf16.mxu0 0
  %1539 = vmatpush1.bf16.msra.mxu0 0
  %1540 = vmatprep.subr.bf16.mxu0 0
  %1541 = vmatpush1.bf16.msra.mxu0 0
  %1542 = vmatprep.subr.bf16.mxu0 0
  %1543 = vmatpush1.bf16.msra.mxu0 0
  %1544 = vmatprep.subr.bf16.mxu0 0
  %1545 = vmatpush1.bf16.msra.mxu0 0
  %1546 = vmatprep.mubr.bf16.mxu0 0
  %1547 = vmatmul.mubr.bf16.gmra.mrb[0].mxu0 %v1509
  %v1548 = vpop.f32.mrb[0].mxu0
  %v1549 = vadd.f32 %v1484, %v1548
  %v1550 = vpop.f32.mrb[0].mxu0
  %v1551 = vpop.f32.mrb[0].mxu0
  %v1552 = vadd.f32 %v1488, %v1551
  %v1553 = vpop.f32.mrb[0].mxu0
  %1554 = vmatprep.mubr.bf16.mxu0 0
  %1555 = vmatmul.mubr.bf16.gmra.mrb[0].mxu0 %v1512
  %v1556 = vpop.f32.mrb[0].mxu0
  %v1557 = vadd.f32 %v1492, %v1556
  %v1558 = vpop.f32.mrb[0].mxu0
  %v1559 = vpop.f32.mrb[0].mxu0
  %v1560 = vadd.f32 %v1496, %v1559
  %v1561 = vpop.f32.mrb[0].mxu0
  %1562 = vdwg.mxu0
  %v1563 = vadd.f32 %v1271, %v1549
  %v1564 = vadd.f32 %v1272, %v1552
  %v1565 = vadd.f32 %v1273, %v1557
  %v1566 = vadd.f32 %v1274, %v1560
  %s1567 = scalar_lea.vmem %s1, 240
  %v1568 = vld [vmem:[%s1567] sm:$0xf]
  %v1569 = vld [vmem:[%s1567 + $0x4] sm:$0xf]
  %v1570 = vld [vmem:[%s1567 + $0x8] sm:$0xf]
  %v1571 = vld [vmem:[%s1567 + $0xc] sm:$0xf]
  %v1572 = vld [vmem:[%s1567 + $0x10] sm:$0xf]
  %v1573 = vld [vmem:[%s1567 + $0x14] sm:$0xf]
  %v1574 = vld [vmem:[%s1567 + $0x18] sm:$0xf]
  %v1575 = vld [vmem:[%s1567 + $0x1c] sm:$0xf]
  %v1576 = vld [vmem:[%s1567 + $0x20] sm:$0xf]
  %v1577 = vld [vmem:[%s1567 + $0x24] sm:$0xf]
  %v1578 = vld [vmem:[%s1567 + $0x28] sm:$0xf]
  %v1579 = vld [vmem:[%s1567 + $0x2c] sm:$0xf]
  %v1580 = vpack.c.bf16 %v1564, %v1563
  %v1581 = vpack.c.bf16 %v1566, %v1565
  %v1594 = vunpack.c.l.b16 %v1568
  %v1595 = vunpack.c.l.b16 %v1569
  %v1596 = vunpack.c.l.b16 %v1570
  %v1597 = vunpack.c.l.b16 %v1571
  %v1598 = vunpack.c.l.b16 %v1572
  %v1599 = vunpack.c.l.b16 %v1573
  %v1600 = vunpack.c.l.b16 %v1574
  %v1601 = vunpack.c.l.b16 %v1575
  %v1602 = vunpack.c.l.b16 %v1576
  %v1603 = vunpack.c.l.b16 %v1577
  %v1604 = vunpack.c.l.b16 %v1578
  %v1605 = vunpack.c.l.b16 %v1579
  %v1606 = vpack.c.b16 %v1595, %v1594
  %v1607 = vpack.c.b16 %v1597, %v1596
  %v1608 = vpack.c.b16 %v1599, %v1598
  %v1609 = vpack.c.b16 %v1601, %v1600
  %v1610 = vpack.c.b16 %v1603, %v1602
  %v1611 = vpack.c.b16 %v1605, %v1604
  %v1613 = vsel %vm93, %v1606, 0
  %v1616 = vsel %vm93, %v1607, 0
  %v1619 = vsel %vm93, %v1608, 0
  %v1622 = vsel %vm93, %v1609, 0
  %v1625 = vsel %vm93, %v1610, 0
  %v1628 = vsel %vm93, %v1611, 0
  %1630 = vmatprep.subr.bf16.mxu0 0
  %1631 = vmatpush1.bf16.msra.mxu0 %v1580
  %1632 = vmatprep.subr.bf16.mxu0 0
  %1633 = vmatpush1.bf16.msra.mxu0 %v1581
  %1634 = vmatprep.subr.bf16.mxu0 0
  %1635 = vmatpush1.bf16.msra.mxu0 0
  %1636 = vmatprep.subr.bf16.mxu0 0
  %1637 = vmatpush1.bf16.msra.mxu0 0
  %1638 = vmatprep.subr.bf16.mxu0 0
  %1639 = vmatpush1.bf16.msra.mxu0 0
  %1640 = vmatprep.subr.bf16.mxu0 0
  %1641 = vmatpush1.bf16.msra.mxu0 0
  %1642 = vmatprep.subr.bf16.mxu0 0
  %1643 = vmatpush1.bf16.msra.mxu0 0
  %1644 = vmatprep.subr.bf16.mxu0 0
  %1645 = vmatpush1.bf16.msra.mxu0 0
  %1646 = vmatprep.subr.bf16.mxu0 0
  %1647 = vmatpush1.bf16.msra.mxu0 0
  %1648 = vmatprep.subr.bf16.mxu0 0
  %1649 = vmatpush1.bf16.msra.mxu0 0
  %1650 = vmatprep.subr.bf16.mxu0 0
  %1651 = vmatpush1.bf16.msra.mxu0 0
  %1652 = vmatprep.subr.bf16.mxu0 0
  %1653 = vmatpush1.bf16.msra.mxu0 0
  %1654 = vmatprep.subr.bf16.mxu0 0
  %1655 = vmatpush1.bf16.msra.mxu0 0
  %1656 = vmatprep.subr.bf16.mxu0 0
  %1657 = vmatpush1.bf16.msra.mxu0 0
  %1658 = vmatprep.subr.bf16.mxu0 0
  %1659 = vmatpush1.bf16.msra.mxu0 0
  %1660 = vmatprep.subr.bf16.mxu0 0
  %1661 = vmatpush1.bf16.msra.mxu0 0
  %1662 = vmatprep.mubr.bf16.mxu0 0
  %1663 = vmatmul.mubr.bf16.gmra.mrb[0].mxu0 %v1613
  %v1664 = vpop.f32.mrb[0].mxu0
  %v1665 = vadd.f32 0.0, %v1664
  %v1666 = vpop.f32.mrb[0].mxu0
  %v1667 = vpop.f32.mrb[0].mxu0
  %v1668 = vadd.f32 0.0, %v1667
  %v1669 = vpop.f32.mrb[0].mxu0
  %1670 = vmatprep.mubr.bf16.mxu0 0
  %1671 = vmatmul.mubr.bf16.gmra.mrb[0].mxu0 %v1616
  %v1672 = vpop.f32.mrb[0].mxu0
  %v1673 = vadd.f32 0.0, %v1672
  %v1674 = vpop.f32.mrb[0].mxu0
  %v1675 = vpop.f32.mrb[0].mxu0
  %v1676 = vadd.f32 0.0, %v1675
  %v1677 = vpop.f32.mrb[0].mxu0
  %1678 = vmatprep.mubr.bf16.mxu0 0
  %1679 = vmatmul.mubr.bf16.gmra.mrb[0].mxu0 %v1619
  %v1680 = vpop.f32.mrb[0].mxu0
  %v1681 = vadd.f32 0.0, %v1680
  %v1682 = vpop.f32.mrb[0].mxu0
  %v1683 = vpop.f32.mrb[0].mxu0
  %v1684 = vadd.f32 0.0, %v1683
  %v1685 = vpop.f32.mrb[0].mxu0
  %1686 = vmatprep.mubr.bf16.mxu0 0
  %1687 = vmatmul.mubr.bf16.gmra.mrb[0].mxu0 %v1622
  %v1688 = vpop.f32.mrb[0].mxu0
  %v1689 = vadd.f32 0.0, %v1688
  %v1690 = vpop.f32.mrb[0].mxu0
  %v1691 = vpop.f32.mrb[0].mxu0
  %v1692 = vadd.f32 0.0, %v1691
  %v1693 = vpop.f32.mrb[0].mxu0
  %1694 = vmatprep.mubr.bf16.mxu0 0
  %1695 = vmatmul.mubr.bf16.gmra.mrb[0].mxu0 %v1625
  %v1696 = vpop.f32.mrb[0].mxu0
  %v1697 = vadd.f32 0.0, %v1696
  %v1698 = vpop.f32.mrb[0].mxu0
  %v1699 = vpop.f32.mrb[0].mxu0
  %v1700 = vadd.f32 0.0, %v1699
  %v1701 = vpop.f32.mrb[0].mxu0
  %1702 = vmatprep.mubr.bf16.mxu0 0
  %1703 = vmatmul.mubr.bf16.gmra.mrb[0].mxu0 %v1628
  %v1704 = vpop.f32.mrb[0].mxu0
  %v1705 = vadd.f32 0.0, %v1704
  %v1706 = vpop.f32.mrb[0].mxu0
  %v1707 = vpop.f32.mrb[0].mxu0
  %v1708 = vadd.f32 0.0, %v1707
  %v1709 = vpop.f32.mrb[0].mxu0
  %1710 = vdwg.mxu0
  %1711 = vrot.lane.b32.xlu0 %v1665, 8
  %v1712 = vpop.permute.xlu0 %1711
  %1713 = vrot.lane.b32.xlu0 %v1668, 8
  %v1714 = vpop.permute.xlu0 %1713
  %1715 = vrot.lane.b32.xlu0 %v1673, 8
  %v1716 = vpop.permute.xlu0 %1715
  %1717 = vrot.lane.b32.xlu0 %v1676, 8
  %v1718 = vpop.permute.xlu0 %1717
  %v1719 = vsel %vm807, %v1712, 0.0
  %v1720 = vsel %vm807, %v1714, 0.0
  %v1721 = vsel %vm807, %v1716, 0.0
  %v1722 = vsel %vm807, %v1718, 0.0
  %1723 = vset.pattern.permute.xlu0 5
  %1724 = vperm.xlu0 %1723, %v193
  %v1725 = vpop.permute.xlu0 %1724
  %1727 = vset.pattern.permute.xlu0 5
  %1728 = vperm.xlu0 %1727, %v194
  %v1729 = vpop.permute.xlu0 %1728
  %1731 = vset.pattern.permute.xlu0 5
  %1732 = vperm.xlu0 %1731, %v195
  %v1733 = vpop.permute.xlu0 %1732
  %1735 = vset.pattern.permute.xlu0 5
  %1736 = vperm.xlu0 %1735, %v196
  %v1737 = vpop.permute.xlu0 %1736
  %v1739 = vadd.f32 %v1725, %v1719
  %v1740 = vadd.f32 %v1729, %v1720
  %v1741 = vadd.f32 %v1733, %v1721
  %v1742 = vadd.f32 %v1737, %v1722
  %1743 = vrot.lane.b32.xlu0 %v1681, 4
  %v1744 = vpop.permute.xlu0 %1743
  %1745 = vrot.lane.b32.xlu0 %v1684, 4
  %v1746 = vpop.permute.xlu0 %1745
  %1747 = vrot.lane.b32.xlu0 %v1689, 4
  %v1748 = vpop.permute.xlu0 %1747
  %1749 = vrot.lane.b32.xlu0 %v1692, 4
  %v1750 = vpop.permute.xlu0 %1749
  %v1751 = vsel %vm513, %v1744, 0.0
  %v1752 = vsel %vm513, %v1746, 0.0
  %v1753 = vsel %vm513, %v1748, 0.0
  %v1754 = vsel %vm513, %v1750, 0.0
  %v1755 = vadd.f32 %v1739, %v1751
  %v1756 = vadd.f32 %v1740, %v1752
  %v1757 = vadd.f32 %v1741, %v1753
  %v1758 = vadd.f32 %v1742, %v1754
  %v1759 = vadd.f32 %v1755, %v1697
  %v1760 = vadd.f32 %v1756, %v1700
  %v1761 = vadd.f32 %v1757, %v1705
  %v1762 = vadd.f32 %v1758, %v1708
  %v1763 = vmax.f32 %v1759, 0.0
  %v1764 = vmax.f32 %v1760, 0.0
  %v1765 = vmax.f32 %v1761, 0.0
  %v1766 = vmax.f32 %v1762, 0.0
  %s1767 = scalar_lea.vmem %s3, 80
  %v1768 = vld [vmem:[%s1767] sm:$0xf]
  %v1769 = vld [vmem:[%s1767 + $0x4] sm:$0xf]
  %v1770 = vld [vmem:[%s1767 + $0x8] sm:$0xf]
  %v1771 = vld [vmem:[%s1767 + $0xc] sm:$0xf]
  %v1772 = vpack.c.bf16 %v1764, %v1763
  %v1773 = vpack.c.bf16 %v1766, %v1765
  %1774 = vset.pattern.permute.xlu0 5
  %1775 = vperm.xlu0 %1774, %v267
  %v1776 = vpop.permute.xlu0 %1775
  %1778 = vset.pattern.permute.xlu0 5
  %1779 = vperm.xlu0 %1778, %v268
  %v1780 = vpop.permute.xlu0 %1779
  %1782 = vset.pattern.permute.xlu0 5
  %1783 = vperm.xlu0 %1782, %v269
  %v1784 = vpop.permute.xlu0 %1783
  %1786 = vset.pattern.permute.xlu0 5
  %1787 = vperm.xlu0 %1786, %v270
  %v1788 = vpop.permute.xlu0 %1787
  %v1794 = vunpack.c.l.b16 %v1768
  %v1795 = vunpack.c.l.b16 %v1769
  %v1796 = vunpack.c.l.b16 %v1770
  %v1797 = vunpack.c.l.b16 %v1771
  %v1798 = vpack.c.b16 %v1795, %v1794
  %v1799 = vpack.c.b16 %v1797, %v1796
  %v1801 = vsel %vm93, %v1798, 0
  %v1804 = vsel %vm93, %v1799, 0
  %1806 = vmatprep.subr.bf16.mxu0 0
  %1807 = vmatpush1.bf16.msra.mxu0 %v1772
  %1808 = vmatprep.subr.bf16.mxu0 0
  %1809 = vmatpush1.bf16.msra.mxu0 %v1773
  %1810 = vmatprep.subr.bf16.mxu0 0
  %1811 = vmatpush1.bf16.msra.mxu0 0
  %1812 = vmatprep.subr.bf16.mxu0 0
  %1813 = vmatpush1.bf16.msra.mxu0 0
  %1814 = vmatprep.subr.bf16.mxu0 0
  %1815 = vmatpush1.bf16.msra.mxu0 0
  %1816 = vmatprep.subr.bf16.mxu0 0
  %1817 = vmatpush1.bf16.msra.mxu0 0
  %1818 = vmatprep.subr.bf16.mxu0 0
  %1819 = vmatpush1.bf16.msra.mxu0 0
  %1820 = vmatprep.subr.bf16.mxu0 0
  %1821 = vmatpush1.bf16.msra.mxu0 0
  %1822 = vmatprep.subr.bf16.mxu0 0
  %1823 = vmatpush1.bf16.msra.mxu0 0
  %1824 = vmatprep.subr.bf16.mxu0 0
  %1825 = vmatpush1.bf16.msra.mxu0 0
  %1826 = vmatprep.subr.bf16.mxu0 0
  %1827 = vmatpush1.bf16.msra.mxu0 0
  %1828 = vmatprep.subr.bf16.mxu0 0
  %1829 = vmatpush1.bf16.msra.mxu0 0
  %1830 = vmatprep.subr.bf16.mxu0 0
  %1831 = vmatpush1.bf16.msra.mxu0 0
  %1832 = vmatprep.subr.bf16.mxu0 0
  %1833 = vmatpush1.bf16.msra.mxu0 0
  %1834 = vmatprep.subr.bf16.mxu0 0
  %1835 = vmatpush1.bf16.msra.mxu0 0
  %1836 = vmatprep.subr.bf16.mxu0 0
  %1837 = vmatpush1.bf16.msra.mxu0 0
  %1838 = vmatprep.mubr.bf16.mxu0 0
  %1839 = vmatmul.mubr.bf16.gmra.mrb[0].mxu0 %v1801
  %v1840 = vpop.f32.mrb[0].mxu0
  %v1841 = vadd.f32 %v1776, %v1840
  %v1842 = vpop.f32.mrb[0].mxu0
  %v1843 = vpop.f32.mrb[0].mxu0
  %v1844 = vadd.f32 %v1780, %v1843
  %v1845 = vpop.f32.mrb[0].mxu0
  %1846 = vmatprep.mubr.bf16.mxu0 0
  %1847 = vmatmul.mubr.bf16.gmra.mrb[0].mxu0 %v1804
  %v1848 = vpop.f32.mrb[0].mxu0
  %v1849 = vadd.f32 %v1784, %v1848
  %v1850 = vpop.f32.mrb[0].mxu0
  %v1851 = vpop.f32.mrb[0].mxu0
  %v1852 = vadd.f32 %v1788, %v1851
  %v1853 = vpop.f32.mrb[0].mxu0
  %1854 = vdwg.mxu0
  %v1855 = vadd.f32 %v1563, %v1841
  %v1856 = vadd.f32 %v1564, %v1844
  %v1857 = vadd.f32 %v1565, %v1849
  %v1858 = vadd.f32 %v1566, %v1852
  %v1859 = vmax.f32 %v1855, %v1856
  %v1860 = vmax.f32 %v1857, %v1858
  %v1861 = vmax.f32 %v1859, %v1860
  %v1862 = vrot.slane %v1861, 4
  %v1863 = vmax.f32 %v1861, %v1862
  %v1864 = vrot.slane %v1863, 2
  %v1865 = vmax.f32 %v1863, %v1864
  %v1866 = vrot.slane %v1865, 1
  %v1867 = vmax.f32 %v1865, %v1866
  %v1868 = vsub.f32 %v1855, %v1867
  %v1869 = vsub.f32 %v1856, %v1867
  %v1870 = vsub.f32 %v1857, %v1867
  %v1871 = vsub.f32 %v1858, %v1867
  %v1872 = vmul.f32 %v1868, 1.442695
  %v1873 = vpow.pop %v1872
  %v1874 = vmul.f32 %v1869, 1.442695
  %v1875 = vpow.pop %v1874
  %v1876 = vmul.f32 %v1870, 1.442695
  %v1877 = vpow.pop %v1876
  %v1878 = vmul.f32 %v1871, 1.442695
  %v1879 = vpow.pop %v1878
  %v1880 = vadd.f32 %v1873, %v1875
  %v1881 = vadd.f32 %v1880, %v1877
  %v1882 = vadd.f32 %v1881, %v1879
  %v1883 = vrot.slane %v1882, 4
  %v1884 = vadd.f32 %v1882, %v1883
  %v1885 = vrot.slane %v1884, 2
  %v1886 = vadd.f32 %v1884, %v1885
  %v1887 = vrot.slane %v1886, 1
  %v1888 = vadd.f32 %v1886, %v1887
  %v1889 = vrcp.pop %v1888
  %v1890 = vmul.f32 %v1873, %v1889
  %v1891 = vmul.f32 %v1875, %v1889
  %v1892 = vmul.f32 %v1877, %v1889
  %v1893 = vmul.f32 %v1879, %v1889
  %s1894 = scalar_lea.vmem %s1, 288
  %v1895 = vld [vmem:[%s1894] sm:$0xf]
  %v1896 = vld [vmem:[%s1894 + $0x4] sm:$0xf]
  %v1897 = vld [vmem:[%s1894 + $0x8] sm:$0xf]
  %v1898 = vld [vmem:[%s1894 + $0xc] sm:$0xf]
  %v1899 = vld [vmem:[%s1894 + $0x10] sm:$0xf]
  %v1900 = vld [vmem:[%s1894 + $0x14] sm:$0xf]
  %v1901 = vld [vmem:[%s1894 + $0x18] sm:$0xf]
  %v1902 = vld [vmem:[%s1894 + $0x1c] sm:$0xf]
  %v1903 = vld [vmem:[%s1894 + $0x20] sm:$0xf]
  %v1904 = vld [vmem:[%s1894 + $0x24] sm:$0xf]
  %v1905 = vld [vmem:[%s1894 + $0x28] sm:$0xf]
  %v1906 = vld [vmem:[%s1894 + $0x2c] sm:$0xf]
  %v1907 = vpack.c.bf16 %v1891, %v1890
  %v1908 = vpack.c.bf16 %v1893, %v1892
  %v1921 = vunpack.c.l.b16 %v1895
  %v1922 = vunpack.c.l.b16 %v1896
  %v1923 = vunpack.c.l.b16 %v1897
  %v1924 = vunpack.c.l.b16 %v1898
  %v1925 = vunpack.c.l.b16 %v1899
  %v1926 = vunpack.c.l.b16 %v1900
  %v1927 = vunpack.c.l.b16 %v1901
  %v1928 = vunpack.c.l.b16 %v1902
  %v1929 = vunpack.c.l.b16 %v1903
  %v1930 = vunpack.c.l.b16 %v1904
  %v1931 = vunpack.c.l.b16 %v1905
  %v1932 = vunpack.c.l.b16 %v1906
  %v1933 = vpack.c.b16 %v1922, %v1921
  %v1934 = vpack.c.b16 %v1924, %v1923
  %v1935 = vpack.c.b16 %v1926, %v1925
  %v1936 = vpack.c.b16 %v1928, %v1927
  %v1937 = vpack.c.b16 %v1930, %v1929
  %v1938 = vpack.c.b16 %v1932, %v1931
  %v1940 = vsel %vm93, %v1933, 0
  %v1943 = vsel %vm93, %v1934, 0
  %v1946 = vsel %vm93, %v1935, 0
  %v1949 = vsel %vm93, %v1936, 0
  %v1952 = vsel %vm93, %v1937, 0
  %v1955 = vsel %vm93, %v1938, 0
  %1957 = vmatprep.subr.bf16.mxu0 0
  %1958 = vmatpush1.bf16.msra.mxu0 %v1907
  %1959 = vmatprep.subr.bf16.mxu0 0
  %1960 = vmatpush1.bf16.msra.mxu0 %v1908
  %1961 = vmatprep.subr.bf16.mxu0 0
  %1962 = vmatpush1.bf16.msra.mxu0 0
  %1963 = vmatprep.subr.bf16.mxu0 0
  %1964 = vmatpush1.bf16.msra.mxu0 0
  %1965 = vmatprep.subr.bf16.mxu0 0
  %1966 = vmatpush1.bf16.msra.mxu0 0
  %1967 = vmatprep.subr.bf16.mxu0 0
  %1968 = vmatpush1.bf16.msra.mxu0 0
  %1969 = vmatprep.subr.bf16.mxu0 0
  %1970 = vmatpush1.bf16.msra.mxu0 0
  %1971 = vmatprep.subr.bf16.mxu0 0
  %1972 = vmatpush1.bf16.msra.mxu0 0
  %1973 = vmatprep.subr.bf16.mxu0 0
  %1974 = vmatpush1.bf16.msra.mxu0 0
  %1975 = vmatprep.subr.bf16.mxu0 0
  %1976 = vmatpush1.bf16.msra.mxu0 0
  %1977 = vmatprep.subr.bf16.mxu0 0
  %1978 = vmatpush1.bf16.msra.mxu0 0
  %1979 = vmatprep.subr.bf16.mxu0 0
  %1980 = vmatpush1.bf16.msra.mxu0 0
  %1981 = vmatprep.subr.bf16.mxu0 0
  %1982 = vmatpush1.bf16.msra.mxu0 0
  %1983 = vmatprep.subr.bf16.mxu0 0
  %1984 = vmatpush1.bf16.msra.mxu0 0
  %1985 = vmatprep.subr.bf16.mxu0 0
  %1986 = vmatpush1.bf16.msra.mxu0 0
  %1987 = vmatprep.subr.bf16.mxu0 0
  %1988 = vmatpush1.bf16.msra.mxu0 0
  %1989 = vmatprep.mubr.bf16.mxu0 0
  %1990 = vmatmul.mubr.bf16.gmra.mrb[0].mxu0 %v1940
  %v1991 = vpop.f32.mrb[0].mxu0
  %v1992 = vadd.f32 0.0, %v1991
  %v1993 = vpop.f32.mrb[0].mxu0
  %v1994 = vpop.f32.mrb[0].mxu0
  %v1995 = vadd.f32 0.0, %v1994
  %v1996 = vpop.f32.mrb[0].mxu0
  %1997 = vmatprep.mubr.bf16.mxu0 0
  %1998 = vmatmul.mubr.bf16.gmra.mrb[0].mxu0 %v1943
  %v1999 = vpop.f32.mrb[0].mxu0
  %v2000 = vadd.f32 0.0, %v1999
  %v2001 = vpop.f32.mrb[0].mxu0
  %v2002 = vpop.f32.mrb[0].mxu0
  %v2003 = vadd.f32 0.0, %v2002
  %v2004 = vpop.f32.mrb[0].mxu0
  %2005 = vmatprep.mubr.bf16.mxu0 0
  %2006 = vmatmul.mubr.bf16.gmra.mrb[0].mxu0 %v1946
  %v2007 = vpop.f32.mrb[0].mxu0
  %v2008 = vadd.f32 0.0, %v2007
  %v2009 = vpop.f32.mrb[0].mxu0
  %v2010 = vpop.f32.mrb[0].mxu0
  %v2011 = vadd.f32 0.0, %v2010
  %v2012 = vpop.f32.mrb[0].mxu0
  %2013 = vmatprep.mubr.bf16.mxu0 0
  %2014 = vmatmul.mubr.bf16.gmra.mrb[0].mxu0 %v1949
  %v2015 = vpop.f32.mrb[0].mxu0
  %v2016 = vadd.f32 0.0, %v2015
  %v2017 = vpop.f32.mrb[0].mxu0
  %v2018 = vpop.f32.mrb[0].mxu0
  %v2019 = vadd.f32 0.0, %v2018
  %v2020 = vpop.f32.mrb[0].mxu0
  %2021 = vmatprep.mubr.bf16.mxu0 0
  %2022 = vmatmul.mubr.bf16.gmra.mrb[0].mxu0 %v1952
  %v2023 = vpop.f32.mrb[0].mxu0
  %v2024 = vadd.f32 0.0, %v2023
  %v2025 = vpop.f32.mrb[0].mxu0
  %v2026 = vpop.f32.mrb[0].mxu0
  %v2027 = vadd.f32 0.0, %v2026
  %v2028 = vpop.f32.mrb[0].mxu0
  %2029 = vmatprep.mubr.bf16.mxu0 0
  %2030 = vmatmul.mubr.bf16.gmra.mrb[0].mxu0 %v1955
  %v2031 = vpop.f32.mrb[0].mxu0
  %v2032 = vadd.f32 0.0, %v2031
  %v2033 = vpop.f32.mrb[0].mxu0
  %v2034 = vpop.f32.mrb[0].mxu0
  %v2035 = vadd.f32 0.0, %v2034
  %v2036 = vpop.f32.mrb[0].mxu0
  %2037 = vdwg.mxu0
  %2038 = vrot.lane.b32.xlu0 %v1992, 2
  %v2039 = vpop.permute.xlu0 %2038
  %2040 = vrot.lane.b32.xlu0 %v1995, 2
  %v2041 = vpop.permute.xlu0 %2040
  %2042 = vrot.lane.b32.xlu0 %v2000, 2
  %v2043 = vpop.permute.xlu0 %2042
  %2044 = vrot.lane.b32.xlu0 %v2003, 2
  %v2045 = vpop.permute.xlu0 %2044
  %v2046 = vsel %vm206, %v2039, 0.0
  %v2047 = vsel %vm206, %v2041, 0.0
  %v2048 = vsel %vm206, %v2043, 0.0
  %v2049 = vsel %vm206, %v2045, 0.0
  %2050 = vset.pattern.permute.xlu0 6
  %2051 = vperm.xlu0 %2050, %v193
  %v2052 = vpop.permute.xlu0 %2051
  %2054 = vset.pattern.permute.xlu0 6
  %2055 = vperm.xlu0 %2054, %v194
  %v2056 = vpop.permute.xlu0 %2055
  %2058 = vset.pattern.permute.xlu0 6
  %2059 = vperm.xlu0 %2058, %v195
  %v2060 = vpop.permute.xlu0 %2059
  %2062 = vset.pattern.permute.xlu0 6
  %2063 = vperm.xlu0 %2062, %v196
  %v2064 = vpop.permute.xlu0 %2063
  %v2066 = vadd.f32 %v2052, %v2046
  %v2067 = vadd.f32 %v2056, %v2047
  %v2068 = vadd.f32 %v2060, %v2048
  %v2069 = vadd.f32 %v2064, %v2049
  %2070 = vrot.lane.b32.xlu0 %v2008, 1
  %v2071 = vpop.permute.xlu0 %2070
  %2072 = vrot.lane.b32.xlu0 %v2011, 1
  %v2073 = vpop.permute.xlu0 %2072
  %2074 = vrot.lane.b32.xlu0 %v2016, 1
  %v2075 = vpop.permute.xlu0 %2074
  %2076 = vrot.lane.b32.xlu0 %v2019, 1
  %v2077 = vpop.permute.xlu0 %2076
  %v2078 = vsel %vm244, %v2071, 0.0
  %v2079 = vsel %vm244, %v2073, 0.0
  %v2080 = vsel %vm244, %v2075, 0.0
  %v2081 = vsel %vm244, %v2077, 0.0
  %v2082 = vadd.f32 %v2066, %v2078
  %v2083 = vadd.f32 %v2067, %v2079
  %v2084 = vadd.f32 %v2068, %v2080
  %v2085 = vadd.f32 %v2069, %v2081
  %v2086 = vadd.f32 %v2082, %v2024
  %v2087 = vadd.f32 %v2083, %v2027
  %v2088 = vadd.f32 %v2084, %v2032
  %v2089 = vadd.f32 %v2085, %v2035
  %v2090 = vmax.f32 %v2086, 0.0
  %v2091 = vmax.f32 %v2087, 0.0
  %v2092 = vmax.f32 %v2088, 0.0
  %v2093 = vmax.f32 %v2089, 0.0
  %s2094 = scalar_lea.vmem %s3, 96
  %v2095 = vld [vmem:[%s2094] sm:$0xf]
  %v2096 = vld [vmem:[%s2094 + $0x4] sm:$0xf]
  %v2097 = vld [vmem:[%s2094 + $0x8] sm:$0xf]
  %v2098 = vld [vmem:[%s2094 + $0xc] sm:$0xf]
  %v2099 = vpack.c.bf16 %v2091, %v2090
  %v2100 = vpack.c.bf16 %v2093, %v2092
  %2101 = vset.pattern.permute.xlu0 6
  %2102 = vperm.xlu0 %2101, %v267
  %v2103 = vpop.permute.xlu0 %2102
  %2105 = vset.pattern.permute.xlu0 6
  %2106 = vperm.xlu0 %2105, %v268
  %v2107 = vpop.permute.xlu0 %2106
  %2109 = vset.pattern.permute.xlu0 6
  %2110 = vperm.xlu0 %2109, %v269
  %v2111 = vpop.permute.xlu0 %2110
  %2113 = vset.pattern.permute.xlu0 6
  %2114 = vperm.xlu0 %2113, %v270
  %v2115 = vpop.permute.xlu0 %2114
  %v2121 = vunpack.c.l.b16 %v2095
  %v2122 = vunpack.c.l.b16 %v2096
  %v2123 = vunpack.c.l.b16 %v2097
  %v2124 = vunpack.c.l.b16 %v2098
  %v2125 = vpack.c.b16 %v2122, %v2121
  %v2126 = vpack.c.b16 %v2124, %v2123
  %v2128 = vsel %vm93, %v2125, 0
  %v2131 = vsel %vm93, %v2126, 0
  %2133 = vmatprep.subr.bf16.mxu0 0
  %2134 = vmatpush1.bf16.msra.mxu0 %v2099
  %2135 = vmatprep.subr.bf16.mxu0 0
  %2136 = vmatpush1.bf16.msra.mxu0 %v2100
  %2137 = vmatprep.subr.bf16.mxu0 0
  %2138 = vmatpush1.bf16.msra.mxu0 0
  %2139 = vmatprep.subr.bf16.mxu0 0
  %2140 = vmatpush1.bf16.msra.mxu0 0
  %2141 = vmatprep.subr.bf16.mxu0 0
  %2142 = vmatpush1.bf16.msra.mxu0 0
  %2143 = vmatprep.subr.bf16.mxu0 0
  %2144 = vmatpush1.bf16.msra.mxu0 0
  %2145 = vmatprep.subr.bf16.mxu0 0
  %2146 = vmatpush1.bf16.msra.mxu0 0
  %2147 = vmatprep.subr.bf16.mxu0 0
  %2148 = vmatpush1.bf16.msra.mxu0 0
  %2149 = vmatprep.subr.bf16.mxu0 0
  %2150 = vmatpush1.bf16.msra.mxu0 0
  %2151 = vmatprep.subr.bf16.mxu0 0
  %2152 = vmatpush1.bf16.msra.mxu0 0
  %2153 = vmatprep.subr.bf16.mxu0 0
  %2154 = vmatpush1.bf16.msra.mxu0 0
  %2155 = vmatprep.subr.bf16.mxu0 0
  %2156 = vmatpush1.bf16.msra.mxu0 0
  %2157 = vmatprep.subr.bf16.mxu0 0
  %2158 = vmatpush1.bf16.msra.mxu0 0
  %2159 = vmatprep.subr.bf16.mxu0 0
  %2160 = vmatpush1.bf16.msra.mxu0 0
  %2161 = vmatprep.subr.bf16.mxu0 0
  %2162 = vmatpush1.bf16.msra.mxu0 0
  %2163 = vmatprep.subr.bf16.mxu0 0
  %2164 = vmatpush1.bf16.msra.mxu0 0
  %2165 = vmatprep.mubr.bf16.mxu0 0
  %2166 = vmatmul.mubr.bf16.gmra.mrb[0].mxu0 %v2128
  %v2167 = vpop.f32.mrb[0].mxu0
  %v2168 = vadd.f32 %v2103, %v2167
  %v2169 = vpop.f32.mrb[0].mxu0
  %v2170 = vpop.f32.mrb[0].mxu0
  %v2171 = vadd.f32 %v2107, %v2170
  %v2172 = vpop.f32.mrb[0].mxu0
  %2173 = vmatprep.mubr.bf16.mxu0 0
  %2174 = vmatmul.mubr.bf16.gmra.mrb[0].mxu0 %v2131
  %v2175 = vpop.f32.mrb[0].mxu0
  %v2176 = vadd.f32 %v2111, %v2175
  %v2177 = vpop.f32.mrb[0].mxu0
  %v2178 = vpop.f32.mrb[0].mxu0
  %v2179 = vadd.f32 %v2115, %v2178
  %v2180 = vpop.f32.mrb[0].mxu0
  %2181 = vdwg.mxu0
  %v2182 = vadd.f32 %v1890, %v2168
  %v2183 = vadd.f32 %v1891, %v2171
  %v2184 = vadd.f32 %v1892, %v2176
  %v2185 = vadd.f32 %v1893, %v2179
  %s2186 = scalar_lea.vmem %s1, 336
  %v2187 = vld [vmem:[%s2186] sm:$0xf]
  %v2188 = vld [vmem:[%s2186 + $0x4] sm:$0xf]
  %v2189 = vld [vmem:[%s2186 + $0x8] sm:$0xf]
  %v2190 = vld [vmem:[%s2186 + $0xc] sm:$0xf]
  %v2191 = vld [vmem:[%s2186 + $0x10] sm:$0xf]
  %v2192 = vld [vmem:[%s2186 + $0x14] sm:$0xf]
  %v2193 = vld [vmem:[%s2186 + $0x18] sm:$0xf]
  %v2194 = vld [vmem:[%s2186 + $0x1c] sm:$0xf]
  %v2195 = vld [vmem:[%s2186 + $0x20] sm:$0xf]
  %v2196 = vld [vmem:[%s2186 + $0x24] sm:$0xf]
  %v2197 = vld [vmem:[%s2186 + $0x28] sm:$0xf]
  %v2198 = vld [vmem:[%s2186 + $0x2c] sm:$0xf]
  %v2199 = vpack.c.bf16 %v2183, %v2182
  %v2200 = vpack.c.bf16 %v2185, %v2184
  %v2213 = vunpack.c.l.b16 %v2187
  %v2214 = vunpack.c.l.b16 %v2188
  %v2215 = vunpack.c.l.b16 %v2189
  %v2216 = vunpack.c.l.b16 %v2190
  %v2217 = vunpack.c.l.b16 %v2191
  %v2218 = vunpack.c.l.b16 %v2192
  %v2219 = vunpack.c.l.b16 %v2193
  %v2220 = vunpack.c.l.b16 %v2194
  %v2221 = vunpack.c.l.b16 %v2195
  %v2222 = vunpack.c.l.b16 %v2196
  %v2223 = vunpack.c.l.b16 %v2197
  %v2224 = vunpack.c.l.b16 %v2198
  %v2225 = vpack.c.b16 %v2214, %v2213
  %v2226 = vpack.c.b16 %v2216, %v2215
  %v2227 = vpack.c.b16 %v2218, %v2217
  %v2228 = vpack.c.b16 %v2220, %v2219
  %v2229 = vpack.c.b16 %v2222, %v2221
  %v2230 = vpack.c.b16 %v2224, %v2223
  %v2232 = vsel %vm93, %v2225, 0
  %v2235 = vsel %vm93, %v2226, 0
  %v2238 = vsel %vm93, %v2227, 0
  %v2241 = vsel %vm93, %v2228, 0
  %v2244 = vsel %vm93, %v2229, 0
  %v2247 = vsel %vm93, %v2230, 0
  %2249 = vmatprep.subr.bf16.mxu0 0
  %2250 = vmatpush1.bf16.msra.mxu0 %v2199
  %2251 = vmatprep.subr.bf16.mxu0 0
  %2252 = vmatpush1.bf16.msra.mxu0 %v2200
  %2253 = vmatprep.subr.bf16.mxu0 0
  %2254 = vmatpush1.bf16.msra.mxu0 0
  %2255 = vmatprep.subr.bf16.mxu0 0
  %2256 = vmatpush1.bf16.msra.mxu0 0
  %2257 = vmatprep.subr.bf16.mxu0 0
  %2258 = vmatpush1.bf16.msra.mxu0 0
  %2259 = vmatprep.subr.bf16.mxu0 0
  %2260 = vmatpush1.bf16.msra.mxu0 0
  %2261 = vmatprep.subr.bf16.mxu0 0
  %2262 = vmatpush1.bf16.msra.mxu0 0
  %2263 = vmatprep.subr.bf16.mxu0 0
  %2264 = vmatpush1.bf16.msra.mxu0 0
  %2265 = vmatprep.subr.bf16.mxu0 0
  %2266 = vmatpush1.bf16.msra.mxu0 0
  %2267 = vmatprep.subr.bf16.mxu0 0
  %2268 = vmatpush1.bf16.msra.mxu0 0
  %2269 = vmatprep.subr.bf16.mxu0 0
  %2270 = vmatpush1.bf16.msra.mxu0 0
  %2271 = vmatprep.subr.bf16.mxu0 0
  %2272 = vmatpush1.bf16.msra.mxu0 0
  %2273 = vmatprep.subr.bf16.mxu0 0
  %2274 = vmatpush1.bf16.msra.mxu0 0
  %2275 = vmatprep.subr.bf16.mxu0 0
  %2276 = vmatpush1.bf16.msra.mxu0 0
  %2277 = vmatprep.subr.bf16.mxu0 0
  %2278 = vmatpush1.bf16.msra.mxu0 0
  %2279 = vmatprep.subr.bf16.mxu0 0
  %2280 = vmatpush1.bf16.msra.mxu0 0
  %2281 = vmatprep.mubr.bf16.mxu0 0
  %2282 = vmatmul.mubr.bf16.gmra.mrb[0].mxu0 %v2232
  %v2283 = vpop.f32.mrb[0].mxu0
  %v2284 = vadd.f32 0.0, %v2283
  %v2285 = vpop.f32.mrb[0].mxu0
  %v2286 = vpop.f32.mrb[0].mxu0
  %v2287 = vadd.f32 0.0, %v2286
  %v2288 = vpop.f32.mrb[0].mxu0
  %2289 = vmatprep.mubr.bf16.mxu0 0
  %2290 = vmatmul.mubr.bf16.gmra.mrb[0].mxu0 %v2235
  %v2291 = vpop.f32.mrb[0].mxu0
  %v2292 = vadd.f32 0.0, %v2291
  %v2293 = vpop.f32.mrb[0].mxu0
  %v2294 = vpop.f32.mrb[0].mxu0
  %v2295 = vadd.f32 0.0, %v2294
  %v2296 = vpop.f32.mrb[0].mxu0
  %2297 = vmatprep.mubr.bf16.mxu0 0
  %2298 = vmatmul.mubr.bf16.gmra.mrb[0].mxu0 %v2238
  %v2299 = vpop.f32.mrb[0].mxu0
  %v2300 = vadd.f32 0.0, %v2299
  %v2301 = vpop.f32.mrb[0].mxu0
  %v2302 = vpop.f32.mrb[0].mxu0
  %v2303 = vadd.f32 0.0, %v2302
  %v2304 = vpop.f32.mrb[0].mxu0
  %2305 = vmatprep.mubr.bf16.mxu0 0
  %2306 = vmatmul.mubr.bf16.gmra.mrb[0].mxu0 %v2241
  %v2307 = vpop.f32.mrb[0].mxu0
  %v2308 = vadd.f32 0.0, %v2307
  %v2309 = vpop.f32.mrb[0].mxu0
  %v2310 = vpop.f32.mrb[0].mxu0
  %v2311 = vadd.f32 0.0, %v2310
  %v2312 = vpop.f32.mrb[0].mxu0
  %2313 = vmatprep.mubr.bf16.mxu0 0
  %2314 = vmatmul.mubr.bf16.gmra.mrb[0].mxu0 %v2244
  %v2315 = vpop.f32.mrb[0].mxu0
  %v2316 = vadd.f32 0.0, %v2315
  %v2317 = vpop.f32.mrb[0].mxu0
  %v2318 = vpop.f32.mrb[0].mxu0
  %v2319 = vadd.f32 0.0, %v2318
  %v2320 = vpop.f32.mrb[0].mxu0
  %2321 = vmatprep.mubr.bf16.mxu0 0
  %2322 = vmatmul.mubr.bf16.gmra.mrb[0].mxu0 %v2247
  %v2323 = vpop.f32.mrb[0].mxu0
  %v2324 = vadd.f32 0.0, %v2323
  %v2325 = vpop.f32.mrb[0].mxu0
  %v2326 = vpop.f32.mrb[0].mxu0
  %v2327 = vadd.f32 0.0, %v2326
  %v2328 = vpop.f32.mrb[0].mxu0
  %2329 = vdwg.mxu0
  %2330 = vrot.lane.b32.xlu0 %v2284, 4
  %v2331 = vpop.permute.xlu0 %2330
  %2332 = vrot.lane.b32.xlu0 %v2287, 4
  %v2333 = vpop.permute.xlu0 %2332
  %2334 = vrot.lane.b32.xlu0 %v2292, 4
  %v2335 = vpop.permute.xlu0 %2334
  %2336 = vrot.lane.b32.xlu0 %v2295, 4
  %v2337 = vpop.permute.xlu0 %2336
  %v2338 = vsel %vm513, %v2331, 0.0
  %v2339 = vsel %vm513, %v2333, 0.0
  %v2340 = vsel %vm513, %v2335, 0.0
  %v2341 = vsel %vm513, %v2337, 0.0
  %2342 = vset.pattern.permute.xlu0 7
  %2343 = vperm.xlu0 %2342, %v193
  %v2344 = vpop.permute.xlu0 %2343
  %2346 = vset.pattern.permute.xlu0 7
  %2347 = vperm.xlu0 %2346, %v194
  %v2348 = vpop.permute.xlu0 %2347
  %2350 = vset.pattern.permute.xlu0 7
  %2351 = vperm.xlu0 %2350, %v195
  %v2352 = vpop.permute.xlu0 %2351
  %2354 = vset.pattern.permute.xlu0 7
  %2355 = vperm.xlu0 %2354, %v196
  %v2356 = vpop.permute.xlu0 %2355
  %v2358 = vadd.f32 %v2344, %v2338
  %v2359 = vadd.f32 %v2348, %v2339
  %v2360 = vadd.f32 %v2352, %v2340
  %v2361 = vadd.f32 %v2356, %v2341
  %2362 = vrot.lane.b32.xlu0 %v2300, 2
  %v2363 = vpop.permute.xlu0 %2362
  %2364 = vrot.lane.b32.xlu0 %v2303, 2
  %v2365 = vpop.permute.xlu0 %2364
  %2366 = vrot.lane.b32.xlu0 %v2308, 2
  %v2367 = vpop.permute.xlu0 %2366
  %2368 = vrot.lane.b32.xlu0 %v2311, 2
  %v2369 = vpop.permute.xlu0 %2368
  %v2370 = vsel %vm206, %v2363, 0.0
  %v2371 = vsel %vm206, %v2365, 0.0
  %v2372 = vsel %vm206, %v2367, 0.0
  %v2373 = vsel %vm206, %v2369, 0.0
  %v2374 = vadd.f32 %v2358, %v2370
  %v2375 = vadd.f32 %v2359, %v2371
  %v2376 = vadd.f32 %v2360, %v2372
  %v2377 = vadd.f32 %v2361, %v2373
  %v2378 = vadd.f32 %v2374, %v2316
  %v2379 = vadd.f32 %v2375, %v2319
  %v2380 = vadd.f32 %v2376, %v2324
  %v2381 = vadd.f32 %v2377, %v2327
  %v2382 = vmax.f32 %v2378, 0.0
  %v2383 = vmax.f32 %v2379, 0.0
  %v2384 = vmax.f32 %v2380, 0.0
  %v2385 = vmax.f32 %v2381, 0.0
  %s2386 = scalar_lea.vmem %s3, 112
  %v2387 = vld [vmem:[%s2386] sm:$0xf]
  %v2388 = vld [vmem:[%s2386 + $0x4] sm:$0xf]
  %v2389 = vld [vmem:[%s2386 + $0x8] sm:$0xf]
  %v2390 = vld [vmem:[%s2386 + $0xc] sm:$0xf]
  %v2391 = vpack.c.bf16 %v2383, %v2382
  %v2392 = vpack.c.bf16 %v2385, %v2384
  %2393 = vset.pattern.permute.xlu0 7
  %2394 = vperm.xlu0 %2393, %v267
  %v2395 = vpop.permute.xlu0 %2394
  %2397 = vset.pattern.permute.xlu0 7
  %2398 = vperm.xlu0 %2397, %v268
  %v2399 = vpop.permute.xlu0 %2398
  %2401 = vset.pattern.permute.xlu0 7
  %2402 = vperm.xlu0 %2401, %v269
  %v2403 = vpop.permute.xlu0 %2402
  %2405 = vset.pattern.permute.xlu0 7
  %2406 = vperm.xlu0 %2405, %v270
  %v2407 = vpop.permute.xlu0 %2406
  %v2413 = vunpack.c.l.b16 %v2387
  %v2414 = vunpack.c.l.b16 %v2388
  %v2415 = vunpack.c.l.b16 %v2389
  %v2416 = vunpack.c.l.b16 %v2390
  %v2417 = vpack.c.b16 %v2414, %v2413
  %v2418 = vpack.c.b16 %v2416, %v2415
  %v2420 = vsel %vm93, %v2417, 0
  %v2423 = vsel %vm93, %v2418, 0
  %2425 = vmatprep.subr.bf16.mxu0 0
  %2426 = vmatpush1.bf16.msra.mxu0 %v2391
  %2427 = vmatprep.subr.bf16.mxu0 0
  %2428 = vmatpush1.bf16.msra.mxu0 %v2392
  %2429 = vmatprep.subr.bf16.mxu0 0
  %2430 = vmatpush1.bf16.msra.mxu0 0
  %2431 = vmatprep.subr.bf16.mxu0 0
  %2432 = vmatpush1.bf16.msra.mxu0 0
  %2433 = vmatprep.subr.bf16.mxu0 0
  %2434 = vmatpush1.bf16.msra.mxu0 0
  %2435 = vmatprep.subr.bf16.mxu0 0
  %2436 = vmatpush1.bf16.msra.mxu0 0
  %2437 = vmatprep.subr.bf16.mxu0 0
  %2438 = vmatpush1.bf16.msra.mxu0 0
  %2439 = vmatprep.subr.bf16.mxu0 0
  %2440 = vmatpush1.bf16.msra.mxu0 0
  %2441 = vmatprep.subr.bf16.mxu0 0
  %2442 = vmatpush1.bf16.msra.mxu0 0
  %2443 = vmatprep.subr.bf16.mxu0 0
  %2444 = vmatpush1.bf16.msra.mxu0 0
  %2445 = vmatprep.subr.bf16.mxu0 0
  %2446 = vmatpush1.bf16.msra.mxu0 0
  %2447 = vmatprep.subr.bf16.mxu0 0
  %2448 = vmatpush1.bf16.msra.mxu0 0
  %2449 = vmatprep.subr.bf16.mxu0 0
  %2450 = vmatpush1.bf16.msra.mxu0 0
  %2451 = vmatprep.subr.bf16.mxu0 0
  %2452 = vmatpush1.bf16.msra.mxu0 0
  %2453 = vmatprep.subr.bf16.mxu0 0
  %2454 = vmatpush1.bf16.msra.mxu0 0
  %2455 = vmatprep.subr.bf16.mxu0 0
  %2456 = vmatpush1.bf16.msra.mxu0 0
  %2457 = vmatprep.mubr.bf16.mxu0 0
  %2458 = vmatmul.mubr.bf16.gmra.mrb[0].mxu0 %v2420
  %v2459 = vpop.f32.mrb[0].mxu0
  %v2460 = vadd.f32 %v2395, %v2459
  %v2461 = vpop.f32.mrb[0].mxu0
  %v2462 = vpop.f32.mrb[0].mxu0
  %v2463 = vadd.f32 %v2399, %v2462
  %v2464 = vpop.f32.mrb[0].mxu0
  %2465 = vmatprep.mubr.bf16.mxu0 0
  %2466 = vmatmul.mubr.bf16.gmra.mrb[0].mxu0 %v2423
  %v2467 = vpop.f32.mrb[0].mxu0
  %v2468 = vadd.f32 %v2403, %v2467
  %v2469 = vpop.f32.mrb[0].mxu0
  %v2470 = vpop.f32.mrb[0].mxu0
  %v2471 = vadd.f32 %v2407, %v2470
  %v2472 = vpop.f32.mrb[0].mxu0
  %2473 = vdwg.mxu0
  %v2474 = vadd.f32 %v2182, %v2460
  %v2475 = vadd.f32 %v2183, %v2463
  %v2476 = vadd.f32 %v2184, %v2468
  %v2477 = vadd.f32 %v2185, %v2471
  %s2478 = scalar_lea.vmem %s1, 384
  %v2479 = vld [vmem:[%s2478] sm:$0xf]
  %v2480 = vld [vmem:[%s2478 + $0x4] sm:$0xf]
  %v2481 = vld [vmem:[%s2478 + $0x8] sm:$0xf]
  %v2482 = vld [vmem:[%s2478 + $0xc] sm:$0xf]
  %v2483 = vld [vmem:[%s2478 + $0x10] sm:$0xf]
  %v2484 = vld [vmem:[%s2478 + $0x14] sm:$0xf]
  %v2485 = vld [vmem:[%s2478 + $0x18] sm:$0xf]
  %v2486 = vld [vmem:[%s2478 + $0x1c] sm:$0xf]
  %v2487 = vld [vmem:[%s2478 + $0x20] sm:$0xf]
  %v2488 = vld [vmem:[%s2478 + $0x24] sm:$0xf]
  %v2489 = vld [vmem:[%s2478 + $0x28] sm:$0xf]
  %v2490 = vld [vmem:[%s2478 + $0x2c] sm:$0xf]
  %v2491 = vpack.c.bf16 %v2475, %v2474
  %v2492 = vpack.c.bf16 %v2477, %v2476
  %v2505 = vunpack.c.l.b16 %v2479
  %v2506 = vunpack.c.l.b16 %v2480
  %v2507 = vunpack.c.l.b16 %v2481
  %v2508 = vunpack.c.l.b16 %v2482
  %v2509 = vunpack.c.l.b16 %v2483
  %v2510 = vunpack.c.l.b16 %v2484
  %v2511 = vunpack.c.l.b16 %v2485
  %v2512 = vunpack.c.l.b16 %v2486
  %v2513 = vunpack.c.l.b16 %v2487
  %v2514 = vunpack.c.l.b16 %v2488
  %v2515 = vunpack.c.l.b16 %v2489
  %v2516 = vunpack.c.l.b16 %v2490
  %v2517 = vpack.c.b16 %v2506, %v2505
  %v2518 = vpack.c.b16 %v2508, %v2507
  %v2519 = vpack.c.b16 %v2510, %v2509
  %v2520 = vpack.c.b16 %v2512, %v2511
  %v2521 = vpack.c.b16 %v2514, %v2513
  %v2522 = vpack.c.b16 %v2516, %v2515
  %v2524 = vsel %vm93, %v2517, 0
  %v2527 = vsel %vm93, %v2518, 0
  %v2530 = vsel %vm93, %v2519, 0
  %v2533 = vsel %vm93, %v2520, 0
  %v2536 = vsel %vm93, %v2521, 0
  %v2539 = vsel %vm93, %v2522, 0
  %2541 = vmatprep.subr.bf16.mxu0 0
  %2542 = vmatpush1.bf16.msra.mxu0 %v2491
  %2543 = vmatprep.subr.bf16.mxu0 0
  %2544 = vmatpush1.bf16.msra.mxu0 %v2492
  %2545 = vmatprep.subr.bf16.mxu0 0
  %2546 = vmatpush1.bf16.msra.mxu0 0
  %2547 = vmatprep.subr.bf16.mxu0 0
  %2548 = vmatpush1.bf16.msra.mxu0 0
  %2549 = vmatprep.subr.bf16.mxu0 0
  %2550 = vmatpush1.bf16.msra.mxu0 0
  %2551 = vmatprep.subr.bf16.mxu0 0
  %2552 = vmatpush1.bf16.msra.mxu0 0
  %2553 = vmatprep.subr.bf16.mxu0 0
  %2554 = vmatpush1.bf16.msra.mxu0 0
  %2555 = vmatprep.subr.bf16.mxu0 0
  %2556 = vmatpush1.bf16.msra.mxu0 0
  %2557 = vmatprep.subr.bf16.mxu0 0
  %2558 = vmatpush1.bf16.msra.mxu0 0
  %2559 = vmatprep.subr.bf16.mxu0 0
  %2560 = vmatpush1.bf16.msra.mxu0 0
  %2561 = vmatprep.subr.bf16.mxu0 0
  %2562 = vmatpush1.bf16.msra.mxu0 0
  %2563 = vmatprep.subr.bf16.mxu0 0
  %2564 = vmatpush1.bf16.msra.mxu0 0
  %2565 = vmatprep.subr.bf16.mxu0 0
  %2566 = vmatpush1.bf16.msra.mxu0 0
  %2567 = vmatprep.subr.bf16.mxu0 0
  %2568 = vmatpush1.bf16.msra.mxu0 0
  %2569 = vmatprep.subr.bf16.mxu0 0
  %2570 = vmatpush1.bf16.msra.mxu0 0
  %2571 = vmatprep.subr.bf16.mxu0 0
  %2572 = vmatpush1.bf16.msra.mxu0 0
  %2573 = vmatprep.mubr.bf16.mxu0 0
  %2574 = vmatmul.mubr.bf16.gmra.mrb[0].mxu0 %v2524
  %v2575 = vpop.f32.mrb[0].mxu0
  %v2576 = vadd.f32 0.0, %v2575
  %v2577 = vpop.f32.mrb[0].mxu0
  %v2578 = vpop.f32.mrb[0].mxu0
  %v2579 = vadd.f32 0.0, %v2578
  %v2580 = vpop.f32.mrb[0].mxu0
  %2581 = vmatprep.mubr.bf16.mxu0 0
  %2582 = vmatmul.mubr.bf16.gmra.mrb[0].mxu0 %v2527
  %v2583 = vpop.f32.mrb[0].mxu0
  %v2584 = vadd.f32 0.0, %v2583
  %v2585 = vpop.f32.mrb[0].mxu0
  %v2586 = vpop.f32.mrb[0].mxu0
  %v2587 = vadd.f32 0.0, %v2586
  %v2588 = vpop.f32.mrb[0].mxu0
  %2589 = vmatprep.mubr.bf16.mxu0 0
  %2590 = vmatmul.mubr.bf16.gmra.mrb[0].mxu0 %v2530
  %v2591 = vpop.f32.mrb[0].mxu0
  %v2592 = vadd.f32 0.0, %v2591
  %v2593 = vpop.f32.mrb[0].mxu0
  %v2594 = vpop.f32.mrb[0].mxu0
  %v2595 = vadd.f32 0.0, %v2594
  %v2596 = vpop.f32.mrb[0].mxu0
  %2597 = vmatprep.mubr.bf16.mxu0 0
  %2598 = vmatmul.mubr.bf16.gmra.mrb[0].mxu0 %v2533
  %v2599 = vpop.f32.mrb[0].mxu0
  %v2600 = vadd.f32 0.0, %v2599
  %v2601 = vpop.f32.mrb[0].mxu0
  %v2602 = vpop.f32.mrb[0].mxu0
  %v2603 = vadd.f32 0.0, %v2602
  %v2604 = vpop.f32.mrb[0].mxu0
  %2605 = vmatprep.mubr.bf16.mxu0 0
  %2606 = vmatmul.mubr.bf16.gmra.mrb[0].mxu0 %v2536
  %v2607 = vpop.f32.mrb[0].mxu0
  %v2608 = vadd.f32 0.0, %v2607
  %v2609 = vpop.f32.mrb[0].mxu0
  %v2610 = vpop.f32.mrb[0].mxu0
  %v2611 = vadd.f32 0.0, %v2610
  %v2612 = vpop.f32.mrb[0].mxu0
  %2613 = vmatprep.mubr.bf16.mxu0 0
  %2614 = vmatmul.mubr.bf16.gmra.mrb[0].mxu0 %v2539
  %v2615 = vpop.f32.mrb[0].mxu0
  %v2616 = vadd.f32 0.0, %v2615
  %v2617 = vpop.f32.mrb[0].mxu0
  %v2618 = vpop.f32.mrb[0].mxu0
  %v2619 = vadd.f32 0.0, %v2618
  %v2620 = vpop.f32.mrb[0].mxu0
  %2621 = vdwg.mxu0
  %2622 = vrot.lane.b32.xlu0 %v2576, 8
  %v2623 = vpop.permute.xlu0 %2622
  %2624 = vrot.lane.b32.xlu0 %v2579, 8
  %v2625 = vpop.permute.xlu0 %2624
  %2626 = vrot.lane.b32.xlu0 %v2584, 8
  %v2627 = vpop.permute.xlu0 %2626
  %2628 = vrot.lane.b32.xlu0 %v2587, 8
  %v2629 = vpop.permute.xlu0 %2628
  %v2630 = vsel %vm807, %v2623, 0.0
  %v2631 = vsel %vm807, %v2625, 0.0
  %v2632 = vsel %vm807, %v2627, 0.0
  %v2633 = vsel %vm807, %v2629, 0.0
  %2634 = vset.pattern.permute.xlu0 8
  %2635 = vperm.xlu0 %2634, %v193
  %v2636 = vpop.permute.xlu0 %2635
  %2638 = vset.pattern.permute.xlu0 8
  %2639 = vperm.xlu0 %2638, %v194
  %v2640 = vpop.permute.xlu0 %2639
  %2642 = vset.pattern.permute.xlu0 8
  %2643 = vperm.xlu0 %2642, %v195
  %v2644 = vpop.permute.xlu0 %2643
  %2646 = vset.pattern.permute.xlu0 8
  %2647 = vperm.xlu0 %2646, %v196
  %v2648 = vpop.permute.xlu0 %2647
  %v2650 = vadd.f32 %v2636, %v2630
  %v2651 = vadd.f32 %v2640, %v2631
  %v2652 = vadd.f32 %v2644, %v2632
  %v2653 = vadd.f32 %v2648, %v2633
  %2654 = vrot.lane.b32.xlu0 %v2592, 4
  %v2655 = vpop.permute.xlu0 %2654
  %2656 = vrot.lane.b32.xlu0 %v2595, 4
  %v2657 = vpop.permute.xlu0 %2656
  %2658 = vrot.lane.b32.xlu0 %v2600, 4
  %v2659 = vpop.permute.xlu0 %2658
  %2660 = vrot.lane.b32.xlu0 %v2603, 4
  %v2661 = vpop.permute.xlu0 %2660
  %v2662 = vsel %vm513, %v2655, 0.0
  %v2663 = vsel %vm513, %v2657, 0.0
  %v2664 = vsel %vm513, %v2659, 0.0
  %v2665 = vsel %vm513, %v2661, 0.0
  %v2666 = vadd.f32 %v2650, %v2662
  %v2667 = vadd.f32 %v2651, %v2663
  %v2668 = vadd.f32 %v2652, %v2664
  %v2669 = vadd.f32 %v2653, %v2665
  %v2670 = vadd.f32 %v2666, %v2608
  %v2671 = vadd.f32 %v2667, %v2611
  %v2672 = vadd.f32 %v2668, %v2616
  %v2673 = vadd.f32 %v2669, %v2619
  %v2674 = vmax.f32 %v2670, 0.0
  %v2675 = vmax.f32 %v2671, 0.0
  %v2676 = vmax.f32 %v2672, 0.0
  %v2677 = vmax.f32 %v2673, 0.0
  %s2678 = scalar_lea.vmem %s3, 128
  %v2679 = vld [vmem:[%s2678] sm:$0xf]
  %v2680 = vld [vmem:[%s2678 + $0x4] sm:$0xf]
  %v2681 = vld [vmem:[%s2678 + $0x8] sm:$0xf]
  %v2682 = vld [vmem:[%s2678 + $0xc] sm:$0xf]
  %v2683 = vpack.c.bf16 %v2675, %v2674
  %v2684 = vpack.c.bf16 %v2677, %v2676
  %2685 = vset.pattern.permute.xlu0 8
  %2686 = vperm.xlu0 %2685, %v267
  %v2687 = vpop.permute.xlu0 %2686
  %2689 = vset.pattern.permute.xlu0 8
  %2690 = vperm.xlu0 %2689, %v268
  %v2691 = vpop.permute.xlu0 %2690
  %2693 = vset.pattern.permute.xlu0 8
  %2694 = vperm.xlu0 %2693, %v269
  %v2695 = vpop.permute.xlu0 %2694
  %2697 = vset.pattern.permute.xlu0 8
  %2698 = vperm.xlu0 %2697, %v270
  %v2699 = vpop.permute.xlu0 %2698
  %v2705 = vunpack.c.l.b16 %v2679
  %v2706 = vunpack.c.l.b16 %v2680
  %v2707 = vunpack.c.l.b16 %v2681
  %v2708 = vunpack.c.l.b16 %v2682
  %v2709 = vpack.c.b16 %v2706, %v2705
  %v2710 = vpack.c.b16 %v2708, %v2707
  %v2712 = vsel %vm93, %v2709, 0
  %v2715 = vsel %vm93, %v2710, 0
  %2717 = vmatprep.subr.bf16.mxu0 0
  %2718 = vmatpush1.bf16.msra.mxu0 %v2683
  %2719 = vmatprep.subr.bf16.mxu0 0
  %2720 = vmatpush1.bf16.msra.mxu0 %v2684
  %2721 = vmatprep.subr.bf16.mxu0 0
  %2722 = vmatpush1.bf16.msra.mxu0 0
  %2723 = vmatprep.subr.bf16.mxu0 0
  %2724 = vmatpush1.bf16.msra.mxu0 0
  %2725 = vmatprep.subr.bf16.mxu0 0
  %2726 = vmatpush1.bf16.msra.mxu0 0
  %2727 = vmatprep.subr.bf16.mxu0 0
  %2728 = vmatpush1.bf16.msra.mxu0 0
  %2729 = vmatprep.subr.bf16.mxu0 0
  %2730 = vmatpush1.bf16.msra.mxu0 0
  %2731 = vmatprep.subr.bf16.mxu0 0
  %2732 = vmatpush1.bf16.msra.mxu0 0
  %2733 = vmatprep.subr.bf16.mxu0 0
  %2734 = vmatpush1.bf16.msra.mxu0 0
  %2735 = vmatprep.subr.bf16.mxu0 0
  %2736 = vmatpush1.bf16.msra.mxu0 0
  %2737 = vmatprep.subr.bf16.mxu0 0
  %2738 = vmatpush1.bf16.msra.mxu0 0
  %2739 = vmatprep.subr.bf16.mxu0 0
  %2740 = vmatpush1.bf16.msra.mxu0 0
  %2741 = vmatprep.subr.bf16.mxu0 0
  %2742 = vmatpush1.bf16.msra.mxu0 0
  %2743 = vmatprep.subr.bf16.mxu0 0
  %2744 = vmatpush1.bf16.msra.mxu0 0
  %2745 = vmatprep.subr.bf16.mxu0 0
  %2746 = vmatpush1.bf16.msra.mxu0 0
  %2747 = vmatprep.subr.bf16.mxu0 0
  %2748 = vmatpush1.bf16.msra.mxu0 0
  %2749 = vmatprep.mubr.bf16.mxu0 0
  %2750 = vmatmul.mubr.bf16.gmra.mrb[0].mxu0 %v2712
  %v2751 = vpop.f32.mrb[0].mxu0
  %v2752 = vadd.f32 %v2687, %v2751
  %v2753 = vpop.f32.mrb[0].mxu0
  %v2754 = vpop.f32.mrb[0].mxu0
  %v2755 = vadd.f32 %v2691, %v2754
  %v2756 = vpop.f32.mrb[0].mxu0
  %2757 = vmatprep.mubr.bf16.mxu0 0
  %2758 = vmatmul.mubr.bf16.gmra.mrb[0].mxu0 %v2715
  %v2759 = vpop.f32.mrb[0].mxu0
  %v2760 = vadd.f32 %v2695, %v2759
  %v2761 = vpop.f32.mrb[0].mxu0
  %v2762 = vpop.f32.mrb[0].mxu0
  %v2763 = vadd.f32 %v2699, %v2762
  %v2764 = vpop.f32.mrb[0].mxu0
  %2765 = vdwg.mxu0
  %v2766 = vadd.f32 %v2474, %v2752
  %v2767 = vadd.f32 %v2475, %v2755
  %v2768 = vadd.f32 %v2476, %v2760
  %v2769 = vadd.f32 %v2477, %v2763
  %v2770 = vmax.f32 %v2766, %v2767
  %v2771 = vmax.f32 %v2768, %v2769
  %v2772 = vmax.f32 %v2770, %v2771
  %v2773 = vrot.slane %v2772, 4
  %v2774 = vmax.f32 %v2772, %v2773
  %v2775 = vrot.slane %v2774, 2
  %v2776 = vmax.f32 %v2774, %v2775
  %v2777 = vrot.slane %v2776, 1
  %v2778 = vmax.f32 %v2776, %v2777
  %v2779 = vsub.f32 %v2766, %v2778
  %v2780 = vsub.f32 %v2767, %v2778
  %v2781 = vsub.f32 %v2768, %v2778
  %v2782 = vsub.f32 %v2769, %v2778
  %v2783 = vmul.f32 %v2779, 1.442695
  %v2784 = vpow.pop %v2783
  %v2785 = vmul.f32 %v2780, 1.442695
  %v2786 = vpow.pop %v2785
  %v2787 = vmul.f32 %v2781, 1.442695
  %v2788 = vpow.pop %v2787
  %v2789 = vmul.f32 %v2782, 1.442695
  %v2790 = vpow.pop %v2789
  %v2791 = vadd.f32 %v2784, %v2786
  %v2792 = vadd.f32 %v2791, %v2788
  %v2793 = vadd.f32 %v2792, %v2790
  %v2794 = vrot.slane %v2793, 4
  %v2795 = vadd.f32 %v2793, %v2794
  %v2796 = vrot.slane %v2795, 2
  %v2797 = vadd.f32 %v2795, %v2796
  %v2798 = vrot.slane %v2797, 1
  %v2799 = vadd.f32 %v2797, %v2798
  %v2800 = vrcp.pop %v2799
  %v2801 = vmul.f32 %v2784, %v2800
  %v2802 = vmul.f32 %v2786, %v2800
  %v2803 = vmul.f32 %v2788, %v2800
  %v2804 = vmul.f32 %v2790, %v2800
  %s2805 = scalar_lea.vmem %s1, 432
  %v2806 = vld [vmem:[%s2805] sm:$0xf]
  %v2807 = vld [vmem:[%s2805 + $0x4] sm:$0xf]
  %v2808 = vld [vmem:[%s2805 + $0x8] sm:$0xf]
  %v2809 = vld [vmem:[%s2805 + $0xc] sm:$0xf]
  %v2810 = vld [vmem:[%s2805 + $0x10] sm:$0xf]
  %v2811 = vld [vmem:[%s2805 + $0x14] sm:$0xf]
  %v2812 = vld [vmem:[%s2805 + $0x18] sm:$0xf]
  %v2813 = vld [vmem:[%s2805 + $0x1c] sm:$0xf]
  %v2814 = vld [vmem:[%s2805 + $0x20] sm:$0xf]
  %v2815 = vld [vmem:[%s2805 + $0x24] sm:$0xf]
  %v2816 = vld [vmem:[%s2805 + $0x28] sm:$0xf]
  %v2817 = vld [vmem:[%s2805 + $0x2c] sm:$0xf]
  %v2818 = vpack.c.bf16 %v2802, %v2801
  %v2819 = vpack.c.bf16 %v2804, %v2803
  %v2832 = vunpack.c.l.b16 %v2806
  %v2833 = vunpack.c.l.b16 %v2807
  %v2834 = vunpack.c.l.b16 %v2808
  %v2835 = vunpack.c.l.b16 %v2809
  %v2836 = vunpack.c.l.b16 %v2810
  %v2837 = vunpack.c.l.b16 %v2811
  %v2838 = vunpack.c.l.b16 %v2812
  %v2839 = vunpack.c.l.b16 %v2813
  %v2840 = vunpack.c.l.b16 %v2814
  %v2841 = vunpack.c.l.b16 %v2815
  %v2842 = vunpack.c.l.b16 %v2816
  %v2843 = vunpack.c.l.b16 %v2817
  %v2844 = vpack.c.b16 %v2833, %v2832
  %v2845 = vpack.c.b16 %v2835, %v2834
  %v2846 = vpack.c.b16 %v2837, %v2836
  %v2847 = vpack.c.b16 %v2839, %v2838
  %v2848 = vpack.c.b16 %v2841, %v2840
  %v2849 = vpack.c.b16 %v2843, %v2842
  %v2851 = vsel %vm93, %v2844, 0
  %v2854 = vsel %vm93, %v2845, 0
  %v2857 = vsel %vm93, %v2846, 0
  %v2860 = vsel %vm93, %v2847, 0
  %v2863 = vsel %vm93, %v2848, 0
  %v2866 = vsel %vm93, %v2849, 0
  %2868 = vmatprep.subr.bf16.mxu0 0
  %2869 = vmatpush1.bf16.msra.mxu0 %v2818
  %2870 = vmatprep.subr.bf16.mxu0 0
  %2871 = vmatpush1.bf16.msra.mxu0 %v2819
  %2872 = vmatprep.subr.bf16.mxu0 0
  %2873 = vmatpush1.bf16.msra.mxu0 0
  %2874 = vmatprep.subr.bf16.mxu0 0
  %2875 = vmatpush1.bf16.msra.mxu0 0
  %2876 = vmatprep.subr.bf16.mxu0 0
  %2877 = vmatpush1.bf16.msra.mxu0 0
  %2878 = vmatprep.subr.bf16.mxu0 0
  %2879 = vmatpush1.bf16.msra.mxu0 0
  %2880 = vmatprep.subr.bf16.mxu0 0
  %2881 = vmatpush1.bf16.msra.mxu0 0
  %2882 = vmatprep.subr.bf16.mxu0 0
  %2883 = vmatpush1.bf16.msra.mxu0 0
  %2884 = vmatprep.subr.bf16.mxu0 0
  %2885 = vmatpush1.bf16.msra.mxu0 0
  %2886 = vmatprep.subr.bf16.mxu0 0
  %2887 = vmatpush1.bf16.msra.mxu0 0
  %2888 = vmatprep.subr.bf16.mxu0 0
  %2889 = vmatpush1.bf16.msra.mxu0 0
  %2890 = vmatprep.subr.bf16.mxu0 0
  %2891 = vmatpush1.bf16.msra.mxu0 0
  %2892 = vmatprep.subr.bf16.mxu0 0
  %2893 = vmatpush1.bf16.msra.mxu0 0
  %2894 = vmatprep.subr.bf16.mxu0 0
  %2895 = vmatpush1.bf16.msra.mxu0 0
  %2896 = vmatprep.subr.bf16.mxu0 0
  %2897 = vmatpush1.bf16.msra.mxu0 0
  %2898 = vmatprep.subr.bf16.mxu0 0
  %2899 = vmatpush1.bf16.msra.mxu0 0
  %2900 = vmatprep.mubr.bf16.mxu0 0
  %2901 = vmatmul.mubr.bf16.gmra.mrb[0].mxu0 %v2851
  %v2902 = vpop.f32.mrb[0].mxu0
  %v2903 = vadd.f32 0.0, %v2902
  %v2904 = vpop.f32.mrb[0].mxu0
  %v2905 = vpop.f32.mrb[0].mxu0
  %v2906 = vadd.f32 0.0, %v2905
  %v2907 = vpop.f32.mrb[0].mxu0
  %2908 = vmatprep.mubr.bf16.mxu0 0
  %2909 = vmatmul.mubr.bf16.gmra.mrb[0].mxu0 %v2854
  %v2910 = vpop.f32.mrb[0].mxu0
  %v2911 = vadd.f32 0.0, %v2910
  %v2912 = vpop.f32.mrb[0].mxu0
  %v2913 = vpop.f32.mrb[0].mxu0
  %v2914 = vadd.f32 0.0, %v2913
  %v2915 = vpop.f32.mrb[0].mxu0
  %2916 = vmatprep.mubr.bf16.mxu0 0
  %2917 = vmatmul.mubr.bf16.gmra.mrb[0].mxu0 %v2857
  %v2918 = vpop.f32.mrb[0].mxu0
  %v2919 = vadd.f32 0.0, %v2918
  %v2920 = vpop.f32.mrb[0].mxu0
  %v2921 = vpop.f32.mrb[0].mxu0
  %v2922 = vadd.f32 0.0, %v2921
  %v2923 = vpop.f32.mrb[0].mxu0
  %2924 = vmatprep.mubr.bf16.mxu0 0
  %2925 = vmatmul.mubr.bf16.gmra.mrb[0].mxu0 %v2860
  %v2926 = vpop.f32.mrb[0].mxu0
  %v2927 = vadd.f32 0.0, %v2926
  %v2928 = vpop.f32.mrb[0].mxu0
  %v2929 = vpop.f32.mrb[0].mxu0
  %v2930 = vadd.f32 0.0, %v2929
  %v2931 = vpop.f32.mrb[0].mxu0
  %2932 = vmatprep.mubr.bf16.mxu0 0
  %2933 = vmatmul.mubr.bf16.gmra.mrb[0].mxu0 %v2863
  %v2934 = vpop.f32.mrb[0].mxu0
  %v2935 = vadd.f32 0.0, %v2934
  %v2936 = vpop.f32.mrb[0].mxu0
  %v2937 = vpop.f32.mrb[0].mxu0
  %v2938 = vadd.f32 0.0, %v2937
  %v2939 = vpop.f32.mrb[0].mxu0
  %2940 = vmatprep.mubr.bf16.mxu0 0
  %2941 = vmatmul.mubr.bf16.gmra.mrb[0].mxu0 %v2866
  %v2942 = vpop.f32.mrb[0].mxu0
  %v2943 = vadd.f32 0.0, %v2942
  %v2944 = vpop.f32.mrb[0].mxu0
  %v2945 = vpop.f32.mrb[0].mxu0
  %v2946 = vadd.f32 0.0, %v2945
  %v2947 = vpop.f32.mrb[0].mxu0
  %2948 = vdwg.mxu0
  %2949 = vrot.lane.b32.xlu0 %v2903, 2
  %v2950 = vpop.permute.xlu0 %2949
  %2951 = vrot.lane.b32.xlu0 %v2906, 2
  %v2952 = vpop.permute.xlu0 %2951
  %2953 = vrot.lane.b32.xlu0 %v2911, 2
  %v2954 = vpop.permute.xlu0 %2953
  %2955 = vrot.lane.b32.xlu0 %v2914, 2
  %v2956 = vpop.permute.xlu0 %2955
  %v2957 = vsel %vm206, %v2950, 0.0
  %v2958 = vsel %vm206, %v2952, 0.0
  %v2959 = vsel %vm206, %v2954, 0.0
  %v2960 = vsel %vm206, %v2956, 0.0
  %2961 = vset.pattern.permute.xlu0 9
  %2962 = vperm.xlu0 %2961, %v193
  %v2963 = vpop.permute.xlu0 %2962
  %2965 = vset.pattern.permute.xlu0 9
  %2966 = vperm.xlu0 %2965, %v194
  %v2967 = vpop.permute.xlu0 %2966
  %2969 = vset.pattern.permute.xlu0 9
  %2970 = vperm.xlu0 %2969, %v195
  %v2971 = vpop.permute.xlu0 %2970
  %2973 = vset.pattern.permute.xlu0 9
  %2974 = vperm.xlu0 %2973, %v196
  %v2975 = vpop.permute.xlu0 %2974
  %v2977 = vadd.f32 %v2963, %v2957
  %v2978 = vadd.f32 %v2967, %v2958
  %v2979 = vadd.f32 %v2971, %v2959
  %v2980 = vadd.f32 %v2975, %v2960
  %2981 = vrot.lane.b32.xlu0 %v2919, 1
  %v2982 = vpop.permute.xlu0 %2981
  %2983 = vrot.lane.b32.xlu0 %v2922, 1
  %v2984 = vpop.permute.xlu0 %2983
  %2985 = vrot.lane.b32.xlu0 %v2927, 1
  %v2986 = vpop.permute.xlu0 %2985
  %2987 = vrot.lane.b32.xlu0 %v2930, 1
  %v2988 = vpop.permute.xlu0 %2987
  %v2989 = vsel %vm244, %v2982, 0.0
  %v2990 = vsel %vm244, %v2984, 0.0
  %v2991 = vsel %vm244, %v2986, 0.0
  %v2992 = vsel %vm244, %v2988, 0.0
  %v2993 = vadd.f32 %v2977, %v2989
  %v2994 = vadd.f32 %v2978, %v2990
  %v2995 = vadd.f32 %v2979, %v2991
  %v2996 = vadd.f32 %v2980, %v2992
  %v2997 = vadd.f32 %v2993, %v2935
  %v2998 = vadd.f32 %v2994, %v2938
  %v2999 = vadd.f32 %v2995, %v2943
  %v3000 = vadd.f32 %v2996, %v2946
  %v3001 = vmax.f32 %v2997, 0.0
  %v3002 = vmax.f32 %v2998, 0.0
  %v3003 = vmax.f32 %v2999, 0.0
  %v3004 = vmax.f32 %v3000, 0.0
  %s3005 = scalar_lea.vmem %s3, 144
  %v3006 = vld [vmem:[%s3005] sm:$0xf]
  %v3007 = vld [vmem:[%s3005 + $0x4] sm:$0xf]
  %v3008 = vld [vmem:[%s3005 + $0x8] sm:$0xf]
  %v3009 = vld [vmem:[%s3005 + $0xc] sm:$0xf]
  %v3010 = vpack.c.bf16 %v3002, %v3001
  %v3011 = vpack.c.bf16 %v3004, %v3003
  %3012 = vset.pattern.permute.xlu0 9
  %3013 = vperm.xlu0 %3012, %v267
  %v3014 = vpop.permute.xlu0 %3013
  %3016 = vset.pattern.permute.xlu0 9
  %3017 = vperm.xlu0 %3016, %v268
  %v3018 = vpop.permute.xlu0 %3017
  %3020 = vset.pattern.permute.xlu0 9
  %3021 = vperm.xlu0 %3020, %v269
  %v3022 = vpop.permute.xlu0 %3021
  %3024 = vset.pattern.permute.xlu0 9
  %3025 = vperm.xlu0 %3024, %v270
  %v3026 = vpop.permute.xlu0 %3025
  %v3032 = vunpack.c.l.b16 %v3006
  %v3033 = vunpack.c.l.b16 %v3007
  %v3034 = vunpack.c.l.b16 %v3008
  %v3035 = vunpack.c.l.b16 %v3009
  %v3036 = vpack.c.b16 %v3033, %v3032
  %v3037 = vpack.c.b16 %v3035, %v3034
  %v3039 = vsel %vm93, %v3036, 0
  %v3042 = vsel %vm93, %v3037, 0
  %3044 = vmatprep.subr.bf16.mxu0 0
  %3045 = vmatpush1.bf16.msra.mxu0 %v3010
  %3046 = vmatprep.subr.bf16.mxu0 0
  %3047 = vmatpush1.bf16.msra.mxu0 %v3011
  %3048 = vmatprep.subr.bf16.mxu0 0
  %3049 = vmatpush1.bf16.msra.mxu0 0
  %3050 = vmatprep.subr.bf16.mxu0 0
  %3051 = vmatpush1.bf16.msra.mxu0 0
  %3052 = vmatprep.subr.bf16.mxu0 0
  %3053 = vmatpush1.bf16.msra.mxu0 0
  %3054 = vmatprep.subr.bf16.mxu0 0
  %3055 = vmatpush1.bf16.msra.mxu0 0
  %3056 = vmatprep.subr.bf16.mxu0 0
  %3057 = vmatpush1.bf16.msra.mxu0 0
  %3058 = vmatprep.subr.bf16.mxu0 0
  %3059 = vmatpush1.bf16.msra.mxu0 0
  %3060 = vmatprep.subr.bf16.mxu0 0
  %3061 = vmatpush1.bf16.msra.mxu0 0
  %3062 = vmatprep.subr.bf16.mxu0 0
  %3063 = vmatpush1.bf16.msra.mxu0 0
  %3064 = vmatprep.subr.bf16.mxu0 0
  %3065 = vmatpush1.bf16.msra.mxu0 0
  %3066 = vmatprep.subr.bf16.mxu0 0
  %3067 = vmatpush1.bf16.msra.mxu0 0
  %3068 = vmatprep.subr.bf16.mxu0 0
  %3069 = vmatpush1.bf16.msra.mxu0 0
  %3070 = vmatprep.subr.bf16.mxu0 0
  %3071 = vmatpush1.bf16.msra.mxu0 0
  %3072 = vmatprep.subr.bf16.mxu0 0
  %3073 = vmatpush1.bf16.msra.mxu0 0
  %3074 = vmatprep.subr.bf16.mxu0 0
  %3075 = vmatpush1.bf16.msra.mxu0 0
  %3076 = vmatprep.mubr.bf16.mxu0 0
  %3077 = vmatmul.mubr.bf16.gmra.mrb[0].mxu0 %v3039
  %v3078 = vpop.f32.mrb[0].mxu0
  %v3079 = vadd.f32 %v3014, %v3078
  %v3080 = vpop.f32.mrb[0].mxu0
  %v3081 = vpop.f32.mrb[0].mxu0
  %v3082 = vadd.f32 %v3018, %v3081
  %v3083 = vpop.f32.mrb[0].mxu0
  %3084 = vmatprep.mubr.bf16.mxu0 0
  %3085 = vmatmul.mubr.bf16.gmra.mrb[0].mxu0 %v3042
  %v3086 = vpop.f32.mrb[0].mxu0
  %v3087 = vadd.f32 %v3022, %v3086
  %v3088 = vpop.f32.mrb[0].mxu0
  %v3089 = vpop.f32.mrb[0].mxu0
  %v3090 = vadd.f32 %v3026, %v3089
  %v3091 = vpop.f32.mrb[0].mxu0
  %3092 = vdwg.mxu0
  %v3093 = vadd.f32 %v2801, %v3079
  %v3094 = vadd.f32 %v2802, %v3082
  %v3095 = vadd.f32 %v2803, %v3087
  %v3096 = vadd.f32 %v2804, %v3090
  %s3097 = scalar_lea.vmem %s1, 480
  %v3098 = vld [vmem:[%s3097] sm:$0xf]
  %v3099 = vld [vmem:[%s3097 + $0x4] sm:$0xf]
  %v3100 = vld [vmem:[%s3097 + $0x8] sm:$0xf]
  %v3101 = vld [vmem:[%s3097 + $0xc] sm:$0xf]
  %v3102 = vld [vmem:[%s3097 + $0x10] sm:$0xf]
  %v3103 = vld [vmem:[%s3097 + $0x14] sm:$0xf]
  %v3104 = vld [vmem:[%s3097 + $0x18] sm:$0xf]
  %v3105 = vld [vmem:[%s3097 + $0x1c] sm:$0xf]
  %v3106 = vld [vmem:[%s3097 + $0x20] sm:$0xf]
  %v3107 = vld [vmem:[%s3097 + $0x24] sm:$0xf]
  %v3108 = vld [vmem:[%s3097 + $0x28] sm:$0xf]
  %v3109 = vld [vmem:[%s3097 + $0x2c] sm:$0xf]
  %v3110 = vpack.c.bf16 %v3094, %v3093
  %v3111 = vpack.c.bf16 %v3096, %v3095
  %v3124 = vunpack.c.l.b16 %v3098
  %v3125 = vunpack.c.l.b16 %v3099
  %v3126 = vunpack.c.l.b16 %v3100
  %v3127 = vunpack.c.l.b16 %v3101
  %v3128 = vunpack.c.l.b16 %v3102
  %v3129 = vunpack.c.l.b16 %v3103
  %v3130 = vunpack.c.l.b16 %v3104
  %v3131 = vunpack.c.l.b16 %v3105
  %v3132 = vunpack.c.l.b16 %v3106
  %v3133 = vunpack.c.l.b16 %v3107
  %v3134 = vunpack.c.l.b16 %v3108
  %v3135 = vunpack.c.l.b16 %v3109
  %v3136 = vpack.c.b16 %v3125, %v3124
  %v3137 = vpack.c.b16 %v3127, %v3126
  %v3138 = vpack.c.b16 %v3129, %v3128
  %v3139 = vpack.c.b16 %v3131, %v3130
  %v3140 = vpack.c.b16 %v3133, %v3132
  %v3141 = vpack.c.b16 %v3135, %v3134
  %v3143 = vsel %vm93, %v3136, 0
  %v3146 = vsel %vm93, %v3137, 0
  %v3149 = vsel %vm93, %v3138, 0
  %v3152 = vsel %vm93, %v3139, 0
  %v3155 = vsel %vm93, %v3140, 0
  %v3158 = vsel %vm93, %v3141, 0
  %3160 = vmatprep.subr.bf16.mxu0 0
  %3161 = vmatpush1.bf16.msra.mxu0 %v3110
  %3162 = vmatprep.subr.bf16.mxu0 0
  %3163 = vmatpush1.bf16.msra.mxu0 %v3111
  %3164 = vmatprep.subr.bf16.mxu0 0
  %3165 = vmatpush1.bf16.msra.mxu0 0
  %3166 = vmatprep.subr.bf16.mxu0 0
  %3167 = vmatpush1.bf16.msra.mxu0 0
  %3168 = vmatprep.subr.bf16.mxu0 0
  %3169 = vmatpush1.bf16.msra.mxu0 0
  %3170 = vmatprep.subr.bf16.mxu0 0
  %3171 = vmatpush1.bf16.msra.mxu0 0
  %3172 = vmatprep.subr.bf16.mxu0 0
  %3173 = vmatpush1.bf16.msra.mxu0 0
  %3174 = vmatprep.subr.bf16.mxu0 0
  %3175 = vmatpush1.bf16.msra.mxu0 0
  %3176 = vmatprep.subr.bf16.mxu0 0
  %3177 = vmatpush1.bf16.msra.mxu0 0
  %3178 = vmatprep.subr.bf16.mxu0 0
  %3179 = vmatpush1.bf16.msra.mxu0 0
  %3180 = vmatprep.subr.bf16.mxu0 0
  %3181 = vmatpush1.bf16.msra.mxu0 0
  %3182 = vmatprep.subr.bf16.mxu0 0
  %3183 = vmatpush1.bf16.msra.mxu0 0
  %3184 = vmatprep.subr.bf16.mxu0 0
  %3185 = vmatpush1.bf16.msra.mxu0 0
  %3186 = vmatprep.subr.bf16.mxu0 0
  %3187 = vmatpush1.bf16.msra.mxu0 0
  %3188 = vmatprep.subr.bf16.mxu0 0
  %3189 = vmatpush1.bf16.msra.mxu0 0
  %3190 = vmatprep.subr.bf16.mxu0 0
  %3191 = vmatpush1.bf16.msra.mxu0 0
  %3192 = vmatprep.mubr.bf16.mxu0 0
  %3193 = vmatmul.mubr.bf16.gmra.mrb[0].mxu0 %v3143
  %v3194 = vpop.f32.mrb[0].mxu0
  %v3195 = vadd.f32 0.0, %v3194
  %v3196 = vpop.f32.mrb[0].mxu0
  %v3197 = vpop.f32.mrb[0].mxu0
  %v3198 = vadd.f32 0.0, %v3197
  %v3199 = vpop.f32.mrb[0].mxu0
  %3200 = vmatprep.mubr.bf16.mxu0 0
  %3201 = vmatmul.mubr.bf16.gmra.mrb[0].mxu0 %v3146
  %v3202 = vpop.f32.mrb[0].mxu0
  %v3203 = vadd.f32 0.0, %v3202
  %v3204 = vpop.f32.mrb[0].mxu0
  %v3205 = vpop.f32.mrb[0].mxu0
  %v3206 = vadd.f32 0.0, %v3205
  %v3207 = vpop.f32.mrb[0].mxu0
  %3208 = vmatprep.mubr.bf16.mxu0 0
  %3209 = vmatmul.mubr.bf16.gmra.mrb[0].mxu0 %v3149
  %v3210 = vpop.f32.mrb[0].mxu0
  %v3211 = vadd.f32 0.0, %v3210
  %v3212 = vpop.f32.mrb[0].mxu0
  %v3213 = vpop.f32.mrb[0].mxu0
  %v3214 = vadd.f32 0.0, %v3213
  %v3215 = vpop.f32.mrb[0].mxu0
  %3216 = vmatprep.mubr.bf16.mxu0 0
  %3217 = vmatmul.mubr.bf16.gmra.mrb[0].mxu0 %v3152
  %v3218 = vpop.f32.mrb[0].mxu0
  %v3219 = vadd.f32 0.0, %v3218
  %v3220 = vpop.f32.mrb[0].mxu0
  %v3221 = vpop.f32.mrb[0].mxu0
  %v3222 = vadd.f32 0.0, %v3221
  %v3223 = vpop.f32.mrb[0].mxu0
  %3224 = vmatprep.mubr.bf16.mxu0 0
  %3225 = vmatmul.mubr.bf16.gmra.mrb[0].mxu0 %v3155
  %v3226 = vpop.f32.mrb[0].mxu0
  %v3227 = vadd.f32 0.0, %v3226
  %v3228 = vpop.f32.mrb[0].mxu0
  %v3229 = vpop.f32.mrb[0].mxu0
  %v3230 = vadd.f32 0.0, %v3229
  %v3231 = vpop.f32.mrb[0].mxu0
  %3232 = vmatprep.mubr.bf16.mxu0 0
  %3233 = vmatmul.mubr.bf16.gmra.mrb[0].mxu0 %v3158
  %v3234 = vpop.f32.mrb[0].mxu0
  %v3235 = vadd.f32 0.0, %v3234
  %v3236 = vpop.f32.mrb[0].mxu0
  %v3237 = vpop.f32.mrb[0].mxu0
  %v3238 = vadd.f32 0.0, %v3237
  %v3239 = vpop.f32.mrb[0].mxu0
  %3240 = vdwg.mxu0
  %3241 = vrot.lane.b32.xlu0 %v3195, 4
  %v3242 = vpop.permute.xlu0 %3241
  %3243 = vrot.lane.b32.xlu0 %v3198, 4
  %v3244 = vpop.permute.xlu0 %3243
  %3245 = vrot.lane.b32.xlu0 %v3203, 4
  %v3246 = vpop.permute.xlu0 %3245
  %3247 = vrot.lane.b32.xlu0 %v3206, 4
  %v3248 = vpop.permute.xlu0 %3247
  %v3249 = vsel %vm513, %v3242, 0.0
  %v3250 = vsel %vm513, %v3244, 0.0
  %v3251 = vsel %vm513, %v3246, 0.0
  %v3252 = vsel %vm513, %v3248, 0.0
  %3253 = vset.pattern.permute.xlu0 10
  %3254 = vperm.xlu0 %3253, %v193
  %v3255 = vpop.permute.xlu0 %3254
  %3257 = vset.pattern.permute.xlu0 10
  %3258 = vperm.xlu0 %3257, %v194
  %v3259 = vpop.permute.xlu0 %3258
  %3261 = vset.pattern.permute.xlu0 10
  %3262 = vperm.xlu0 %3261, %v195
  %v3263 = vpop.permute.xlu0 %3262
  %3265 = vset.pattern.permute.xlu0 10
  %3266 = vperm.xlu0 %3265, %v196
  %v3267 = vpop.permute.xlu0 %3266
  %v3269 = vadd.f32 %v3255, %v3249
  %v3270 = vadd.f32 %v3259, %v3250
  %v3271 = vadd.f32 %v3263, %v3251
  %v3272 = vadd.f32 %v3267, %v3252
  %3273 = vrot.lane.b32.xlu0 %v3211, 2
  %v3274 = vpop.permute.xlu0 %3273
  %3275 = vrot.lane.b32.xlu0 %v3214, 2
  %v3276 = vpop.permute.xlu0 %3275
  %3277 = vrot.lane.b32.xlu0 %v3219, 2
  %v3278 = vpop.permute.xlu0 %3277
  %3279 = vrot.lane.b32.xlu0 %v3222, 2
  %v3280 = vpop.permute.xlu0 %3279
  %v3281 = vsel %vm206, %v3274, 0.0
  %v3282 = vsel %vm206, %v3276, 0.0
  %v3283 = vsel %vm206, %v3278, 0.0
  %v3284 = vsel %vm206, %v3280, 0.0
  %v3285 = vadd.f32 %v3269, %v3281
  %v3286 = vadd.f32 %v3270, %v3282
  %v3287 = vadd.f32 %v3271, %v3283
  %v3288 = vadd.f32 %v3272, %v3284
  %v3289 = vadd.f32 %v3285, %v3227
  %v3290 = vadd.f32 %v3286, %v3230
  %v3291 = vadd.f32 %v3287, %v3235
  %v3292 = vadd.f32 %v3288, %v3238
  %v3293 = vmax.f32 %v3289, 0.0
  %v3294 = vmax.f32 %v3290, 0.0
  %v3295 = vmax.f32 %v3291, 0.0
  %v3296 = vmax.f32 %v3292, 0.0
  %s3297 = scalar_lea.vmem %s3, 160
  %v3298 = vld [vmem:[%s3297] sm:$0xf]
  %v3299 = vld [vmem:[%s3297 + $0x4] sm:$0xf]
  %v3300 = vld [vmem:[%s3297 + $0x8] sm:$0xf]
  %v3301 = vld [vmem:[%s3297 + $0xc] sm:$0xf]
  %v3302 = vpack.c.bf16 %v3294, %v3293
  %v3303 = vpack.c.bf16 %v3296, %v3295
  %3304 = vset.pattern.permute.xlu0 10
  %3305 = vperm.xlu0 %3304, %v267
  %v3306 = vpop.permute.xlu0 %3305
  %3308 = vset.pattern.permute.xlu0 10
  %3309 = vperm.xlu0 %3308, %v268
  %v3310 = vpop.permute.xlu0 %3309
  %3312 = vset.pattern.permute.xlu0 10
  %3313 = vperm.xlu0 %3312, %v269
  %v3314 = vpop.permute.xlu0 %3313
  %3316 = vset.pattern.permute.xlu0 10
  %3317 = vperm.xlu0 %3316, %v270
  %v3318 = vpop.permute.xlu0 %3317
  %v3324 = vunpack.c.l.b16 %v3298
  %v3325 = vunpack.c.l.b16 %v3299
  %v3326 = vunpack.c.l.b16 %v3300
  %v3327 = vunpack.c.l.b16 %v3301
  %v3328 = vpack.c.b16 %v3325, %v3324
  %v3329 = vpack.c.b16 %v3327, %v3326
  %v3331 = vsel %vm93, %v3328, 0
  %v3334 = vsel %vm93, %v3329, 0
  %3336 = vmatprep.subr.bf16.mxu0 0
  %3337 = vmatpush1.bf16.msra.mxu0 %v3302
  %3338 = vmatprep.subr.bf16.mxu0 0
  %3339 = vmatpush1.bf16.msra.mxu0 %v3303
  %3340 = vmatprep.subr.bf16.mxu0 0
  %3341 = vmatpush1.bf16.msra.mxu0 0
  %3342 = vmatprep.subr.bf16.mxu0 0
  %3343 = vmatpush1.bf16.msra.mxu0 0
  %3344 = vmatprep.subr.bf16.mxu0 0
  %3345 = vmatpush1.bf16.msra.mxu0 0
  %3346 = vmatprep.subr.bf16.mxu0 0
  %3347 = vmatpush1.bf16.msra.mxu0 0
  %3348 = vmatprep.subr.bf16.mxu0 0
  %3349 = vmatpush1.bf16.msra.mxu0 0
  %3350 = vmatprep.subr.bf16.mxu0 0
  %3351 = vmatpush1.bf16.msra.mxu0 0
  %3352 = vmatprep.subr.bf16.mxu0 0
  %3353 = vmatpush1.bf16.msra.mxu0 0
  %3354 = vmatprep.subr.bf16.mxu0 0
  %3355 = vmatpush1.bf16.msra.mxu0 0
  %3356 = vmatprep.subr.bf16.mxu0 0
  %3357 = vmatpush1.bf16.msra.mxu0 0
  %3358 = vmatprep.subr.bf16.mxu0 0
  %3359 = vmatpush1.bf16.msra.mxu0 0
  %3360 = vmatprep.subr.bf16.mxu0 0
  %3361 = vmatpush1.bf16.msra.mxu0 0
  %3362 = vmatprep.subr.bf16.mxu0 0
  %3363 = vmatpush1.bf16.msra.mxu0 0
  %3364 = vmatprep.subr.bf16.mxu0 0
  %3365 = vmatpush1.bf16.msra.mxu0 0
  %3366 = vmatprep.subr.bf16.mxu0 0
  %3367 = vmatpush1.bf16.msra.mxu0 0
  %3368 = vmatprep.mubr.bf16.mxu0 0
  %3369 = vmatmul.mubr.bf16.gmra.mrb[0].mxu0 %v3331
  %v3370 = vpop.f32.mrb[0].mxu0
  %v3371 = vadd.f32 %v3306, %v3370
  %v3372 = vpop.f32.mrb[0].mxu0
  %v3373 = vpop.f32.mrb[0].mxu0
  %v3374 = vadd.f32 %v3310, %v3373
  %v3375 = vpop.f32.mrb[0].mxu0
  %3376 = vmatprep.mubr.bf16.mxu0 0
  %3377 = vmatmul.mubr.bf16.gmra.mrb[0].mxu0 %v3334
  %v3378 = vpop.f32.mrb[0].mxu0
  %v3379 = vadd.f32 %v3314, %v3378
  %v3380 = vpop.f32.mrb[0].mxu0
  %v3381 = vpop.f32.mrb[0].mxu0
  %v3382 = vadd.f32 %v3318, %v3381
  %v3383 = vpop.f32.mrb[0].mxu0
  %3384 = vdwg.mxu0
  %v3385 = vadd.f32 %v3093, %v3371
  %v3386 = vadd.f32 %v3094, %v3374
  %v3387 = vadd.f32 %v3095, %v3379
  %v3388 = vadd.f32 %v3096, %v3382
  %s3389 = scalar_lea.vmem %s1, 528
  %v3390 = vld [vmem:[%s3389] sm:$0xf]
  %v3391 = vld [vmem:[%s3389 + $0x4] sm:$0xf]
  %v3392 = vld [vmem:[%s3389 + $0x8] sm:$0xf]
  %v3393 = vld [vmem:[%s3389 + $0xc] sm:$0xf]
  %v3394 = vld [vmem:[%s3389 + $0x10] sm:$0xf]
  %v3395 = vld [vmem:[%s3389 + $0x14] sm:$0xf]
  %v3396 = vld [vmem:[%s3389 + $0x18] sm:$0xf]
  %v3397 = vld [vmem:[%s3389 + $0x1c] sm:$0xf]
  %v3398 = vld [vmem:[%s3389 + $0x20] sm:$0xf]
  %v3399 = vld [vmem:[%s3389 + $0x24] sm:$0xf]
  %v3400 = vld [vmem:[%s3389 + $0x28] sm:$0xf]
  %v3401 = vld [vmem:[%s3389 + $0x2c] sm:$0xf]
  %v3402 = vpack.c.bf16 %v3386, %v3385
  %v3403 = vpack.c.bf16 %v3388, %v3387
  %v3416 = vunpack.c.l.b16 %v3390
  %v3417 = vunpack.c.l.b16 %v3391
  %v3418 = vunpack.c.l.b16 %v3392
  %v3419 = vunpack.c.l.b16 %v3393
  %v3420 = vunpack.c.l.b16 %v3394
  %v3421 = vunpack.c.l.b16 %v3395
  %v3422 = vunpack.c.l.b16 %v3396
  %v3423 = vunpack.c.l.b16 %v3397
  %v3424 = vunpack.c.l.b16 %v3398
  %v3425 = vunpack.c.l.b16 %v3399
  %v3426 = vunpack.c.l.b16 %v3400
  %v3427 = vunpack.c.l.b16 %v3401
  %v3428 = vpack.c.b16 %v3417, %v3416
  %v3429 = vpack.c.b16 %v3419, %v3418
  %v3430 = vpack.c.b16 %v3421, %v3420
  %v3431 = vpack.c.b16 %v3423, %v3422
  %v3432 = vpack.c.b16 %v3425, %v3424
  %v3433 = vpack.c.b16 %v3427, %v3426
  %v3435 = vsel %vm93, %v3428, 0
  %v3438 = vsel %vm93, %v3429, 0
  %v3441 = vsel %vm93, %v3430, 0
  %v3444 = vsel %vm93, %v3431, 0
  %v3447 = vsel %vm93, %v3432, 0
  %v3450 = vsel %vm93, %v3433, 0
  %3452 = vmatprep.subr.bf16.mxu0 0
  %3453 = vmatpush1.bf16.msra.mxu0 %v3402
  %3454 = vmatprep.subr.bf16.mxu0 0
  %3455 = vmatpush1.bf16.msra.mxu0 %v3403
  %3456 = vmatprep.subr.bf16.mxu0 0
  %3457 = vmatpush1.bf16.msra.mxu0 0
  %3458 = vmatprep.subr.bf16.mxu0 0
  %3459 = vmatpush1.bf16.msra.mxu0 0
  %3460 = vmatprep.subr.bf16.mxu0 0
  %3461 = vmatpush1.bf16.msra.mxu0 0
  %3462 = vmatprep.subr.bf16.mxu0 0
  %3463 = vmatpush1.bf16.msra.mxu0 0
  %3464 = vmatprep.subr.bf16.mxu0 0
  %3465 = vmatpush1.bf16.msra.mxu0 0
  %3466 = vmatprep.subr.bf16.mxu0 0
  %3467 = vmatpush1.bf16.msra.mxu0 0
  %3468 = vmatprep.subr.bf16.mxu0 0
  %3469 = vmatpush1.bf16.msra.mxu0 0
  %3470 = vmatprep.subr.bf16.mxu0 0
  %3471 = vmatpush1.bf16.msra.mxu0 0
  %3472 = vmatprep.subr.bf16.mxu0 0
  %3473 = vmatpush1.bf16.msra.mxu0 0
  %3474 = vmatprep.subr.bf16.mxu0 0
  %3475 = vmatpush1.bf16.msra.mxu0 0
  %3476 = vmatprep.subr.bf16.mxu0 0
  %3477 = vmatpush1.bf16.msra.mxu0 0
  %3478 = vmatprep.subr.bf16.mxu0 0
  %3479 = vmatpush1.bf16.msra.mxu0 0
  %3480 = vmatprep.subr.bf16.mxu0 0
  %3481 = vmatpush1.bf16.msra.mxu0 0
  %3482 = vmatprep.subr.bf16.mxu0 0
  %3483 = vmatpush1.bf16.msra.mxu0 0
  %3484 = vmatprep.mubr.bf16.mxu0 0
  %3485 = vmatmul.mubr.bf16.gmra.mrb[0].mxu0 %v3435
  %v3486 = vpop.f32.mrb[0].mxu0
  %v3487 = vadd.f32 0.0, %v3486
  %v3488 = vpop.f32.mrb[0].mxu0
  %v3489 = vpop.f32.mrb[0].mxu0
  %v3490 = vadd.f32 0.0, %v3489
  %v3491 = vpop.f32.mrb[0].mxu0
  %3492 = vmatprep.mubr.bf16.mxu0 0
  %3493 = vmatmul.mubr.bf16.gmra.mrb[0].mxu0 %v3438
  %v3494 = vpop.f32.mrb[0].mxu0
  %v3495 = vadd.f32 0.0, %v3494
  %v3496 = vpop.f32.mrb[0].mxu0
  %v3497 = vpop.f32.mrb[0].mxu0
  %v3498 = vadd.f32 0.0, %v3497
  %v3499 = vpop.f32.mrb[0].mxu0
  %3500 = vmatprep.mubr.bf16.mxu0 0
  %3501 = vmatmul.mubr.bf16.gmra.mrb[0].mxu0 %v3441
  %v3502 = vpop.f32.mrb[0].mxu0
  %v3503 = vadd.f32 0.0, %v3502
  %v3504 = vpop.f32.mrb[0].mxu0
  %v3505 = vpop.f32.mrb[0].mxu0
  %v3506 = vadd.f32 0.0, %v3505
  %v3507 = vpop.f32.mrb[0].mxu0
  %3508 = vmatprep.mubr.bf16.mxu0 0
  %3509 = vmatmul.mubr.bf16.gmra.mrb[0].mxu0 %v3444
  %v3510 = vpop.f32.mrb[0].mxu0
  %v3511 = vadd.f32 0.0, %v3510
  %v3512 = vpop.f32.mrb[0].mxu0
  %v3513 = vpop.f32.mrb[0].mxu0
  %v3514 = vadd.f32 0.0, %v3513
  %v3515 = vpop.f32.mrb[0].mxu0
  %3516 = vmatprep.mubr.bf16.mxu0 0
  %3517 = vmatmul.mubr.bf16.gmra.mrb[0].mxu0 %v3447
  %v3518 = vpop.f32.mrb[0].mxu0
  %v3519 = vadd.f32 0.0, %v3518
  %v3520 = vpop.f32.mrb[0].mxu0
  %v3521 = vpop.f32.mrb[0].mxu0
  %v3522 = vadd.f32 0.0, %v3521
  %v3523 = vpop.f32.mrb[0].mxu0
  %3524 = vmatprep.mubr.bf16.mxu0 0
  %3525 = vmatmul.mubr.bf16.gmra.mrb[0].mxu0 %v3450
  %v3526 = vpop.f32.mrb[0].mxu0
  %v3527 = vadd.f32 0.0, %v3526
  %v3528 = vpop.f32.mrb[0].mxu0
  %v3529 = vpop.f32.mrb[0].mxu0
  %v3530 = vadd.f32 0.0, %v3529
  %v3531 = vpop.f32.mrb[0].mxu0
  %3532 = vdwg.mxu0
  %3533 = vrot.lane.b32.xlu0 %v3487, 8
  %v3534 = vpop.permute.xlu0 %3533
  %3535 = vrot.lane.b32.xlu0 %v3490, 8
  %v3536 = vpop.permute.xlu0 %3535
  %3537 = vrot.lane.b32.xlu0 %v3495, 8
  %v3538 = vpop.permute.xlu0 %3537
  %3539 = vrot.lane.b32.xlu0 %v3498, 8
  %v3540 = vpop.permute.xlu0 %3539
  %v3541 = vsel %vm807, %v3534, 0.0
  %v3542 = vsel %vm807, %v3536, 0.0
  %v3543 = vsel %vm807, %v3538, 0.0
  %v3544 = vsel %vm807, %v3540, 0.0
  %3545 = vset.pattern.permute.xlu0 11
  %3546 = vperm.xlu0 %3545, %v193
  %v3547 = vpop.permute.xlu0 %3546
  %3549 = vset.pattern.permute.xlu0 11
  %3550 = vperm.xlu0 %3549, %v194
  %v3551 = vpop.permute.xlu0 %3550
  %3553 = vset.pattern.permute.xlu0 11
  %3554 = vperm.xlu0 %3553, %v195
  %v3555 = vpop.permute.xlu0 %3554
  %3557 = vset.pattern.permute.xlu0 11
  %3558 = vperm.xlu0 %3557, %v196
  %v3559 = vpop.permute.xlu0 %3558
  %v3561 = vadd.f32 %v3547, %v3541
  %v3562 = vadd.f32 %v3551, %v3542
  %v3563 = vadd.f32 %v3555, %v3543
  %v3564 = vadd.f32 %v3559, %v3544
  %3565 = vrot.lane.b32.xlu0 %v3503, 4
  %v3566 = vpop.permute.xlu0 %3565
  %3567 = vrot.lane.b32.xlu0 %v3506, 4
  %v3568 = vpop.permute.xlu0 %3567
  %3569 = vrot.lane.b32.xlu0 %v3511, 4
  %v3570 = vpop.permute.xlu0 %3569
  %3571 = vrot.lane.b32.xlu0 %v3514, 4
  %v3572 = vpop.permute.xlu0 %3571
  %v3573 = vsel %vm513, %v3566, 0.0
  %v3574 = vsel %vm513, %v3568, 0.0
  %v3575 = vsel %vm513, %v3570, 0.0
  %v3576 = vsel %vm513, %v3572, 0.0
  %v3577 = vadd.f32 %v3561, %v3573
  %v3578 = vadd.f32 %v3562, %v3574
  %v3579 = vadd.f32 %v3563, %v3575
  %v3580 = vadd.f32 %v3564, %v3576
  %v3581 = vadd.f32 %v3577, %v3519
  %v3582 = vadd.f32 %v3578, %v3522
  %v3583 = vadd.f32 %v3579, %v3527
  %v3584 = vadd.f32 %v3580, %v3530
  %v3585 = vmax.f32 %v3581, 0.0
  %v3586 = vmax.f32 %v3582, 0.0
  %v3587 = vmax.f32 %v3583, 0.0
  %v3588 = vmax.f32 %v3584, 0.0
  %s3589 = scalar_lea.vmem %s3, 176
  %v3590 = vld [vmem:[%s3589] sm:$0xf]
  %v3591 = vld [vmem:[%s3589 + $0x4] sm:$0xf]
  %v3592 = vld [vmem:[%s3589 + $0x8] sm:$0xf]
  %v3593 = vld [vmem:[%s3589 + $0xc] sm:$0xf]
  %v3594 = vpack.c.bf16 %v3586, %v3585
  %v3595 = vpack.c.bf16 %v3588, %v3587
  %3596 = vset.pattern.permute.xlu0 11
  %3597 = vperm.xlu0 %3596, %v267
  %v3598 = vpop.permute.xlu0 %3597
  %3600 = vset.pattern.permute.xlu0 11
  %3601 = vperm.xlu0 %3600, %v268
  %v3602 = vpop.permute.xlu0 %3601
  %3604 = vset.pattern.permute.xlu0 11
  %3605 = vperm.xlu0 %3604, %v269
  %v3606 = vpop.permute.xlu0 %3605
  %3608 = vset.pattern.permute.xlu0 11
  %3609 = vperm.xlu0 %3608, %v270
  %v3610 = vpop.permute.xlu0 %3609
  %v3616 = vunpack.c.l.b16 %v3590
  %v3617 = vunpack.c.l.b16 %v3591
  %v3618 = vunpack.c.l.b16 %v3592
  %v3619 = vunpack.c.l.b16 %v3593
  %v3620 = vpack.c.b16 %v3617, %v3616
  %v3621 = vpack.c.b16 %v3619, %v3618
  %v3623 = vsel %vm93, %v3620, 0
  %v3626 = vsel %vm93, %v3621, 0
  %3628 = vmatprep.subr.bf16.mxu0 0
  %3629 = vmatpush1.bf16.msra.mxu0 %v3594
  %3630 = vmatprep.subr.bf16.mxu0 0
  %3631 = vmatpush1.bf16.msra.mxu0 %v3595
  %3632 = vmatprep.subr.bf16.mxu0 0
  %3633 = vmatpush1.bf16.msra.mxu0 0
  %3634 = vmatprep.subr.bf16.mxu0 0
  %3635 = vmatpush1.bf16.msra.mxu0 0
  %3636 = vmatprep.subr.bf16.mxu0 0
  %3637 = vmatpush1.bf16.msra.mxu0 0
  %3638 = vmatprep.subr.bf16.mxu0 0
  %3639 = vmatpush1.bf16.msra.mxu0 0
  %3640 = vmatprep.subr.bf16.mxu0 0
  %3641 = vmatpush1.bf16.msra.mxu0 0
  %3642 = vmatprep.subr.bf16.mxu0 0
  %3643 = vmatpush1.bf16.msra.mxu0 0
  %3644 = vmatprep.subr.bf16.mxu0 0
  %3645 = vmatpush1.bf16.msra.mxu0 0
  %3646 = vmatprep.subr.bf16.mxu0 0
  %3647 = vmatpush1.bf16.msra.mxu0 0
  %3648 = vmatprep.subr.bf16.mxu0 0
  %3649 = vmatpush1.bf16.msra.mxu0 0
  %3650 = vmatprep.subr.bf16.mxu0 0
  %3651 = vmatpush1.bf16.msra.mxu0 0
  %3652 = vmatprep.subr.bf16.mxu0 0
  %3653 = vmatpush1.bf16.msra.mxu0 0
  %3654 = vmatprep.subr.bf16.mxu0 0
  %3655 = vmatpush1.bf16.msra.mxu0 0
  %3656 = vmatprep.subr.bf16.mxu0 0
  %3657 = vmatpush1.bf16.msra.mxu0 0
  %3658 = vmatprep.subr.bf16.mxu0 0
  %3659 = vmatpush1.bf16.msra.mxu0 0
  %3660 = vmatprep.mubr.bf16.mxu0 0
  %3661 = vmatmul.mubr.bf16.gmra.mrb[0].mxu0 %v3623
  %v3662 = vpop.f32.mrb[0].mxu0
  %v3663 = vadd.f32 %v3598, %v3662
  %v3664 = vpop.f32.mrb[0].mxu0
  %v3665 = vpop.f32.mrb[0].mxu0
  %v3666 = vadd.f32 %v3602, %v3665
  %v3667 = vpop.f32.mrb[0].mxu0
  %3668 = vmatprep.mubr.bf16.mxu0 0
  %3669 = vmatmul.mubr.bf16.gmra.mrb[0].mxu0 %v3626
  %v3670 = vpop.f32.mrb[0].mxu0
  %v3671 = vadd.f32 %v3606, %v3670
  %v3672 = vpop.f32.mrb[0].mxu0
  %v3673 = vpop.f32.mrb[0].mxu0
  %v3674 = vadd.f32 %v3610, %v3673
  %v3675 = vpop.f32.mrb[0].mxu0
  %3676 = vdwg.mxu0
  %v3677 = vadd.f32 %v3385, %v3663
  %v3678 = vadd.f32 %v3386, %v3666
  %v3679 = vadd.f32 %v3387, %v3671
  %v3680 = vadd.f32 %v3388, %v3674
  %v3681 = vld [vmem:[%s5] sm:$0xf]
  %v3682 = vpack.c.bf16 %v3678, %v3677
  %v3683 = vpack.c.bf16 %v3680, %v3679
  %v3684 = vld [vmem:[%s6] sm:$0xff]
  %3686 = vset.pattern.permute.xlu0 0
  %3687 = vperm.xlu0 %3686, %v3684
  %v3688 = vpop.permute.xlu0 %3687
  %v3691 = vsel %vm93, %v3681, 0
  %3693 = vmatprep.subr.bf16.mxu0 0
  %3694 = vmatpush1.bf16.msra.mxu0 %v3682
  %3695 = vmatprep.subr.bf16.mxu0 0
  %3696 = vmatpush1.bf16.msra.mxu0 %v3683
  %3697 = vmatprep.subr.bf16.mxu0 0
  %3698 = vmatpush1.bf16.msra.mxu0 0
  %3699 = vmatprep.subr.bf16.mxu0 0
  %3700 = vmatpush1.bf16.msra.mxu0 0
  %3701 = vmatprep.subr.bf16.mxu0 0
  %3702 = vmatpush1.bf16.msra.mxu0 0
  %3703 = vmatprep.subr.bf16.mxu0 0
  %3704 = vmatpush1.bf16.msra.mxu0 0
  %3705 = vmatprep.subr.bf16.mxu0 0
  %3706 = vmatpush1.bf16.msra.mxu0 0
  %3707 = vmatprep.subr.bf16.mxu0 0
  %3708 = vmatpush1.bf16.msra.mxu0 0
  %3709 = vmatprep.subr.bf16.mxu0 0
  %3710 = vmatpush1.bf16.msra.mxu0 0
  %3711 = vmatprep.subr.bf16.mxu0 0
  %3712 = vmatpush1.bf16.msra.mxu0 0
  %3713 = vmatprep.subr.bf16.mxu0 0
  %3714 = vmatpush1.bf16.msra.mxu0 0
  %3715 = vmatprep.subr.bf16.mxu0 0
  %3716 = vmatpush1.bf16.msra.mxu0 0
  %3717 = vmatprep.subr.bf16.mxu0 0
  %3718 = vmatpush1.bf16.msra.mxu0 0
  %3719 = vmatprep.subr.bf16.mxu0 0
  %3720 = vmatpush1.bf16.msra.mxu0 0
  %3721 = vmatprep.subr.bf16.mxu0 0
  %3722 = vmatpush1.bf16.msra.mxu0 0
  %3723 = vmatprep.subr.bf16.mxu0 0
  %3724 = vmatpush1.bf16.msra.mxu0 0
  %3725 = vmatprep.mubr.bf16.mxu0 0
  %3726 = vmatmul.mubr.bf16.gmra.mrb[0].mxu0 %v3691
  %v3727 = vpop.f32.mrb[0].mxu0
  %v3728 = vadd.f32 %v3688, %v3727
  %v3729 = vpop.f32.mrb[0].mxu0
  %v3730 = vpop.f32.mrb[0].mxu0
  %v3731 = vpop.f32.mrb[0].mxu0
  %3732 = vdwg.mxu0
  %3733 = vst [vmem:[%s7] sm:$0xff] %v3728
  // Predicated region
  $region30: #{_lambda_.1} parent=0 // pred_check
    _
  $region31: #{_lambda_.1} parent=0 // pred_check_branch
    %3735 = sbr.rel (0) target = $region33
  $region32: #{_lambda_.1} parent=0 // pred_region
    _
  $region33: #{_lambda_.1} parent=0 // pred_fallthru
    _
  // Predicated region
  $region34: #{_lambda_.1} parent=0 // pred_check
    _
  $region35: #{_lambda_.1} parent=0 // pred_check_branch
    %3737 = sbr.rel (0) target = $region37
  $region36: #{_lambda_.1} parent=0 // pred_region
    _
  $region37: #{_lambda_.1} parent=0 // pred_fallthru
    _

</llo_original>
